<compile_context>
chip_gen: v5e
topology: v5e:2x2
jax: 0.10.0
libtpu: 0.0.40
codegen_flags: <defaults>
</compile_context>

<pallas_src>
import math
from typing import NamedTuple

import jax
import jax.numpy as jnp
from jax.experimental import pallas as pl
from jax.experimental.pallas import tpu as pltpu

LANES = 128
_TARGET_BLOCK_BYTES = 4 << 20          # ~4 MiB per array per block
_VMEM_LIMIT_BYTES = 48 * 1024 * 1024   # safe on v7x (64 MiB physical) and below
_SMALL_BYPASS_BYTES = 256 << 10        # below this, a plain XLA add is cheaper


def _sublane_multiple(itemsize: int) -> int:
    """Sublane packing granularity: f32 -> 8, bf16/f16 -> 16, int8/fp8 -> 32."""
    return max(8, 32 // itemsize)


class PEBuffers(NamedTuple):
    """Precomputed positional-encoding buffers (the register_buffer analogue)."""
    pe: jnp.ndarray        # (1, max_len, d_model) in the model dtype
    pe_rows: jnp.ndarray   # (ceil(max_len*d_model/128), 128): flattened + padded


def init_positional_encoding(d_model: int, max_len: int = 500,
                             dtype=jnp.float32) -> PEBuffers:
    """Build the sinusoidal PE table once, in the model dtype, plus a
    lane-dense flattened view (so the forward pass never casts/slices pe)."""
    position = jnp.arange(max_len, dtype=jnp.float32)[:, None]              # (max_len, 1)
    div_term = jnp.exp(
        jnp.arange(0, d_model, 2, dtype=jnp.float32) * (-math.log(10000.0) / d_model)
    )                                                                        # (ceil(d/2),)
    angles = position * div_term                                             # (max_len, ceil(d/2))
    pe = jnp.zeros((max_len, d_model), dtype=jnp.float32)
    pe = pe.at[:, 0::2].set(jnp.sin(angles))
    pe = pe.at[:, 1::2].set(jnp.cos(angles[:, : d_model // 2]))              # safe for odd d_model
    pe = pe.astype(dtype)

    total = max_len * d_model
    nr_full = pl.cdiv(total, LANES)
    pe_rows = jnp.pad(pe.reshape(-1), (0, nr_full * LANES - total)).reshape(nr_full, LANES)
    return PEBuffers(pe[None, :, :], pe_rows)


def _add_pe_kernel(x_ref, pe_ref, o_ref):
    # Elementwise broadcast-add of one tile (leading size-1 dims squeezed away).
    o_ref[...] = (x_ref[...] + pe_ref[...]).astype(o_ref.dtype)


def positional_encoding_forward(x: jnp.ndarray, buffers: PEBuffers, *,
                                donate_x: bool = False) -> jnp.ndarray:
    """x: (B, S, D). Returns x + pe[:, :S] in x.dtype.

    If donate_x=True the kernel writes in place via input_output_aliases; this
    is only a win when the caller donates x at the jit boundary
    (jax.jit(..., donate_argnums=...)), otherwise XLA inserts a defensive copy.
    """
    B, S, D = x.shape
    max_len = buffers.pe.shape[1]
    assert D == buffers.pe.shape[2], "pe feature dim must match x"
    assert S <= max_len, f"sequence length {S} exceeds positional-encoding max_len {max_len}"

    itemsize = jnp.dtype(x.dtype).itemsize
    n = S * D
    aliases = {0: 0} if donate_x else {}

    # Tiny problems: custom-call + per-step overhead exceeds the add; let XLA fuse it.
    if B * n * itemsize < _SMALL_BYPASS_BYTES:
        return (x + buffers.pe[:, :S, :]).astype(x.dtype)

    cost = pl.CostEstimate(
        flops=B * n,
        transcendentals=0,
        bytes_accessed=(2 * B * n + n) * itemsize,
    )
    sub = _sublane_multiple(itemsize)

    if n % LANES == 0 and n // LANES >= 8:
        # Lane-dense path: view (S, D) as (nr, 128) rows; pe_rows is the
        # prefix-aligned flattening of the full pe table, so no per-call slice.
        nr = n // LANES
        target_rows = max(sub, (_TARGET_BLOCK_BYTES // (LANES * itemsize)) // sub * sub)
        tr = min(nr, target_rows)
        tr = (tr // sub) * sub
        if tr == 0:
            tr = (min(nr, target_rows) // 8) * 8   # >= 8 since nr >= 8
        tiles = pl.cdiv(nr, tr)

        # v7x megacore: if B == 1, make sure the row axis has >= 2 tiles so the
        # second TensorCore is not idle (v5e/v6e single-core: no effect).
        if B == 1 and tiles == 1 and nr >= 2 * sub:
            tr = ((pl.cdiv(nr, 2) + sub - 1) // sub) * sub
            tiles = pl.cdiv(nr, tr)

        x_v = x.reshape(B, nr, LANES)              # contiguous reshape: free
        grid = (tiles, B)                          # B innermost -> pe tile DMA'd once per row tile
        out = pl.pallas_call(
            _add_pe_kernel,
            out_shape=jax.ShapeDtypeStruct((B, nr, LANES), x.dtype),
            grid_spec=pltpu.PrefetchScalarGridSpec(
                num_scalar_prefetch=0,
                grid=grid,
                in_specs=[
                    pl.BlockSpec((None, tr, LANES), lambda t, b: (b, t, 0)),  # x tile
                    pl.BlockSpec((tr, LANES), lambda t, b: (t, 0)),           # pe tile (b-invariant)
                ],
                out_specs=pl.BlockSpec((None, tr, LANES), lambda t, b: (b, t, 0)),
            ),
            compiler_params=pltpu.CompilerParams(
                dimension_semantics=("parallel", "parallel"),
                vmem_limit_bytes=_VMEM_LIMIT_BYTES,
            ),
            input_output_aliases=aliases,
            cost_estimate=cost,
        )(x_v, buffers.pe_rows)
        return out.reshape(B, S, D)

    # Lane-sparse fallback: S*D not a multiple of 128. Tiled along S (multiple
    # of the sublane granularity) so VMEM stays bounded and DMA pipelines.
    # TODO(synk): pad d_model to a multiple of 128 at the model level so every
    # shape routes through the lane-dense path (avoids masked vst.msk stores).
    pe_s = buffers.pe[:, :S, :]
    row_bytes = D * itemsize
    target_ts = max(sub, (_TARGET_BLOCK_BYTES // row_bytes) // sub * sub)
    ts = S if S <= target_ts else target_ts
    grid = (pl.cdiv(S, ts), B)                     # B innermost; pe b-invariant
    return pl.pallas_call(
        _add_pe_kernel,
        out_shape=jax.ShapeDtypeStruct((B, S, D), x.dtype),
        grid_spec=pltpu.PrefetchScalarGridSpec(
            num_scalar_prefetch=0,
            grid=grid,
            in_specs=[
                pl.BlockSpec((None, ts, D), lambda t, b: (b, t, 0)),
                pl.BlockSpec((None, ts, D), lambda t, b: (0, t, 0)),
            ],
            out_specs=pl.BlockSpec((None, ts, D), lambda t, b: (b, t, 0)),
        ),
        compiler_params=pltpu.CompilerParams(
            dimension_semantics=("parallel", "parallel"),
            vmem_limit_bytes=_VMEM_LIMIT_BYTES,
        ),
        input_output_aliases=aliases,
        cost_estimate=cost,
    )(x, pe_s)


if __name__ == "__main__":
    key = jax.random.PRNGKey(0)
    k1, k2, k3 = jax.random.split(key, 3)

    # 1) Module-default small shapes (B=2, S=8, d_model=32): small-problem bypass.
    d_model, max_len = 32, 500
    B, S = 2, 8
    buf = init_positional_encoding(d_model, max_len, dtype=jnp.float32)
    x = jax.random.normal(k1, (B, S, d_model), dtype=jnp.float32)
    ref = x + buf.pe[:, :S, :]
    out = jax.block_until_ready(positional_encoding_forward(x, buf))
    assert out.shape == (B, S, d_model)
    assert jnp.allclose(out, ref, atol=1e-6), "mismatch vs reference (small/bypass case)"

    # 2) Lane-dense Pallas path: multiple ~4 MiB row tiles, ragged last tile.
    d_model2, max_len2 = 2048, 1200
    B2, S2 = 2, 1100
    buf2 = init_positional_encoding(d_model2, max_len2, dtype=jnp.float32)
    x2 = jax.random.normal(k2, (B2, S2, d_model2), dtype=jnp.float32)
    ref2 = x2 + buf2.pe[:, :S2, :]
    out2 = jax.block_until_ready(positional_encoding_forward(x2, buf2))
    assert jnp.allclose(out2, ref2, atol=1e-6), "mismatch vs reference (lane-dense tiled case)"

    # 3) Lane-sparse fallback path (S*D % 128 != 0), tiled along S.
    d_model3, max_len3 = 100, 500
    B3, S3 = 4, 300
    buf3 = init_positional_encoding(d_model3, max_len3, dtype=jnp.float32)
    x3 = jax.random.normal(k3, (B3, S3, d_model3), dtype=jnp.float32)
    ref3 = x3 + buf3.pe[:, :S3, :]
    out3 = jax.block_until_ready(positional_encoding_forward(x3, buf3))
    assert jnp.allclose(out3, ref3, atol=1e-6), "mismatch vs reference (fallback case)"

    print("KERNEL_OK")
</pallas_src>

<mosaic_0001>
module attributes {stable_mosaic.version = 11 : i64} {
  func.func @_add_pe_kernel(%arg0: i32, %arg1: i32, %arg2: memref<1x8192x128xf32, #tpu.memory_space<vmem>>, %arg3: memref<8192x128xf32, #tpu.memory_space<vmem>>, %arg4: memref<1x8192x128xf32, #tpu.memory_space<vmem>>) attributes {dimension_semantics = [#tpu.dimension_semantics<parallel>, #tpu.dimension_semantics<parallel>], iteration_bounds = array<i64: 3, 2>, scalar_prefetch = 0 : i64, scratch_operands = 0 : i64, tpu.core_type = #tpu.core_type<tc>, window_params = [{transform_indices = @transform_0, window_bounds = array<i64: 1, 8192, 128>}, {transform_indices = @transform_1, window_bounds = array<i64: 8192, 128>}, {transform_indices = @transform_2, window_bounds = array<i64: 1, 8192, 128>}]} {
    %c0 = arith.constant 0 : index
    %c0_0 = arith.constant 0 : index
    %c0_1 = arith.constant 0 : index
    %0 = vector.load %arg2[%c0, %c0_0, %c0_1] : memref<1x8192x128xf32, #tpu.memory_space<vmem>>, vector<1x8192x128xf32>
    %1 = vector.shape_cast %0 : vector<1x8192x128xf32> to vector<8192x128xf32>
    %c0_2 = arith.constant 0 : index
    %c0_3 = arith.constant 0 : index
    %2 = vector.load %arg3[%c0_2, %c0_3] : memref<8192x128xf32, #tpu.memory_space<vmem>>, vector<8192x128xf32>
    %3 = arith.addf %1, %2 : vector<8192x128xf32>
    %c0_4 = arith.constant 0 : index
    %c0_5 = arith.constant 0 : index
    %c0_6 = arith.constant 0 : index
    %4 = vector.load %arg4[%c0_4, %c0_5, %c0_6] : memref<1x8192x128xf32, #tpu.memory_space<vmem>>, vector<1x8192x128xf32>
    %5 = vector.shape_cast %4 : vector<1x8192x128xf32> to vector<8192x128xf32>
    %6 = vector.shape_cast %3 : vector<8192x128xf32> to vector<1x8192x128xf32>
    tpu.vector_store %arg4[%c0_4, %c0_5, %c0_6], %6 {strides = array<i32>} : memref<1x8192x128xf32, #tpu.memory_space<vmem>>, vector<1x8192x128xf32>,
    return
  }
  func.func @transform_0(%arg0: i32, %arg1: i32) -> (i32, i32, i32) {
    %c0_i32 = arith.constant 0 : i32
    %c0_i32_0 = arith.constant 0 : i32
    return %arg1, %arg0, %c0_i32 : i32, i32, i32
  }
  func.func @transform_1(%arg0: i32, %arg1: i32) -> (i32, i32) {
    %c0_i32 = arith.constant 0 : i32
    %c0_i32_0 = arith.constant 0 : i32
    return %arg0, %c0_i32 : i32, i32
  }
  func.func @transform_2(%arg0: i32, %arg1: i32) -> (i32, i32, i32) {
    %c0_i32 = arith.constant 0 : i32
    %c0_i32_0 = arith.constant 0 : i32
    return %arg1, %arg0, %c0_i32 : i32, i32, i32
  }
}

</mosaic_0001>

<llo_original>
// kernel: tpu_custom_call.1
$region0: #{tpu_custom_call.1}
  #allocation0 [shape = 'u32[]', space=smem, size = 0x4, offset = 0x4, fixed_abs, tag = 'smem constant byte address 0x4 - core index']
  #allocation1 [shape = 'u32[72,128]{1,0:T(1,128)}', space=vmem, size = 0x9000, scoped, tag = 'internal scratch']
  %s0 = inlined_call_operand.hbm [shape: f32[2,17600,128], index: 0, kind: input, shape index: {}]
  %s1 = inlined_call_operand.hbm [shape: f32[19200,128], index: 1, kind: input, shape index: {}]
  %s2 = inlined_call_operand.hbm [shape: f32[2,17600,128], index: 2, kind: output, shape index: {}]
  %s3 = sld [smem:[#allocation0]]
  $region49: #{tpu_custom_call.1} parent=0
    _
  %s5 = ssub.s32 1, %s3
  %s6 = scalar_select 0, %s5, %s3
  $region1: #{tpu_custom_call.1} parent=0
    #allocation2 [shape = 'u8[8388608]{0}', space=vmem, size = 0x800000, scoped, tag = 'input window, operand 0']
    #allocation3 [shape = 's32[2]{0}', space=sflag, size = 0x8, scoped, tag = 'scoped memory for tpu_custom_call.1']
    #allocation4 [shape = 's32[2]{0}', space=sflag, size = 0x8, scoped, tag = 'scoped memory for tpu_custom_call.1']
    #allocation5 [shape = 'u8[8388608]{0}', space=vmem, size = 0x800000, scoped, tag = 'input window, operand 1']
    #allocation6 [shape = 's32[2]{0}', space=sflag, size = 0x8, scoped, tag = 'scoped memory for tpu_custom_call.1']
    #allocation7 [shape = 'u8[8388608]{0}', space=vmem, size = 0x800000, scoped, tag = 'output window, operand 0']
    %7 = vsyncpa [#allocation3], 0
    %s8 = scalar_lea.sflag [#allocation3], 1
    %9 = vsyncpa %s8, 0
    %10 = vsyncpa [#allocation6], 0
    %s11 = scalar_lea.sflag [#allocation6], 1
    %12 = vsyncpa %s11, 0
    %13 = vsyncpa [#allocation4], 0
    %s14 = scalar_lea.sflag [#allocation4], 1
    %15 = vsyncpa %s14, 0
    loop: start=0, step=1, limit=8
    $region2: #{tpu_custom_call.1} parent=1 // loop_pre_header
      _
    $region3: #{tpu_custom_call.1} parent=1 // loop_header
      %s17 = sphi 0, %s21
      %p18 = scmp.ge.s32.totalorder %s17, 8
      %s24 = sphi 0, %s36
      %s25 = sphi 0, %s32
      %s26 = sphi 0, %s24
      %s27 = sphi 0, %s25
      %s28 = sphi 0, %s26
      %s29 = sphi 0, %s27
      %s41 = sphi 0, %s43
      %s44 = sphi 0, %s41
      %s45 = sphi 0, %s44
      %s61 = sphi 0, %s45
      %s67 = sphi 0, %s69
      %s70 = sphi 0, %s67
      %s71 = sphi 0, %s70
      %s87 = sphi 0, %s71
      %s95 = sphi 0, %s97
      %s98 = sphi 0, %s95
      %s99 = sphi 0, %s98
      %s115 = sphi 0, %s99
    $region4: #{tpu_custom_call.1} parent=1 // loop_header_branch
      %20 = sbr.rel (%p18) target = $region8
    $region5: #{tpu_custom_call.1} parent=1 // loop_body
      %s22 = ssub.s32 %s17, 1
      %s23 = ssub.s32 %s17, 2
      %s30 = sadd.s32 1, %s25
      %p31 = scmp.ge.s32.totalorder %s30, 2
      %s32 = scalar_select %p31, 0, %s30
      %s33 = sadd.s32 1, %s24
      %s34 = scalar_select %p31, %s33, %s24
      %p35 = scmp.ge.s32.totalorder %s34, 3
      %s36 = scalar_select %p35, 0, %s34
      %s37 = ssub.s32 %s25, %s32
      %s38 = ssub.s32 %s24, %s36
      %s39 = sor.u32 %s37, %s38
      %p40 = scmp.eq.s32.totalorder %s39, 0
      %s42 = sadd.s32 %s41, 1
      %s43 = scalar_select %p40, %s41, %s42
      %p46 = pneg %p40
      %p47 = scmp.eq.s32.totalorder %s17, 5
      %p48 = por %p46, %p47
      %p49 = scmp.ne.s32.totalorder %s41, %s44
      %p50 = scmp.eq.s32.totalorder %s17, 0
      %p51 = por %p49, %p50
      %p52 = scmp.ne.s32.totalorder %s41, %s44
      %p53 = scmp.eq.s32.totalorder %s22, 5
      %p54 = por %p52, %p53
      %p55 = scmp.ne.s32.totalorder %s44, %s45
      %p56 = scmp.eq.s32.totalorder %s22, 0
      %p57 = por %p55, %p56
      %p58 = scmp.ne.s32.totalorder %s44, %s45
      %p59 = scmp.eq.s32.totalorder %s23, 5
      %p60 = por %p58, %p59
      %p62 = scmp.ne.s32.totalorder %s45, %s61
      %p63 = scmp.eq.s32.totalorder %s23, 0
      %p64 = por %p62, %p63
      %s65 = ssub.s32 %s24, %s36
      %p66 = scmp.eq.s32.totalorder %s65, 0
      %s68 = sadd.s32 %s67, 1
      %s69 = scalar_select %p66, %s67, %s68
      %p72 = pneg %p66
      %p73 = scmp.eq.s32.totalorder %s17, 5
      %p74 = por %p72, %p73
      %p75 = scmp.ne.s32.totalorder %s67, %s70
      %p76 = scmp.eq.s32.totalorder %s17, 0
      %p77 = por %p75, %p76
      %p78 = scmp.ne.s32.totalorder %s67, %s70
      %p79 = scmp.eq.s32.totalorder %s22, 5
      %p80 = por %p78, %p79
      %p81 = scmp.ne.s32.totalorder %s70, %s71
      %p82 = scmp.eq.s32.totalorder %s22, 0
      %p83 = por %p81, %p82
      %p84 = scmp.ne.s32.totalorder %s70, %s71
      %p85 = scmp.eq.s32.totalorder %s23, 5
      %p86 = por %p84, %p85
      %p88 = scmp.ne.s32.totalorder %s71, %s87
      %p89 = scmp.eq.s32.totalorder %s23, 0
      %p90 = por %p88, %p89
      %s91 = ssub.s32 %s25, %s32
      %s92 = ssub.s32 %s24, %s36
      %s93 = sor.u32 %s91, %s92
      %p94 = scmp.eq.s32.totalorder %s93, 0
      %s96 = sadd.s32 %s95, 1
      %s97 = scalar_select %p94, %s95, %s96
      %p100 = pneg %p94
      %p101 = scmp.eq.s32.totalorder %s17, 5
      %p102 = por %p100, %p101
      %p103 = scmp.ne.s32.totalorder %s95, %s98
      %p104 = scmp.eq.s32.totalorder %s17, 0
      %p105 = por %p103, %p104
      %p106 = scmp.ne.s32.totalorder %s95, %s98
      %p107 = scmp.eq.s32.totalorder %s22, 5
      %p108 = por %p106, %p107
      %p109 = scmp.ne.s32.totalorder %s98, %s99
      %p110 = scmp.eq.s32.totalorder %s22, 0
      %p111 = por %p109, %p110
      %p112 = scmp.ne.s32.totalorder %s98, %s99
      %p113 = scmp.eq.s32.totalorder %s23, 5
      %p114 = por %p112, %p113
      %p116 = scmp.ne.s32.totalorder %s99, %s115
      %p117 = scmp.eq.s32.totalorder %s23, 0
      %p118 = por %p116, %p117
      %p119 = scmp.le.s32.totalorder 1, %s17
      %p120 = scmp.lt.s32.totalorder %s17, 7
      %p121 = pnand %p119, %p120
      %p122 = pneg %p121
      // Predicated region
      $region9: #{tpu_custom_call.1} parent=5 // pred_check
        _
      $region10: #{tpu_custom_call.1} parent=5 // pred_check_branch
        %124 = sbr.rel (%p121) target = $region12
      $region11: #{tpu_custom_call.1} parent=5 // pred_region
        %s125 = ssub.s32 %s17, 1
      $region12: #{tpu_custom_call.1} parent=5 // pred_fallthru
        _
      %p126 = scmp.lt.s32.totalorder %s17, 6
      // Predicated region
      $region13: #{tpu_custom_call.1} parent=5 // pred_check
        %p127 = pneg %p126
      $region14: #{tpu_custom_call.1} parent=5 // pred_check_branch
        %129 = sbr.rel (%p127) target = $region16
      $region15: #{tpu_custom_call.1} parent=5 // pred_region
        // Predicated region
        $region17: #{tpu_custom_call.1} parent=15 // pred_check
          %p130 = pneg %p51
        $region18: #{tpu_custom_call.1} parent=15 // pred_check_branch
          %132 = sbr.rel (%p130) target = $region20
        $region19: #{tpu_custom_call.1} parent=15 // pred_region
          %s133 = sand.u32 %s41, 1
          %s134 = scalar_lea.sflag [#allocation3], %s133
          %s135 = sand.u32 %s41, 1
          %s136 = smul.addr %s135, 8192
          %s137 = scalar_lea.vmem [#allocation2], %s136
          %s138 = smul.u32 1024, %s24
          %s139 = ssub.s32 2200, %s138
          %p140 = scmp.lt.s32.totalorder %s139, 1024
          %s141 = scalar_select %p140, %s139, 1024
          %s142 = smul.u32 8, %s141
          %s143 = ssub.s32 8192, %s142
          %s144 = sshll.u32 %s143, 4
          %145 = vsyncadd %s134, %s144
          %p146 = scmp.ne.s32.totalorder 0, %s142
          %s147 = smul.addr %s25, 2200
          %s148 = sadd.s32 %s138, %s147
          %s149 = smul.addr %s148, 8
          %s150 = scalar_lea.hbm %s0, %s149
          %s151 = smul.u32 8, %s141
          %s152 = sshll.u32 %s150, 4
          %s153 = int_to_ptr.hbm [resolvable:$true] %s152
          %s154 = sshll.u32 %s137, 4
          %s155 = int_to_ptr.vmem [resolvable:$true] %s154
          %s156 = sshll.u32 %s151, 4
          %160 = dma.hbm_to_vmem [thread:$0]  (%p146), %s153, %s156, %s155, %s134, 128, 128, 8
        $region20: #{tpu_custom_call.1} parent=15 // pred_fallthru
          _
        // Predicated region
        $region21: #{tpu_custom_call.1} parent=15 // pred_check
          %p161 = pneg %p77
        $region22: #{tpu_custom_call.1} parent=15 // pred_check_branch
          %163 = sbr.rel (%p161) target = $region24
        $region23: #{tpu_custom_call.1} parent=15 // pred_region
          %s164 = sand.u32 %s67, 1
          %s165 = scalar_lea.sflag [#allocation6], %s164
          %s166 = sand.u32 %s67, 1
          %s167 = smul.addr %s166, 8192
          %s168 = scalar_lea.vmem [#allocation5], %s167
          %s169 = smul.u32 1024, %s24
          %s170 = ssub.s32 2400, %s169
          %p171 = scmp.lt.s32.totalorder %s170, 1024
          %s172 = scalar_select %p171, %s170, 1024
          %s173 = smul.u32 8, %s172
          %s174 = ssub.s32 8192, %s173
          %s175 = sshll.u32 %s174, 4
          %176 = vsyncadd %s165, %s175
          %p177 = scmp.ne.s32.totalorder 0, %s173
          %s178 = smul.addr %s169, 8
          %s179 = scalar_lea.hbm %s1, %s178
          %s180 = smul.u32 8, %s172
          %s181 = sshll.u32 %s179, 4
          %s182 = int_to_ptr.hbm [resolvable:$true] %s181
          %s183 = sshll.u32 %s168, 4
          %s184 = int_to_ptr.vmem [resolvable:$true] %s183
          %s185 = sshll.u32 %s180, 4
          %189 = dma.hbm_to_vmem [thread:$0]  (%p177), %s182, %s185, %s184, %s165, 128, 128, 8
        $region24: #{tpu_custom_call.1} parent=15 // pred_fallthru
          _
      $region16: #{tpu_custom_call.1} parent=5 // pred_fallthru
        _
      %p190 = scmp.le.s32.totalorder 1, %s17
      %p191 = scmp.lt.s32.totalorder %s17, 7
      %p192 = pnand %p190, %p191
      %p193 = pneg %p192
      // Predicated region
      $region25: #{tpu_custom_call.1} parent=5 // pred_check
        _
      $region26: #{tpu_custom_call.1} parent=5 // pred_check_branch
        %195 = sbr.rel (%p192) target = $region28
      $region27: #{tpu_custom_call.1} parent=5 // pred_region
        %s196 = ssub.s32 %s17, 1
        %s197 = sand.u32 %s44, 1
        %s198 = scalar_lea.sflag [#allocation3], %s197
        %s199 = sand.u32 %s44, 1
        %s200 = smul.addr %s199, 8192
        %s201 = scalar_lea.vmem [#allocation2], %s200
        // Predicated region
        $region29: #{tpu_custom_call.1} parent=27 // pred_check
          %p202 = pneg %p57
        $region30: #{tpu_custom_call.1} parent=27 // pred_check_branch
          %204 = sbr.rel (%p202) target = $region32
        $region31: #{tpu_custom_call.1} parent=27 // pred_region
          %206 = dma.done %s198, 131072
        $region32: #{tpu_custom_call.1} parent=27 // pred_fallthru
          _
        %s207 = sand.u32 %s70, 1
        %s208 = scalar_lea.sflag [#allocation6], %s207
        %s209 = sand.u32 %s70, 1
        %s210 = smul.addr %s209, 8192
        %s211 = scalar_lea.vmem [#allocation5], %s210
        // Predicated region
        $region33: #{tpu_custom_call.1} parent=27 // pred_check
          %p212 = pneg %p83
        $region34: #{tpu_custom_call.1} parent=27 // pred_check_branch
          %214 = sbr.rel (%p212) target = $region36
        $region35: #{tpu_custom_call.1} parent=27 // pred_region
          %216 = dma.done %s208, 131072
        $region36: #{tpu_custom_call.1} parent=27 // pred_fallthru
          _
        %s217 = sand.u32 %s44, 1
        %s218 = scalar_lea.sflag [#allocation3], %s217
        %s219 = sand.u32 %s44, 1
        %s220 = smul.addr %s219, 8192
        %s221 = scalar_lea.vmem [#allocation2], %s220
        %p222 = pneg %p57
        %p223 = pneg %p54
        %s224 = sand.u32 %s70, 1
        %s225 = scalar_lea.sflag [#allocation6], %s224
        %s226 = sand.u32 %s70, 1
        %s227 = smul.addr %s226, 8192
        %s228 = scalar_lea.vmem [#allocation5], %s227
        %p229 = pneg %p83
        %p230 = pneg %p80
        %p231 = pneg %p111
        %p232 = pneg %p108
        %s233 = sand.u32 %s98, 1
        %s234 = scalar_lea.sflag [#allocation4], %s233
        %s235 = sand.u32 %s98, 1
        %s236 = smul.addr %s235, 8192
        %s237 = scalar_lea.vmem [#allocation7], %s236
        %s238 = smul.u32 1024, %s26
        %s239 = ssub.s32 2200, %s238
        %p240 = scmp.lt.s32.totalorder %s239, 1024
        %s241 = scalar_select %p240, %s239, 1024
        %s242 = smul.u32 8, %s241
        %s243 = smul.u32 1024, %s26
        %s244 = ssub.s32 2400, %s243
        %p245 = scmp.lt.s32.totalorder %s244, 1024
        %s246 = scalar_select %p245, %s244, 1024
        %s247 = smul.u32 8, %s246
        %s248 = smul.u32 1024, %s26
        %s249 = ssub.s32 2200, %s248
        %p250 = scmp.lt.s32.totalorder %s249, 1024
        %s251 = scalar_select %p250, %s249, 1024
        %s252 = smul.u32 8, %s251
        %v253 = vld [vmem:[%s201] sm:$0xff]
        %v254 = vld [vmem:[%s201 + $0x8] sm:$0xff]
        %v255 = vld [vmem:[%s201 + $0x10] sm:$0xff]
        %v256 = vld [vmem:[%s201 + $0x18] sm:$0xff]
        %v257 = vld [vmem:[%s201 + $0x20] sm:$0xff]
        %v258 = vld [vmem:[%s201 + $0x28] sm:$0xff]
        %v259 = vld [vmem:[%s201 + $0x30] sm:$0xff]
        %v260 = vld [vmem:[%s201 + $0x38] sm:$0xff]
        %v261 = vld [vmem:[%s201 + $0x40] sm:$0xff]
        %v262 = vld [vmem:[%s201 + $0x48] sm:$0xff]
        %v263 = vld [vmem:[%s201 + $0x50] sm:$0xff]
        %v264 = vld [vmem:[%s201 + $0x58] sm:$0xff]
        %v265 = vld [vmem:[%s201 + $0x60] sm:$0xff]
        %v266 = vld [vmem:[%s201 + $0x68] sm:$0xff]
        %v267 = vld [vmem:[%s201 + $0x70] sm:$0xff]
        %v268 = vld [vmem:[%s201 + $0x78] sm:$0xff]
        %v269 = vld [vmem:[%s201 + $0x80] sm:$0xff]
        %v270 = vld [vmem:[%s201 + $0x88] sm:$0xff]
        %v271 = vld [vmem:[%s201 + $0x90] sm:$0xff]
        %v272 = vld [vmem:[%s201 + $0x98] sm:$0xff]
        %v273 = vld [vmem:[%s201 + $0xa0] sm:$0xff]
        %v274 = vld [vmem:[%s201 + $0xa8] sm:$0xff]
        %v275 = vld [vmem:[%s201 + $0xb0] sm:$0xff]
        %v276 = vld [vmem:[%s201 + $0xb8] sm:$0xff]
        %v277 = vld [vmem:[%s201 + $0xc0] sm:$0xff]
        %v278 = vld [vmem:[%s201 + $0xc8] sm:$0xff]
        %v279 = vld [vmem:[%s201 + $0xd0] sm:$0xff]
        %v280 = vld [vmem:[%s201 + $0xd8] sm:$0xff]
        %v281 = vld [vmem:[%s201 + $0xe0] sm:$0xff]
        %v282 = vld [vmem:[%s201 + $0xe8] sm:$0xff]
        %v283 = vld [vmem:[%s201 + $0xf0] sm:$0xff]
        %v284 = vld [vmem:[%s201 + $0xf8] sm:$0xff]
        %v285 = vld [vmem:[%s201 + $0x100] sm:$0xff]
        %v286 = vld [vmem:[%s201 + $0x108] sm:$0xff]
        %v287 = vld [vmem:[%s201 + $0x110] sm:$0xff]
        %v288 = vld [vmem:[%s201 + $0x118] sm:$0xff]
        %v289 = vld [vmem:[%s201 + $0x120] sm:$0xff]
        %v290 = vld [vmem:[%s201 + $0x128] sm:$0xff]
        %v291 = vld [vmem:[%s201 + $0x130] sm:$0xff]
        %v292 = vld [vmem:[%s201 + $0x138] sm:$0xff]
        %v293 = vld [vmem:[%s201 + $0x140] sm:$0xff]
        %v294 = vld [vmem:[%s201 + $0x148] sm:$0xff]
        %v295 = vld [vmem:[%s201 + $0x150] sm:$0xff]
        %v296 = vld [vmem:[%s201 + $0x158] sm:$0xff]
        %v297 = vld [vmem:[%s201 + $0x160] sm:$0xff]
        %v298 = vld [vmem:[%s201 + $0x168] sm:$0xff]
        %v299 = vld [vmem:[%s201 + $0x170] sm:$0xff]
        %v300 = vld [vmem:[%s201 + $0x178] sm:$0xff]
        %v301 = vld [vmem:[%s201 + $0x180] sm:$0xff]
        %v302 = vld [vmem:[%s201 + $0x188] sm:$0xff]
        %v303 = vld [vmem:[%s201 + $0x190] sm:$0xff]
        %v304 = vld [vmem:[%s201 + $0x198] sm:$0xff]
        %v305 = vld [vmem:[%s201 + $0x1a0] sm:$0xff]
        %v306 = vld [vmem:[%s201 + $0x1a8] sm:$0xff]
        %v307 = vld [vmem:[%s201 + $0x1b0] sm:$0xff]
        %v308 = vld [vmem:[%s201 + $0x1b8] sm:$0xff]
        %v309 = vld [vmem:[%s201 + $0x1c0] sm:$0xff]
        %v310 = vld [vmem:[%s201 + $0x1c8] sm:$0xff]
        %v311 = vld [vmem:[%s201 + $0x1d0] sm:$0xff]
        %v312 = vld [vmem:[%s201 + $0x1d8] sm:$0xff]
        %v313 = vld [vmem:[%s201 + $0x1e0] sm:$0xff]
        %v314 = vld [vmem:[%s201 + $0x1e8] sm:$0xff]
        %v315 = vld [vmem:[%s201 + $0x1f0] sm:$0xff]
        %v316 = vld [vmem:[%s201 + $0x1f8] sm:$0xff]
        %v317 = vld [vmem:[%s201 + $0x200] sm:$0xff]
        %v318 = vld [vmem:[%s201 + $0x208] sm:$0xff]
        %v319 = vld [vmem:[%s201 + $0x210] sm:$0xff]
        %v320 = vld [vmem:[%s201 + $0x218] sm:$0xff]
        %v321 = vld [vmem:[%s201 + $0x220] sm:$0xff]
        %v322 = vld [vmem:[%s201 + $0x228] sm:$0xff]
        %v323 = vld [vmem:[%s201 + $0x230] sm:$0xff]
        %v324 = vld [vmem:[%s201 + $0x238] sm:$0xff]
        %v325 = vld [vmem:[%s201 + $0x240] sm:$0xff]
        %v326 = vld [vmem:[%s201 + $0x248] sm:$0xff]
        %v327 = vld [vmem:[%s201 + $0x250] sm:$0xff]
        %v328 = vld [vmem:[%s201 + $0x258] sm:$0xff]
        %v329 = vld [vmem:[%s201 + $0x260] sm:$0xff]
        %v330 = vld [vmem:[%s201 + $0x268] sm:$0xff]
        %v331 = vld [vmem:[%s201 + $0x270] sm:$0xff]
        %v332 = vld [vmem:[%s201 + $0x278] sm:$0xff]
        %v333 = vld [vmem:[%s201 + $0x280] sm:$0xff]
        %v334 = vld [vmem:[%s201 + $0x288] sm:$0xff]
        %v335 = vld [vmem:[%s201 + $0x290] sm:$0xff]
        %v336 = vld [vmem:[%s201 + $0x298] sm:$0xff]
        %v337 = vld [vmem:[%s201 + $0x2a0] sm:$0xff]
        %v338 = vld [vmem:[%s201 + $0x2a8] sm:$0xff]
        %v339 = vld [vmem:[%s201 + $0x2b0] sm:$0xff]
        %v340 = vld [vmem:[%s201 + $0x2b8] sm:$0xff]
        %v341 = vld [vmem:[%s201 + $0x2c0] sm:$0xff]
        %v342 = vld [vmem:[%s201 + $0x2c8] sm:$0xff]
        %v343 = vld [vmem:[%s201 + $0x2d0] sm:$0xff]
        %v344 = vld [vmem:[%s201 + $0x2d8] sm:$0xff]
        %v345 = vld [vmem:[%s201 + $0x2e0] sm:$0xff]
        %v346 = vld [vmem:[%s201 + $0x2e8] sm:$0xff]
        %v347 = vld [vmem:[%s201 + $0x2f0] sm:$0xff]
        %v348 = vld [vmem:[%s201 + $0x2f8] sm:$0xff]
        %v349 = vld [vmem:[%s201 + $0x300] sm:$0xff]
        %v350 = vld [vmem:[%s201 + $0x308] sm:$0xff]
        %v351 = vld [vmem:[%s201 + $0x310] sm:$0xff]
        %v352 = vld [vmem:[%s201 + $0x318] sm:$0xff]
        %v353 = vld [vmem:[%s201 + $0x320] sm:$0xff]
        %v354 = vld [vmem:[%s201 + $0x328] sm:$0xff]
        %v355 = vld [vmem:[%s201 + $0x330] sm:$0xff]
        %v356 = vld [vmem:[%s201 + $0x338] sm:$0xff]
        %v357 = vld [vmem:[%s201 + $0x340] sm:$0xff]
        %v358 = vld [vmem:[%s201 + $0x348] sm:$0xff]
        %v359 = vld [vmem:[%s201 + $0x350] sm:$0xff]
        %v360 = vld [vmem:[%s201 + $0x358] sm:$0xff]
        %v361 = vld [vmem:[%s201 + $0x360] sm:$0xff]
        %v362 = vld [vmem:[%s201 + $0x368] sm:$0xff]
        %v363 = vld [vmem:[%s201 + $0x370] sm:$0xff]
        %v364 = vld [vmem:[%s201 + $0x378] sm:$0xff]
        %v365 = vld [vmem:[%s201 + $0x380] sm:$0xff]
        %v366 = vld [vmem:[%s201 + $0x388] sm:$0xff]
        %v367 = vld [vmem:[%s201 + $0x390] sm:$0xff]
        %v368 = vld [vmem:[%s201 + $0x398] sm:$0xff]
        %v369 = vld [vmem:[%s201 + $0x3a0] sm:$0xff]
        %v370 = vld [vmem:[%s201 + $0x3a8] sm:$0xff]
        %v371 = vld [vmem:[%s201 + $0x3b0] sm:$0xff]
        %v372 = vld [vmem:[%s201 + $0x3b8] sm:$0xff]
        %v373 = vld [vmem:[%s201 + $0x3c0] sm:$0xff]
        %v374 = vld [vmem:[%s201 + $0x3c8] sm:$0xff]
        %v375 = vld [vmem:[%s201 + $0x3d0] sm:$0xff]
        %v376 = vld [vmem:[%s201 + $0x3d8] sm:$0xff]
        %v377 = vld [vmem:[%s201 + $0x3e0] sm:$0xff]
        %v378 = vld [vmem:[%s201 + $0x3e8] sm:$0xff]
        %v379 = vld [vmem:[%s201 + $0x3f0] sm:$0xff]
        %v380 = vld [vmem:[%s201 + $0x3f8] sm:$0xff]
        %v381 = vld [vmem:[%s201 + $0x400] sm:$0xff]
        %v382 = vld [vmem:[%s201 + $0x408] sm:$0xff]
        %v383 = vld [vmem:[%s201 + $0x410] sm:$0xff]
        %v384 = vld [vmem:[%s201 + $0x418] sm:$0xff]
        %v385 = vld [vmem:[%s201 + $0x420] sm:$0xff]
        %v386 = vld [vmem:[%s201 + $0x428] sm:$0xff]
        %v387 = vld [vmem:[%s201 + $0x430] sm:$0xff]
        %v388 = vld [vmem:[%s201 + $0x438] sm:$0xff]
        %v389 = vld [vmem:[%s201 + $0x440] sm:$0xff]
        %v390 = vld [vmem:[%s201 + $0x448] sm:$0xff]
        %v391 = vld [vmem:[%s201 + $0x450] sm:$0xff]
        %v392 = vld [vmem:[%s201 + $0x458] sm:$0xff]
        %v393 = vld [vmem:[%s201 + $0x460] sm:$0xff]
        %v394 = vld [vmem:[%s201 + $0x468] sm:$0xff]
        %v395 = vld [vmem:[%s201 + $0x470] sm:$0xff]
        %v396 = vld [vmem:[%s201 + $0x478] sm:$0xff]
        %v397 = vld [vmem:[%s201 + $0x480] sm:$0xff]
        %v398 = vld [vmem:[%s201 + $0x488] sm:$0xff]
        %v399 = vld [vmem:[%s201 + $0x490] sm:$0xff]
        %v400 = vld [vmem:[%s201 + $0x498] sm:$0xff]
        %v401 = vld [vmem:[%s201 + $0x4a0] sm:$0xff]
        %v402 = vld [vmem:[%s201 + $0x4a8] sm:$0xff]
        %v403 = vld [vmem:[%s201 + $0x4b0] sm:$0xff]
        %v404 = vld [vmem:[%s201 + $0x4b8] sm:$0xff]
        %v405 = vld [vmem:[%s201 + $0x4c0] sm:$0xff]
        %v406 = vld [vmem:[%s201 + $0x4c8] sm:$0xff]
        %v407 = vld [vmem:[%s201 + $0x4d0] sm:$0xff]
        %v408 = vld [vmem:[%s201 + $0x4d8] sm:$0xff]
        %v409 = vld [vmem:[%s201 + $0x4e0] sm:$0xff]
        %v410 = vld [vmem:[%s201 + $0x4e8] sm:$0xff]
        %v411 = vld [vmem:[%s201 + $0x4f0] sm:$0xff]
        %v412 = vld [vmem:[%s201 + $0x4f8] sm:$0xff]
        %v413 = vld [vmem:[%s201 + $0x500] sm:$0xff]
        %v414 = vld [vmem:[%s201 + $0x508] sm:$0xff]
        %v415 = vld [vmem:[%s201 + $0x510] sm:$0xff]
        %v416 = vld [vmem:[%s201 + $0x518] sm:$0xff]
        %v417 = vld [vmem:[%s201 + $0x520] sm:$0xff]
        %v418 = vld [vmem:[%s201 + $0x528] sm:$0xff]
        %v419 = vld [vmem:[%s201 + $0x530] sm:$0xff]
        %v420 = vld [vmem:[%s201 + $0x538] sm:$0xff]
        %v421 = vld [vmem:[%s201 + $0x540] sm:$0xff]
        %v422 = vld [vmem:[%s201 + $0x548] sm:$0xff]
        %v423 = vld [vmem:[%s201 + $0x550] sm:$0xff]
        %v424 = vld [vmem:[%s201 + $0x558] sm:$0xff]
        %v425 = vld [vmem:[%s201 + $0x560] sm:$0xff]
        %v426 = vld [vmem:[%s201 + $0x568] sm:$0xff]
        %v427 = vld [vmem:[%s201 + $0x570] sm:$0xff]
        %v428 = vld [vmem:[%s201 + $0x578] sm:$0xff]
        %v429 = vld [vmem:[%s201 + $0x580] sm:$0xff]
        %v430 = vld [vmem:[%s201 + $0x588] sm:$0xff]
        %v431 = vld [vmem:[%s201 + $0x590] sm:$0xff]
        %v432 = vld [vmem:[%s201 + $0x598] sm:$0xff]
        %v433 = vld [vmem:[%s201 + $0x5a0] sm:$0xff]
        %v434 = vld [vmem:[%s201 + $0x5a8] sm:$0xff]
        %v435 = vld [vmem:[%s201 + $0x5b0] sm:$0xff]
        %v436 = vld [vmem:[%s201 + $0x5b8] sm:$0xff]
        %v437 = vld [vmem:[%s201 + $0x5c0] sm:$0xff]
        %v438 = vld [vmem:[%s201 + $0x5c8] sm:$0xff]
        %v439 = vld [vmem:[%s201 + $0x5d0] sm:$0xff]
        %v440 = vld [vmem:[%s201 + $0x5d8] sm:$0xff]
        %v441 = vld [vmem:[%s201 + $0x5e0] sm:$0xff]
        %v442 = vld [vmem:[%s201 + $0x5e8] sm:$0xff]
        %v443 = vld [vmem:[%s201 + $0x5f0] sm:$0xff]
        %v444 = vld [vmem:[%s201 + $0x5f8] sm:$0xff]
        %v445 = vld [vmem:[%s201 + $0x600] sm:$0xff]
        %v446 = vld [vmem:[%s201 + $0x608] sm:$0xff]
        %v447 = vld [vmem:[%s201 + $0x610] sm:$0xff]
        %v448 = vld [vmem:[%s201 + $0x618] sm:$0xff]
        %v449 = vld [vmem:[%s201 + $0x620] sm:$0xff]
        %v450 = vld [vmem:[%s201 + $0x628] sm:$0xff]
        %v451 = vld [vmem:[%s201 + $0x630] sm:$0xff]
        %v452 = vld [vmem:[%s201 + $0x638] sm:$0xff]
        %v453 = vld [vmem:[%s201 + $0x640] sm:$0xff]
        %v454 = vld [vmem:[%s201 + $0x648] sm:$0xff]
        %v455 = vld [vmem:[%s201 + $0x650] sm:$0xff]
        %v456 = vld [vmem:[%s201 + $0x658] sm:$0xff]
        %v457 = vld [vmem:[%s201 + $0x660] sm:$0xff]
        %v458 = vld [vmem:[%s201 + $0x668] sm:$0xff]
        %v459 = vld [vmem:[%s201 + $0x670] sm:$0xff]
        %v460 = vld [vmem:[%s201 + $0x678] sm:$0xff]
        %v461 = vld [vmem:[%s201 + $0x680] sm:$0xff]
        %v462 = vld [vmem:[%s201 + $0x688] sm:$0xff]
        %v463 = vld [vmem:[%s201 + $0x690] sm:$0xff]
        %v464 = vld [vmem:[%s201 + $0x698] sm:$0xff]
        %v465 = vld [vmem:[%s201 + $0x6a0] sm:$0xff]
        %v466 = vld [vmem:[%s201 + $0x6a8] sm:$0xff]
        %v467 = vld [vmem:[%s201 + $0x6b0] sm:$0xff]
        %v468 = vld [vmem:[%s201 + $0x6b8] sm:$0xff]
        %v469 = vld [vmem:[%s201 + $0x6c0] sm:$0xff]
        %v470 = vld [vmem:[%s201 + $0x6c8] sm:$0xff]
        %v471 = vld [vmem:[%s201 + $0x6d0] sm:$0xff]
        %v472 = vld [vmem:[%s201 + $0x6d8] sm:$0xff]
        %v473 = vld [vmem:[%s201 + $0x6e0] sm:$0xff]
        %v474 = vld [vmem:[%s201 + $0x6e8] sm:$0xff]
        %v475 = vld [vmem:[%s201 + $0x6f0] sm:$0xff]
        %v476 = vld [vmem:[%s201 + $0x6f8] sm:$0xff]
        %v477 = vld [vmem:[%s201 + $0x700] sm:$0xff]
        %v478 = vld [vmem:[%s201 + $0x708] sm:$0xff]
        %v479 = vld [vmem:[%s201 + $0x710] sm:$0xff]
        %v480 = vld [vmem:[%s201 + $0x718] sm:$0xff]
        %v481 = vld [vmem:[%s201 + $0x720] sm:$0xff]
        %v482 = vld [vmem:[%s201 + $0x728] sm:$0xff]
        %v483 = vld [vmem:[%s201 + $0x730] sm:$0xff]
        %v484 = vld [vmem:[%s201 + $0x738] sm:$0xff]
        %v485 = vld [vmem:[%s201 + $0x740] sm:$0xff]
        %v486 = vld [vmem:[%s201 + $0x748] sm:$0xff]
        %v487 = vld [vmem:[%s201 + $0x750] sm:$0xff]
        %v488 = vld [vmem:[%s201 + $0x758] sm:$0xff]
        %v489 = vld [vmem:[%s201 + $0x760] sm:$0xff]
        %v490 = vld [vmem:[%s201 + $0x768] sm:$0xff]
        %v491 = vld [vmem:[%s201 + $0x770] sm:$0xff]
        %v492 = vld [vmem:[%s201 + $0x778] sm:$0xff]
        %v493 = vld [vmem:[%s201 + $0x780] sm:$0xff]
        %v494 = vld [vmem:[%s201 + $0x788] sm:$0xff]
        %v495 = vld [vmem:[%s201 + $0x790] sm:$0xff]
        %v496 = vld [vmem:[%s201 + $0x798] sm:$0xff]
        %v497 = vld [vmem:[%s201 + $0x7a0] sm:$0xff]
        %v498 = vld [vmem:[%s201 + $0x7a8] sm:$0xff]
        %v499 = vld [vmem:[%s201 + $0x7b0] sm:$0xff]
        %v500 = vld [vmem:[%s201 + $0x7b8] sm:$0xff]
        %v501 = vld [vmem:[%s201 + $0x7c0] sm:$0xff]
        %v502 = vld [vmem:[%s201 + $0x7c8] sm:$0xff]
        %v503 = vld [vmem:[%s201 + $0x7d0] sm:$0xff]
        %v504 = vld [vmem:[%s201 + $0x7d8] sm:$0xff]
        %v505 = vld [vmem:[%s201 + $0x7e0] sm:$0xff]
        %v506 = vld [vmem:[%s201 + $0x7e8] sm:$0xff]
        %v507 = vld [vmem:[%s201 + $0x7f0] sm:$0xff]
        %v508 = vld [vmem:[%s201 + $0x7f8] sm:$0xff]
        %v509 = vld [vmem:[%s201 + $0x800] sm:$0xff]
        %v510 = vld [vmem:[%s201 + $0x808] sm:$0xff]
        %v511 = vld [vmem:[%s201 + $0x810] sm:$0xff]
        %v512 = vld [vmem:[%s201 + $0x818] sm:$0xff]
        %v513 = vld [vmem:[%s201 + $0x820] sm:$0xff]
        %v514 = vld [vmem:[%s201 + $0x828] sm:$0xff]
        %v515 = vld [vmem:[%s201 + $0x830] sm:$0xff]
        %v516 = vld [vmem:[%s201 + $0x838] sm:$0xff]
        %v517 = vld [vmem:[%s201 + $0x840] sm:$0xff]
        %v518 = vld [vmem:[%s201 + $0x848] sm:$0xff]
        %v519 = vld [vmem:[%s201 + $0x850] sm:$0xff]
        %v520 = vld [vmem:[%s201 + $0x858] sm:$0xff]
        %v521 = vld [vmem:[%s201 + $0x860] sm:$0xff]
        %v522 = vld [vmem:[%s201 + $0x868] sm:$0xff]
        %v523 = vld [vmem:[%s201 + $0x870] sm:$0xff]
        %v524 = vld [vmem:[%s201 + $0x878] sm:$0xff]
        %v525 = vld [vmem:[%s201 + $0x880] sm:$0xff]
        %v526 = vld [vmem:[%s201 + $0x888] sm:$0xff]
        %v527 = vld [vmem:[%s201 + $0x890] sm:$0xff]
        %v528 = vld [vmem:[%s201 + $0x898] sm:$0xff]
        %v529 = vld [vmem:[%s201 + $0x8a0] sm:$0xff]
        %v530 = vld [vmem:[%s201 + $0x8a8] sm:$0xff]
        %v531 = vld [vmem:[%s201 + $0x8b0] sm:$0xff]
        %v532 = vld [vmem:[%s201 + $0x8b8] sm:$0xff]
        %v533 = vld [vmem:[%s201 + $0x8c0] sm:$0xff]
        %v534 = vld [vmem:[%s201 + $0x8c8] sm:$0xff]
        %v535 = vld [vmem:[%s201 + $0x8d0] sm:$0xff]
        %v536 = vld [vmem:[%s201 + $0x8d8] sm:$0xff]
        %v537 = vld [vmem:[%s201 + $0x8e0] sm:$0xff]
        %v538 = vld [vmem:[%s201 + $0x8e8] sm:$0xff]
        %v539 = vld [vmem:[%s201 + $0x8f0] sm:$0xff]
        %v540 = vld [vmem:[%s201 + $0x8f8] sm:$0xff]
        %v541 = vld [vmem:[%s201 + $0x900] sm:$0xff]
        %v542 = vld [vmem:[%s201 + $0x908] sm:$0xff]
        %v543 = vld [vmem:[%s201 + $0x910] sm:$0xff]
        %v544 = vld [vmem:[%s201 + $0x918] sm:$0xff]
        %v545 = vld [vmem:[%s201 + $0x920] sm:$0xff]
        %v546 = vld [vmem:[%s201 + $0x928] sm:$0xff]
        %v547 = vld [vmem:[%s201 + $0x930] sm:$0xff]
        %v548 = vld [vmem:[%s201 + $0x938] sm:$0xff]
        %v549 = vld [vmem:[%s201 + $0x940] sm:$0xff]
        %v550 = vld [vmem:[%s201 + $0x948] sm:$0xff]
        %v551 = vld [vmem:[%s201 + $0x950] sm:$0xff]
        %v552 = vld [vmem:[%s201 + $0x958] sm:$0xff]
        %v553 = vld [vmem:[%s201 + $0x960] sm:$0xff]
        %v554 = vld [vmem:[%s201 + $0x968] sm:$0xff]
        %v555 = vld [vmem:[%s201 + $0x970] sm:$0xff]
        %v556 = vld [vmem:[%s201 + $0x978] sm:$0xff]
        %v557 = vld [vmem:[%s201 + $0x980] sm:$0xff]
        %v558 = vld [vmem:[%s201 + $0x988] sm:$0xff]
        %v559 = vld [vmem:[%s201 + $0x990] sm:$0xff]
        %v560 = vld [vmem:[%s201 + $0x998] sm:$0xff]
        %v561 = vld [vmem:[%s201 + $0x9a0] sm:$0xff]
        %v562 = vld [vmem:[%s201 + $0x9a8] sm:$0xff]
        %v563 = vld [vmem:[%s201 + $0x9b0] sm:$0xff]
        %v564 = vld [vmem:[%s201 + $0x9b8] sm:$0xff]
        %v565 = vld [vmem:[%s201 + $0x9c0] sm:$0xff]
        %v566 = vld [vmem:[%s201 + $0x9c8] sm:$0xff]
        %v567 = vld [vmem:[%s201 + $0x9d0] sm:$0xff]
        %v568 = vld [vmem:[%s201 + $0x9d8] sm:$0xff]
        %v569 = vld [vmem:[%s201 + $0x9e0] sm:$0xff]
        %v570 = vld [vmem:[%s201 + $0x9e8] sm:$0xff]
        %v571 = vld [vmem:[%s201 + $0x9f0] sm:$0xff]
        %v572 = vld [vmem:[%s201 + $0x9f8] sm:$0xff]
        %v573 = vld [vmem:[%s201 + $0xa00] sm:$0xff]
        %v574 = vld [vmem:[%s201 + $0xa08] sm:$0xff]
        %v575 = vld [vmem:[%s201 + $0xa10] sm:$0xff]
        %v576 = vld [vmem:[%s201 + $0xa18] sm:$0xff]
        %v577 = vld [vmem:[%s201 + $0xa20] sm:$0xff]
        %v578 = vld [vmem:[%s201 + $0xa28] sm:$0xff]
        %v579 = vld [vmem:[%s201 + $0xa30] sm:$0xff]
        %v580 = vld [vmem:[%s201 + $0xa38] sm:$0xff]
        %v581 = vld [vmem:[%s201 + $0xa40] sm:$0xff]
        %v582 = vld [vmem:[%s201 + $0xa48] sm:$0xff]
        %v583 = vld [vmem:[%s201 + $0xa50] sm:$0xff]
        %v584 = vld [vmem:[%s201 + $0xa58] sm:$0xff]
        %v585 = vld [vmem:[%s201 + $0xa60] sm:$0xff]
        %v586 = vld [vmem:[%s201 + $0xa68] sm:$0xff]
        %v587 = vld [vmem:[%s201 + $0xa70] sm:$0xff]
        %v588 = vld [vmem:[%s201 + $0xa78] sm:$0xff]
        %v589 = vld [vmem:[%s201 + $0xa80] sm:$0xff]
        %v590 = vld [vmem:[%s201 + $0xa88] sm:$0xff]
        %v591 = vld [vmem:[%s201 + $0xa90] sm:$0xff]
        %v592 = vld [vmem:[%s201 + $0xa98] sm:$0xff]
        %v593 = vld [vmem:[%s201 + $0xaa0] sm:$0xff]
        %v594 = vld [vmem:[%s201 + $0xaa8] sm:$0xff]
        %v595 = vld [vmem:[%s201 + $0xab0] sm:$0xff]
        %v596 = vld [vmem:[%s201 + $0xab8] sm:$0xff]
        %v597 = vld [vmem:[%s201 + $0xac0] sm:$0xff]
        %v598 = vld [vmem:[%s201 + $0xac8] sm:$0xff]
        %v599 = vld [vmem:[%s201 + $0xad0] sm:$0xff]
        %v600 = vld [vmem:[%s201 + $0xad8] sm:$0xff]
        %v601 = vld [vmem:[%s201 + $0xae0] sm:$0xff]
        %v602 = vld [vmem:[%s201 + $0xae8] sm:$0xff]
        %v603 = vld [vmem:[%s201 + $0xaf0] sm:$0xff]
        %v604 = vld [vmem:[%s201 + $0xaf8] sm:$0xff]
        %v605 = vld [vmem:[%s201 + $0xb00] sm:$0xff]
        %v606 = vld [vmem:[%s201 + $0xb08] sm:$0xff]
        %v607 = vld [vmem:[%s201 + $0xb10] sm:$0xff]
        %v608 = vld [vmem:[%s201 + $0xb18] sm:$0xff]
        %v609 = vld [vmem:[%s201 + $0xb20] sm:$0xff]
        %v610 = vld [vmem:[%s201 + $0xb28] sm:$0xff]
        %v611 = vld [vmem:[%s201 + $0xb30] sm:$0xff]
        %v612 = vld [vmem:[%s201 + $0xb38] sm:$0xff]
        %v613 = vld [vmem:[%s201 + $0xb40] sm:$0xff]
        %v614 = vld [vmem:[%s201 + $0xb48] sm:$0xff]
        %v615 = vld [vmem:[%s201 + $0xb50] sm:$0xff]
        %v616 = vld [vmem:[%s201 + $0xb58] sm:$0xff]
        %v617 = vld [vmem:[%s201 + $0xb60] sm:$0xff]
        %v618 = vld [vmem:[%s201 + $0xb68] sm:$0xff]
        %v619 = vld [vmem:[%s201 + $0xb70] sm:$0xff]
        %v620 = vld [vmem:[%s201 + $0xb78] sm:$0xff]
        %v621 = vld [vmem:[%s201 + $0xb80] sm:$0xff]
        %v622 = vld [vmem:[%s201 + $0xb88] sm:$0xff]
        %v623 = vld [vmem:[%s201 + $0xb90] sm:$0xff]
        %v624 = vld [vmem:[%s201 + $0xb98] sm:$0xff]
        %v625 = vld [vmem:[%s201 + $0xba0] sm:$0xff]
        %v626 = vld [vmem:[%s201 + $0xba8] sm:$0xff]
        %v627 = vld [vmem:[%s201 + $0xbb0] sm:$0xff]
        %v628 = vld [vmem:[%s201 + $0xbb8] sm:$0xff]
        %v629 = vld [vmem:[%s201 + $0xbc0] sm:$0xff]
        %v630 = vld [vmem:[%s201 + $0xbc8] sm:$0xff]
        %v631 = vld [vmem:[%s201 + $0xbd0] sm:$0xff]
        %v632 = vld [vmem:[%s201 + $0xbd8] sm:$0xff]
        %v633 = vld [vmem:[%s201 + $0xbe0] sm:$0xff]
        %v634 = vld [vmem:[%s201 + $0xbe8] sm:$0xff]
        %v635 = vld [vmem:[%s201 + $0xbf0] sm:$0xff]
        %v636 = vld [vmem:[%s201 + $0xbf8] sm:$0xff]
        %v637 = vld [vmem:[%s201 + $0xc00] sm:$0xff]
        %v638 = vld [vmem:[%s201 + $0xc08] sm:$0xff]
        %v639 = vld [vmem:[%s201 + $0xc10] sm:$0xff]
        %v640 = vld [vmem:[%s201 + $0xc18] sm:$0xff]
        %v641 = vld [vmem:[%s201 + $0xc20] sm:$0xff]
        %v642 = vld [vmem:[%s201 + $0xc28] sm:$0xff]
        %v643 = vld [vmem:[%s201 + $0xc30] sm:$0xff]
        %v644 = vld [vmem:[%s201 + $0xc38] sm:$0xff]
        %v645 = vld [vmem:[%s201 + $0xc40] sm:$0xff]
        %v646 = vld [vmem:[%s201 + $0xc48] sm:$0xff]
        %v647 = vld [vmem:[%s201 + $0xc50] sm:$0xff]
        %v648 = vld [vmem:[%s201 + $0xc58] sm:$0xff]
        %v649 = vld [vmem:[%s201 + $0xc60] sm:$0xff]
        %v650 = vld [vmem:[%s201 + $0xc68] sm:$0xff]
        %v651 = vld [vmem:[%s201 + $0xc70] sm:$0xff]
        %v652 = vld [vmem:[%s201 + $0xc78] sm:$0xff]
        %v653 = vld [vmem:[%s201 + $0xc80] sm:$0xff]
        %v654 = vld [vmem:[%s201 + $0xc88] sm:$0xff]
        %v655 = vld [vmem:[%s201 + $0xc90] sm:$0xff]
        %v656 = vld [vmem:[%s201 + $0xc98] sm:$0xff]
        %v657 = vld [vmem:[%s201 + $0xca0] sm:$0xff]
        %v658 = vld [vmem:[%s201 + $0xca8] sm:$0xff]
        %v659 = vld [vmem:[%s201 + $0xcb0] sm:$0xff]
        %v660 = vld [vmem:[%s201 + $0xcb8] sm:$0xff]
        %v661 = vld [vmem:[%s201 + $0xcc0] sm:$0xff]
        %v662 = vld [vmem:[%s201 + $0xcc8] sm:$0xff]
        %v663 = vld [vmem:[%s201 + $0xcd0] sm:$0xff]
        %v664 = vld [vmem:[%s201 + $0xcd8] sm:$0xff]
        %v665 = vld [vmem:[%s201 + $0xce0] sm:$0xff]
        %v666 = vld [vmem:[%s201 + $0xce8] sm:$0xff]
        %v667 = vld [vmem:[%s201 + $0xcf0] sm:$0xff]
        %v668 = vld [vmem:[%s201 + $0xcf8] sm:$0xff]
        %v669 = vld [vmem:[%s201 + $0xd00] sm:$0xff]
        %v670 = vld [vmem:[%s201 + $0xd08] sm:$0xff]
        %v671 = vld [vmem:[%s201 + $0xd10] sm:$0xff]
        %v672 = vld [vmem:[%s201 + $0xd18] sm:$0xff]
        %v673 = vld [vmem:[%s201 + $0xd20] sm:$0xff]
        %v674 = vld [vmem:[%s201 + $0xd28] sm:$0xff]
        %v675 = vld [vmem:[%s201 + $0xd30] sm:$0xff]
        %v676 = vld [vmem:[%s201 + $0xd38] sm:$0xff]
        %v677 = vld [vmem:[%s201 + $0xd40] sm:$0xff]
        %v678 = vld [vmem:[%s201 + $0xd48] sm:$0xff]
        %v679 = vld [vmem:[%s201 + $0xd50] sm:$0xff]
        %v680 = vld [vmem:[%s201 + $0xd58] sm:$0xff]
        %v681 = vld [vmem:[%s201 + $0xd60] sm:$0xff]
        %v682 = vld [vmem:[%s201 + $0xd68] sm:$0xff]
        %v683 = vld [vmem:[%s201 + $0xd70] sm:$0xff]
        %v684 = vld [vmem:[%s201 + $0xd78] sm:$0xff]
        %v685 = vld [vmem:[%s201 + $0xd80] sm:$0xff]
        %v686 = vld [vmem:[%s201 + $0xd88] sm:$0xff]
        %v687 = vld [vmem:[%s201 + $0xd90] sm:$0xff]
        %v688 = vld [vmem:[%s201 + $0xd98] sm:$0xff]
        %v689 = vld [vmem:[%s201 + $0xda0] sm:$0xff]
        %v690 = vld [vmem:[%s201 + $0xda8] sm:$0xff]
        %v691 = vld [vmem:[%s201 + $0xdb0] sm:$0xff]
        %v692 = vld [vmem:[%s201 + $0xdb8] sm:$0xff]
        %v693 = vld [vmem:[%s201 + $0xdc0] sm:$0xff]
        %v694 = vld [vmem:[%s201 + $0xdc8] sm:$0xff]
        %v695 = vld [vmem:[%s201 + $0xdd0] sm:$0xff]
        %v696 = vld [vmem:[%s201 + $0xdd8] sm:$0xff]
        %v697 = vld [vmem:[%s201 + $0xde0] sm:$0xff]
        %v698 = vld [vmem:[%s201 + $0xde8] sm:$0xff]
        %v699 = vld [vmem:[%s201 + $0xdf0] sm:$0xff]
        %v700 = vld [vmem:[%s201 + $0xdf8] sm:$0xff]
        %v701 = vld [vmem:[%s201 + $0xe00] sm:$0xff]
        %v702 = vld [vmem:[%s201 + $0xe08] sm:$0xff]
        %v703 = vld [vmem:[%s201 + $0xe10] sm:$0xff]
        %v704 = vld [vmem:[%s201 + $0xe18] sm:$0xff]
        %v705 = vld [vmem:[%s201 + $0xe20] sm:$0xff]
        %v706 = vld [vmem:[%s201 + $0xe28] sm:$0xff]
        %v707 = vld [vmem:[%s201 + $0xe30] sm:$0xff]
        %v708 = vld [vmem:[%s201 + $0xe38] sm:$0xff]
        %v709 = vld [vmem:[%s201 + $0xe40] sm:$0xff]
        %v710 = vld [vmem:[%s201 + $0xe48] sm:$0xff]
        %v711 = vld [vmem:[%s201 + $0xe50] sm:$0xff]
        %v712 = vld [vmem:[%s201 + $0xe58] sm:$0xff]
        %v713 = vld [vmem:[%s201 + $0xe60] sm:$0xff]
        %v714 = vld [vmem:[%s201 + $0xe68] sm:$0xff]
        %v715 = vld [vmem:[%s201 + $0xe70] sm:$0xff]
        %v716 = vld [vmem:[%s201 + $0xe78] sm:$0xff]
        %v717 = vld [vmem:[%s201 + $0xe80] sm:$0xff]
        %v718 = vld [vmem:[%s201 + $0xe88] sm:$0xff]
        %v719 = vld [vmem:[%s201 + $0xe90] sm:$0xff]
        %v720 = vld [vmem:[%s201 + $0xe98] sm:$0xff]
        %v721 = vld [vmem:[%s201 + $0xea0] sm:$0xff]
        %v722 = vld [vmem:[%s201 + $0xea8] sm:$0xff]
        %v723 = vld [vmem:[%s201 + $0xeb0] sm:$0xff]
        %v724 = vld [vmem:[%s201 + $0xeb8] sm:$0xff]
        %v725 = vld [vmem:[%s201 + $0xec0] sm:$0xff]
        %v726 = vld [vmem:[%s201 + $0xec8] sm:$0xff]
        %v727 = vld [vmem:[%s201 + $0xed0] sm:$0xff]
        %v728 = vld [vmem:[%s201 + $0xed8] sm:$0xff]
        %v729 = vld [vmem:[%s201 + $0xee0] sm:$0xff]
        %v730 = vld [vmem:[%s201 + $0xee8] sm:$0xff]
        %v731 = vld [vmem:[%s201 + $0xef0] sm:$0xff]
        %v732 = vld [vmem:[%s201 + $0xef8] sm:$0xff]
        %v733 = vld [vmem:[%s201 + $0xf00] sm:$0xff]
        %v734 = vld [vmem:[%s201 + $0xf08] sm:$0xff]
        %v735 = vld [vmem:[%s201 + $0xf10] sm:$0xff]
        %v736 = vld [vmem:[%s201 + $0xf18] sm:$0xff]
        %v737 = vld [vmem:[%s201 + $0xf20] sm:$0xff]
        %v738 = vld [vmem:[%s201 + $0xf28] sm:$0xff]
        %v739 = vld [vmem:[%s201 + $0xf30] sm:$0xff]
        %v740 = vld [vmem:[%s201 + $0xf38] sm:$0xff]
        %v741 = vld [vmem:[%s201 + $0xf40] sm:$0xff]
        %v742 = vld [vmem:[%s201 + $0xf48] sm:$0xff]
        %v743 = vld [vmem:[%s201 + $0xf50] sm:$0xff]
        %v744 = vld [vmem:[%s201 + $0xf58] sm:$0xff]
        %v745 = vld [vmem:[%s201 + $0xf60] sm:$0xff]
        %v746 = vld [vmem:[%s201 + $0xf68] sm:$0xff]
        %v747 = vld [vmem:[%s201 + $0xf70] sm:$0xff]
        %v748 = vld [vmem:[%s201 + $0xf78] sm:$0xff]
        %v749 = vld [vmem:[%s201 + $0xf80] sm:$0xff]
        %v750 = vld [vmem:[%s201 + $0xf88] sm:$0xff]
        %v751 = vld [vmem:[%s201 + $0xf90] sm:$0xff]
        %v752 = vld [vmem:[%s201 + $0xf98] sm:$0xff]
        %v753 = vld [vmem:[%s201 + $0xfa0] sm:$0xff]
        %v754 = vld [vmem:[%s201 + $0xfa8] sm:$0xff]
        %v755 = vld [vmem:[%s201 + $0xfb0] sm:$0xff]
        %v756 = vld [vmem:[%s201 + $0xfb8] sm:$0xff]
        %v757 = vld [vmem:[%s201 + $0xfc0] sm:$0xff]
        %v758 = vld [vmem:[%s201 + $0xfc8] sm:$0xff]
        %v759 = vld [vmem:[%s201 + $0xfd0] sm:$0xff]
        %v760 = vld [vmem:[%s201 + $0xfd8] sm:$0xff]
        %v761 = vld [vmem:[%s201 + $0xfe0] sm:$0xff]
        %v762 = vld [vmem:[%s201 + $0xfe8] sm:$0xff]
        %v763 = vld [vmem:[%s201 + $0xff0] sm:$0xff]
        %v764 = vld [vmem:[%s201 + $0xff8] sm:$0xff]
        %v765 = vld [vmem:[%s201 + $0x1000] sm:$0xff]
        %v766 = vld [vmem:[%s201 + $0x1008] sm:$0xff]
        %v767 = vld [vmem:[%s201 + $0x1010] sm:$0xff]
        %v768 = vld [vmem:[%s201 + $0x1018] sm:$0xff]
        %v769 = vld [vmem:[%s201 + $0x1020] sm:$0xff]
        %v770 = vld [vmem:[%s201 + $0x1028] sm:$0xff]
        %v771 = vld [vmem:[%s201 + $0x1030] sm:$0xff]
        %v772 = vld [vmem:[%s201 + $0x1038] sm:$0xff]
        %v773 = vld [vmem:[%s201 + $0x1040] sm:$0xff]
        %v774 = vld [vmem:[%s201 + $0x1048] sm:$0xff]
        %v775 = vld [vmem:[%s201 + $0x1050] sm:$0xff]
        %v776 = vld [vmem:[%s201 + $0x1058] sm:$0xff]
        %v777 = vld [vmem:[%s201 + $0x1060] sm:$0xff]
        %v778 = vld [vmem:[%s201 + $0x1068] sm:$0xff]
        %v779 = vld [vmem:[%s201 + $0x1070] sm:$0xff]
        %v780 = vld [vmem:[%s201 + $0x1078] sm:$0xff]
        %v781 = vld [vmem:[%s201 + $0x1080] sm:$0xff]
        %v782 = vld [vmem:[%s201 + $0x1088] sm:$0xff]
        %v783 = vld [vmem:[%s201 + $0x1090] sm:$0xff]
        %v784 = vld [vmem:[%s201 + $0x1098] sm:$0xff]
        %v785 = vld [vmem:[%s201 + $0x10a0] sm:$0xff]
        %v786 = vld [vmem:[%s201 + $0x10a8] sm:$0xff]
        %v787 = vld [vmem:[%s201 + $0x10b0] sm:$0xff]
        %v788 = vld [vmem:[%s201 + $0x10b8] sm:$0xff]
        %v789 = vld [vmem:[%s201 + $0x10c0] sm:$0xff]
        %v790 = vld [vmem:[%s201 + $0x10c8] sm:$0xff]
        %v791 = vld [vmem:[%s201 + $0x10d0] sm:$0xff]
        %v792 = vld [vmem:[%s201 + $0x10d8] sm:$0xff]
        %v793 = vld [vmem:[%s201 + $0x10e0] sm:$0xff]
        %v794 = vld [vmem:[%s201 + $0x10e8] sm:$0xff]
        %v795 = vld [vmem:[%s201 + $0x10f0] sm:$0xff]
        %v796 = vld [vmem:[%s201 + $0x10f8] sm:$0xff]
        %v797 = vld [vmem:[%s201 + $0x1100] sm:$0xff]
        %v798 = vld [vmem:[%s201 + $0x1108] sm:$0xff]
        %v799 = vld [vmem:[%s201 + $0x1110] sm:$0xff]
        %v800 = vld [vmem:[%s201 + $0x1118] sm:$0xff]
        %v801 = vld [vmem:[%s201 + $0x1120] sm:$0xff]
        %v802 = vld [vmem:[%s201 + $0x1128] sm:$0xff]
        %v803 = vld [vmem:[%s201 + $0x1130] sm:$0xff]
        %v804 = vld [vmem:[%s201 + $0x1138] sm:$0xff]
        %v805 = vld [vmem:[%s201 + $0x1140] sm:$0xff]
        %v806 = vld [vmem:[%s201 + $0x1148] sm:$0xff]
        %v807 = vld [vmem:[%s201 + $0x1150] sm:$0xff]
        %v808 = vld [vmem:[%s201 + $0x1158] sm:$0xff]
        %v809 = vld [vmem:[%s201 + $0x1160] sm:$0xff]
        %v810 = vld [vmem:[%s201 + $0x1168] sm:$0xff]
        %v811 = vld [vmem:[%s201 + $0x1170] sm:$0xff]
        %v812 = vld [vmem:[%s201 + $0x1178] sm:$0xff]
        %v813 = vld [vmem:[%s201 + $0x1180] sm:$0xff]
        %v814 = vld [vmem:[%s201 + $0x1188] sm:$0xff]
        %v815 = vld [vmem:[%s201 + $0x1190] sm:$0xff]
        %v816 = vld [vmem:[%s201 + $0x1198] sm:$0xff]
        %v817 = vld [vmem:[%s201 + $0x11a0] sm:$0xff]
        %v818 = vld [vmem:[%s201 + $0x11a8] sm:$0xff]
        %v819 = vld [vmem:[%s201 + $0x11b0] sm:$0xff]
        %v820 = vld [vmem:[%s201 + $0x11b8] sm:$0xff]
        %v821 = vld [vmem:[%s201 + $0x11c0] sm:$0xff]
        %v822 = vld [vmem:[%s201 + $0x11c8] sm:$0xff]
        %v823 = vld [vmem:[%s201 + $0x11d0] sm:$0xff]
        %v824 = vld [vmem:[%s201 + $0x11d8] sm:$0xff]
        %v825 = vld [vmem:[%s201 + $0x11e0] sm:$0xff]
        %v826 = vld [vmem:[%s201 + $0x11e8] sm:$0xff]
        %v827 = vld [vmem:[%s201 + $0x11f0] sm:$0xff]
        %v828 = vld [vmem:[%s201 + $0x11f8] sm:$0xff]
        %v829 = vld [vmem:[%s201 + $0x1200] sm:$0xff]
        %v830 = vld [vmem:[%s201 + $0x1208] sm:$0xff]
        %v831 = vld [vmem:[%s201 + $0x1210] sm:$0xff]
        %v832 = vld [vmem:[%s201 + $0x1218] sm:$0xff]
        %v833 = vld [vmem:[%s201 + $0x1220] sm:$0xff]
        %v834 = vld [vmem:[%s201 + $0x1228] sm:$0xff]
        %v835 = vld [vmem:[%s201 + $0x1230] sm:$0xff]
        %v836 = vld [vmem:[%s201 + $0x1238] sm:$0xff]
        %v837 = vld [vmem:[%s201 + $0x1240] sm:$0xff]
        %v838 = vld [vmem:[%s201 + $0x1248] sm:$0xff]
        %v839 = vld [vmem:[%s201 + $0x1250] sm:$0xff]
        %v840 = vld [vmem:[%s201 + $0x1258] sm:$0xff]
        %v841 = vld [vmem:[%s201 + $0x1260] sm:$0xff]
        %v842 = vld [vmem:[%s201 + $0x1268] sm:$0xff]
        %v843 = vld [vmem:[%s201 + $0x1270] sm:$0xff]
        %v844 = vld [vmem:[%s201 + $0x1278] sm:$0xff]
        %v845 = vld [vmem:[%s201 + $0x1280] sm:$0xff]
        %v846 = vld [vmem:[%s201 + $0x1288] sm:$0xff]
        %v847 = vld [vmem:[%s201 + $0x1290] sm:$0xff]
        %v848 = vld [vmem:[%s201 + $0x1298] sm:$0xff]
        %v849 = vld [vmem:[%s201 + $0x12a0] sm:$0xff]
        %v850 = vld [vmem:[%s201 + $0x12a8] sm:$0xff]
        %v851 = vld [vmem:[%s201 + $0x12b0] sm:$0xff]
        %v852 = vld [vmem:[%s201 + $0x12b8] sm:$0xff]
        %v853 = vld [vmem:[%s201 + $0x12c0] sm:$0xff]
        %v854 = vld [vmem:[%s201 + $0x12c8] sm:$0xff]
        %v855 = vld [vmem:[%s201 + $0x12d0] sm:$0xff]
        %v856 = vld [vmem:[%s201 + $0x12d8] sm:$0xff]
        %v857 = vld [vmem:[%s201 + $0x12e0] sm:$0xff]
        %v858 = vld [vmem:[%s201 + $0x12e8] sm:$0xff]
        %v859 = vld [vmem:[%s201 + $0x12f0] sm:$0xff]
        %v860 = vld [vmem:[%s201 + $0x12f8] sm:$0xff]
        %v861 = vld [vmem:[%s201 + $0x1300] sm:$0xff]
        %v862 = vld [vmem:[%s201 + $0x1308] sm:$0xff]
        %v863 = vld [vmem:[%s201 + $0x1310] sm:$0xff]
        %v864 = vld [vmem:[%s201 + $0x1318] sm:$0xff]
        %v865 = vld [vmem:[%s201 + $0x1320] sm:$0xff]
        %v866 = vld [vmem:[%s201 + $0x1328] sm:$0xff]
        %v867 = vld [vmem:[%s201 + $0x1330] sm:$0xff]
        %v868 = vld [vmem:[%s201 + $0x1338] sm:$0xff]
        %v869 = vld [vmem:[%s201 + $0x1340] sm:$0xff]
        %v870 = vld [vmem:[%s201 + $0x1348] sm:$0xff]
        %v871 = vld [vmem:[%s201 + $0x1350] sm:$0xff]
        %v872 = vld [vmem:[%s201 + $0x1358] sm:$0xff]
        %v873 = vld [vmem:[%s201 + $0x1360] sm:$0xff]
        %v874 = vld [vmem:[%s201 + $0x1368] sm:$0xff]
        %v875 = vld [vmem:[%s201 + $0x1370] sm:$0xff]
        %v876 = vld [vmem:[%s201 + $0x1378] sm:$0xff]
        %v877 = vld [vmem:[%s201 + $0x1380] sm:$0xff]
        %v878 = vld [vmem:[%s201 + $0x1388] sm:$0xff]
        %v879 = vld [vmem:[%s201 + $0x1390] sm:$0xff]
        %v880 = vld [vmem:[%s201 + $0x1398] sm:$0xff]
        %v881 = vld [vmem:[%s201 + $0x13a0] sm:$0xff]
        %v882 = vld [vmem:[%s201 + $0x13a8] sm:$0xff]
        %v883 = vld [vmem:[%s201 + $0x13b0] sm:$0xff]
        %v884 = vld [vmem:[%s201 + $0x13b8] sm:$0xff]
        %v885 = vld [vmem:[%s201 + $0x13c0] sm:$0xff]
        %v886 = vld [vmem:[%s201 + $0x13c8] sm:$0xff]
        %v887 = vld [vmem:[%s201 + $0x13d0] sm:$0xff]
        %v888 = vld [vmem:[%s201 + $0x13d8] sm:$0xff]
        %v889 = vld [vmem:[%s201 + $0x13e0] sm:$0xff]
        %v890 = vld [vmem:[%s201 + $0x13e8] sm:$0xff]
        %v891 = vld [vmem:[%s201 + $0x13f0] sm:$0xff]
        %v892 = vld [vmem:[%s201 + $0x13f8] sm:$0xff]
        %v893 = vld [vmem:[%s201 + $0x1400] sm:$0xff]
        %v894 = vld [vmem:[%s201 + $0x1408] sm:$0xff]
        %v895 = vld [vmem:[%s201 + $0x1410] sm:$0xff]
        %v896 = vld [vmem:[%s201 + $0x1418] sm:$0xff]
        %v897 = vld [vmem:[%s201 + $0x1420] sm:$0xff]
        %v898 = vld [vmem:[%s201 + $0x1428] sm:$0xff]
        %v899 = vld [vmem:[%s201 + $0x1430] sm:$0xff]
        %v900 = vld [vmem:[%s201 + $0x1438] sm:$0xff]
        %v901 = vld [vmem:[%s201 + $0x1440] sm:$0xff]
        %v902 = vld [vmem:[%s201 + $0x1448] sm:$0xff]
        %v903 = vld [vmem:[%s201 + $0x1450] sm:$0xff]
        %v904 = vld [vmem:[%s201 + $0x1458] sm:$0xff]
        %v905 = vld [vmem:[%s201 + $0x1460] sm:$0xff]
        %v906 = vld [vmem:[%s201 + $0x1468] sm:$0xff]
        %v907 = vld [vmem:[%s201 + $0x1470] sm:$0xff]
        %v908 = vld [vmem:[%s201 + $0x1478] sm:$0xff]
        %v909 = vld [vmem:[%s201 + $0x1480] sm:$0xff]
        %v910 = vld [vmem:[%s201 + $0x1488] sm:$0xff]
        %v911 = vld [vmem:[%s201 + $0x1490] sm:$0xff]
        %v912 = vld [vmem:[%s201 + $0x1498] sm:$0xff]
        %v913 = vld [vmem:[%s201 + $0x14a0] sm:$0xff]
        %v914 = vld [vmem:[%s201 + $0x14a8] sm:$0xff]
        %v915 = vld [vmem:[%s201 + $0x14b0] sm:$0xff]
        %v916 = vld [vmem:[%s201 + $0x14b8] sm:$0xff]
        %v917 = vld [vmem:[%s201 + $0x14c0] sm:$0xff]
        %v918 = vld [vmem:[%s201 + $0x14c8] sm:$0xff]
        %v919 = vld [vmem:[%s201 + $0x14d0] sm:$0xff]
        %v920 = vld [vmem:[%s201 + $0x14d8] sm:$0xff]
        %v921 = vld [vmem:[%s201 + $0x14e0] sm:$0xff]
        %v922 = vld [vmem:[%s201 + $0x14e8] sm:$0xff]
        %v923 = vld [vmem:[%s201 + $0x14f0] sm:$0xff]
        %v924 = vld [vmem:[%s201 + $0x14f8] sm:$0xff]
        %v925 = vld [vmem:[%s201 + $0x1500] sm:$0xff]
        %v926 = vld [vmem:[%s201 + $0x1508] sm:$0xff]
        %v927 = vld [vmem:[%s201 + $0x1510] sm:$0xff]
        %v928 = vld [vmem:[%s201 + $0x1518] sm:$0xff]
        %v929 = vld [vmem:[%s201 + $0x1520] sm:$0xff]
        %v930 = vld [vmem:[%s201 + $0x1528] sm:$0xff]
        %v931 = vld [vmem:[%s201 + $0x1530] sm:$0xff]
        %v932 = vld [vmem:[%s201 + $0x1538] sm:$0xff]
        %v933 = vld [vmem:[%s201 + $0x1540] sm:$0xff]
        %v934 = vld [vmem:[%s201 + $0x1548] sm:$0xff]
        %v935 = vld [vmem:[%s201 + $0x1550] sm:$0xff]
        %v936 = vld [vmem:[%s201 + $0x1558] sm:$0xff]
        %v937 = vld [vmem:[%s201 + $0x1560] sm:$0xff]
        %v938 = vld [vmem:[%s201 + $0x1568] sm:$0xff]
        %v939 = vld [vmem:[%s201 + $0x1570] sm:$0xff]
        %v940 = vld [vmem:[%s201 + $0x1578] sm:$0xff]
        %v941 = vld [vmem:[%s201 + $0x1580] sm:$0xff]
        %v942 = vld [vmem:[%s201 + $0x1588] sm:$0xff]
        %v943 = vld [vmem:[%s201 + $0x1590] sm:$0xff]
        %v944 = vld [vmem:[%s201 + $0x1598] sm:$0xff]
        %v945 = vld [vmem:[%s201 + $0x15a0] sm:$0xff]
        %v946 = vld [vmem:[%s201 + $0x15a8] sm:$0xff]
        %v947 = vld [vmem:[%s201 + $0x15b0] sm:$0xff]
        %v948 = vld [vmem:[%s201 + $0x15b8] sm:$0xff]
        %v949 = vld [vmem:[%s201 + $0x15c0] sm:$0xff]
        %v950 = vld [vmem:[%s201 + $0x15c8] sm:$0xff]
        %v951 = vld [vmem:[%s201 + $0x15d0] sm:$0xff]
        %v952 = vld [vmem:[%s201 + $0x15d8] sm:$0xff]
        %v953 = vld [vmem:[%s201 + $0x15e0] sm:$0xff]
        %v954 = vld [vmem:[%s201 + $0x15e8] sm:$0xff]
        %v955 = vld [vmem:[%s201 + $0x15f0] sm:$0xff]
        %v956 = vld [vmem:[%s201 + $0x15f8] sm:$0xff]
        %v957 = vld [vmem:[%s201 + $0x1600] sm:$0xff]
        %v958 = vld [vmem:[%s201 + $0x1608] sm:$0xff]
        %v959 = vld [vmem:[%s201 + $0x1610] sm:$0xff]
        %v960 = vld [vmem:[%s201 + $0x1618] sm:$0xff]
        %v961 = vld [vmem:[%s201 + $0x1620] sm:$0xff]
        %v962 = vld [vmem:[%s201 + $0x1628] sm:$0xff]
        %v963 = vld [vmem:[%s201 + $0x1630] sm:$0xff]
        %v964 = vld [vmem:[%s201 + $0x1638] sm:$0xff]
        %v965 = vld [vmem:[%s201 + $0x1640] sm:$0xff]
        %v966 = vld [vmem:[%s201 + $0x1648] sm:$0xff]
        %v967 = vld [vmem:[%s201 + $0x1650] sm:$0xff]
        %v968 = vld [vmem:[%s201 + $0x1658] sm:$0xff]
        %v969 = vld [vmem:[%s201 + $0x1660] sm:$0xff]
        %v970 = vld [vmem:[%s201 + $0x1668] sm:$0xff]
        %v971 = vld [vmem:[%s201 + $0x1670] sm:$0xff]
        %v972 = vld [vmem:[%s201 + $0x1678] sm:$0xff]
        %v973 = vld [vmem:[%s201 + $0x1680] sm:$0xff]
        %v974 = vld [vmem:[%s201 + $0x1688] sm:$0xff]
        %v975 = vld [vmem:[%s201 + $0x1690] sm:$0xff]
        %v976 = vld [vmem:[%s201 + $0x1698] sm:$0xff]
        %v977 = vld [vmem:[%s201 + $0x16a0] sm:$0xff]
        %v978 = vld [vmem:[%s201 + $0x16a8] sm:$0xff]
        %v979 = vld [vmem:[%s201 + $0x16b0] sm:$0xff]
        %v980 = vld [vmem:[%s201 + $0x16b8] sm:$0xff]
        %v981 = vld [vmem:[%s201 + $0x16c0] sm:$0xff]
        %v982 = vld [vmem:[%s201 + $0x16c8] sm:$0xff]
        %v983 = vld [vmem:[%s201 + $0x16d0] sm:$0xff]
        %v984 = vld [vmem:[%s201 + $0x16d8] sm:$0xff]
        %v985 = vld [vmem:[%s201 + $0x16e0] sm:$0xff]
        %v986 = vld [vmem:[%s201 + $0x16e8] sm:$0xff]
        %v987 = vld [vmem:[%s201 + $0x16f0] sm:$0xff]
        %v988 = vld [vmem:[%s201 + $0x16f8] sm:$0xff]
        %v989 = vld [vmem:[%s201 + $0x1700] sm:$0xff]
        %v990 = vld [vmem:[%s201 + $0x1708] sm:$0xff]
        %v991 = vld [vmem:[%s201 + $0x1710] sm:$0xff]
        %v992 = vld [vmem:[%s201 + $0x1718] sm:$0xff]
        %v993 = vld [vmem:[%s201 + $0x1720] sm:$0xff]
        %v994 = vld [vmem:[%s201 + $0x1728] sm:$0xff]
        %v995 = vld [vmem:[%s201 + $0x1730] sm:$0xff]
        %v996 = vld [vmem:[%s201 + $0x1738] sm:$0xff]
        %v997 = vld [vmem:[%s201 + $0x1740] sm:$0xff]
        %v998 = vld [vmem:[%s201 + $0x1748] sm:$0xff]
        %v999 = vld [vmem:[%s201 + $0x1750] sm:$0xff]
        %v1000 = vld [vmem:[%s201 + $0x1758] sm:$0xff]
        %v1001 = vld [vmem:[%s201 + $0x1760] sm:$0xff]
        %v1002 = vld [vmem:[%s201 + $0x1768] sm:$0xff]
        %v1003 = vld [vmem:[%s201 + $0x1770] sm:$0xff]
        %v1004 = vld [vmem:[%s201 + $0x1778] sm:$0xff]
        %v1005 = vld [vmem:[%s201 + $0x1780] sm:$0xff]
        %v1006 = vld [vmem:[%s201 + $0x1788] sm:$0xff]
        %v1007 = vld [vmem:[%s201 + $0x1790] sm:$0xff]
        %v1008 = vld [vmem:[%s201 + $0x1798] sm:$0xff]
        %v1009 = vld [vmem:[%s201 + $0x17a0] sm:$0xff]
        %v1010 = vld [vmem:[%s201 + $0x17a8] sm:$0xff]
        %v1011 = vld [vmem:[%s201 + $0x17b0] sm:$0xff]
        %v1012 = vld [vmem:[%s201 + $0x17b8] sm:$0xff]
        %v1013 = vld [vmem:[%s201 + $0x17c0] sm:$0xff]
        %v1014 = vld [vmem:[%s201 + $0x17c8] sm:$0xff]
        %v1015 = vld [vmem:[%s201 + $0x17d0] sm:$0xff]
        %v1016 = vld [vmem:[%s201 + $0x17d8] sm:$0xff]
        %v1017 = vld [vmem:[%s201 + $0x17e0] sm:$0xff]
        %v1018 = vld [vmem:[%s201 + $0x17e8] sm:$0xff]
        %v1019 = vld [vmem:[%s201 + $0x17f0] sm:$0xff]
        %v1020 = vld [vmem:[%s201 + $0x17f8] sm:$0xff]
        %v1021 = vld [vmem:[%s201 + $0x1800] sm:$0xff]
        %v1022 = vld [vmem:[%s201 + $0x1808] sm:$0xff]
        %v1023 = vld [vmem:[%s201 + $0x1810] sm:$0xff]
        %v1024 = vld [vmem:[%s201 + $0x1818] sm:$0xff]
        %v1025 = vld [vmem:[%s201 + $0x1820] sm:$0xff]
        %v1026 = vld [vmem:[%s201 + $0x1828] sm:$0xff]
        %v1027 = vld [vmem:[%s201 + $0x1830] sm:$0xff]
        %v1028 = vld [vmem:[%s201 + $0x1838] sm:$0xff]
        %v1029 = vld [vmem:[%s201 + $0x1840] sm:$0xff]
        %v1030 = vld [vmem:[%s201 + $0x1848] sm:$0xff]
        %v1031 = vld [vmem:[%s201 + $0x1850] sm:$0xff]
        %v1032 = vld [vmem:[%s201 + $0x1858] sm:$0xff]
        %v1033 = vld [vmem:[%s201 + $0x1860] sm:$0xff]
        %v1034 = vld [vmem:[%s201 + $0x1868] sm:$0xff]
        %v1035 = vld [vmem:[%s201 + $0x1870] sm:$0xff]
        %v1036 = vld [vmem:[%s201 + $0x1878] sm:$0xff]
        %v1037 = vld [vmem:[%s201 + $0x1880] sm:$0xff]
        %v1038 = vld [vmem:[%s201 + $0x1888] sm:$0xff]
        %v1039 = vld [vmem:[%s201 + $0x1890] sm:$0xff]
        %v1040 = vld [vmem:[%s201 + $0x1898] sm:$0xff]
        %v1041 = vld [vmem:[%s201 + $0x18a0] sm:$0xff]
        %v1042 = vld [vmem:[%s201 + $0x18a8] sm:$0xff]
        %v1043 = vld [vmem:[%s201 + $0x18b0] sm:$0xff]
        %v1044 = vld [vmem:[%s201 + $0x18b8] sm:$0xff]
        %v1045 = vld [vmem:[%s201 + $0x18c0] sm:$0xff]
        %v1046 = vld [vmem:[%s201 + $0x18c8] sm:$0xff]
        %v1047 = vld [vmem:[%s201 + $0x18d0] sm:$0xff]
        %v1048 = vld [vmem:[%s201 + $0x18d8] sm:$0xff]
        %v1049 = vld [vmem:[%s201 + $0x18e0] sm:$0xff]
        %v1050 = vld [vmem:[%s201 + $0x18e8] sm:$0xff]
        %v1051 = vld [vmem:[%s201 + $0x18f0] sm:$0xff]
        %v1052 = vld [vmem:[%s201 + $0x18f8] sm:$0xff]
        %v1053 = vld [vmem:[%s201 + $0x1900] sm:$0xff]
        %v1054 = vld [vmem:[%s201 + $0x1908] sm:$0xff]
        %v1055 = vld [vmem:[%s201 + $0x1910] sm:$0xff]
        %v1056 = vld [vmem:[%s201 + $0x1918] sm:$0xff]
        %v1057 = vld [vmem:[%s201 + $0x1920] sm:$0xff]
        %v1058 = vld [vmem:[%s201 + $0x1928] sm:$0xff]
        %v1059 = vld [vmem:[%s201 + $0x1930] sm:$0xff]
        %v1060 = vld [vmem:[%s201 + $0x1938] sm:$0xff]
        %v1061 = vld [vmem:[%s201 + $0x1940] sm:$0xff]
        %v1062 = vld [vmem:[%s201 + $0x1948] sm:$0xff]
        %v1063 = vld [vmem:[%s201 + $0x1950] sm:$0xff]
        %v1064 = vld [vmem:[%s201 + $0x1958] sm:$0xff]
        %v1065 = vld [vmem:[%s201 + $0x1960] sm:$0xff]
        %v1066 = vld [vmem:[%s201 + $0x1968] sm:$0xff]
        %v1067 = vld [vmem:[%s201 + $0x1970] sm:$0xff]
        %v1068 = vld [vmem:[%s201 + $0x1978] sm:$0xff]
        %v1069 = vld [vmem:[%s201 + $0x1980] sm:$0xff]
        %v1070 = vld [vmem:[%s201 + $0x1988] sm:$0xff]
        %v1071 = vld [vmem:[%s201 + $0x1990] sm:$0xff]
        %v1072 = vld [vmem:[%s201 + $0x1998] sm:$0xff]
        %v1073 = vld [vmem:[%s201 + $0x19a0] sm:$0xff]
        %v1074 = vld [vmem:[%s201 + $0x19a8] sm:$0xff]
        %v1075 = vld [vmem:[%s201 + $0x19b0] sm:$0xff]
        %v1076 = vld [vmem:[%s201 + $0x19b8] sm:$0xff]
        %v1077 = vld [vmem:[%s201 + $0x19c0] sm:$0xff]
        %v1078 = vld [vmem:[%s201 + $0x19c8] sm:$0xff]
        %v1079 = vld [vmem:[%s201 + $0x19d0] sm:$0xff]
        %v1080 = vld [vmem:[%s201 + $0x19d8] sm:$0xff]
        %v1081 = vld [vmem:[%s201 + $0x19e0] sm:$0xff]
        %v1082 = vld [vmem:[%s201 + $0x19e8] sm:$0xff]
        %v1083 = vld [vmem:[%s201 + $0x19f0] sm:$0xff]
        %v1084 = vld [vmem:[%s201 + $0x19f8] sm:$0xff]
        %v1085 = vld [vmem:[%s201 + $0x1a00] sm:$0xff]
        %v1086 = vld [vmem:[%s201 + $0x1a08] sm:$0xff]
        %v1087 = vld [vmem:[%s201 + $0x1a10] sm:$0xff]
        %v1088 = vld [vmem:[%s201 + $0x1a18] sm:$0xff]
        %v1089 = vld [vmem:[%s201 + $0x1a20] sm:$0xff]
        %v1090 = vld [vmem:[%s201 + $0x1a28] sm:$0xff]
        %v1091 = vld [vmem:[%s201 + $0x1a30] sm:$0xff]
        %v1092 = vld [vmem:[%s201 + $0x1a38] sm:$0xff]
        %v1093 = vld [vmem:[%s201 + $0x1a40] sm:$0xff]
        %v1094 = vld [vmem:[%s201 + $0x1a48] sm:$0xff]
        %v1095 = vld [vmem:[%s201 + $0x1a50] sm:$0xff]
        %v1096 = vld [vmem:[%s201 + $0x1a58] sm:$0xff]
        %v1097 = vld [vmem:[%s201 + $0x1a60] sm:$0xff]
        %v1098 = vld [vmem:[%s201 + $0x1a68] sm:$0xff]
        %v1099 = vld [vmem:[%s201 + $0x1a70] sm:$0xff]
        %v1100 = vld [vmem:[%s201 + $0x1a78] sm:$0xff]
        %v1101 = vld [vmem:[%s201 + $0x1a80] sm:$0xff]
        %v1102 = vld [vmem:[%s201 + $0x1a88] sm:$0xff]
        %v1103 = vld [vmem:[%s201 + $0x1a90] sm:$0xff]
        %v1104 = vld [vmem:[%s201 + $0x1a98] sm:$0xff]
        %v1105 = vld [vmem:[%s201 + $0x1aa0] sm:$0xff]
        %v1106 = vld [vmem:[%s201 + $0x1aa8] sm:$0xff]
        %v1107 = vld [vmem:[%s201 + $0x1ab0] sm:$0xff]
        %v1108 = vld [vmem:[%s201 + $0x1ab8] sm:$0xff]
        %v1109 = vld [vmem:[%s201 + $0x1ac0] sm:$0xff]
        %v1110 = vld [vmem:[%s201 + $0x1ac8] sm:$0xff]
        %v1111 = vld [vmem:[%s201 + $0x1ad0] sm:$0xff]
        %v1112 = vld [vmem:[%s201 + $0x1ad8] sm:$0xff]
        %v1113 = vld [vmem:[%s201 + $0x1ae0] sm:$0xff]
        %v1114 = vld [vmem:[%s201 + $0x1ae8] sm:$0xff]
        %v1115 = vld [vmem:[%s201 + $0x1af0] sm:$0xff]
        %v1116 = vld [vmem:[%s201 + $0x1af8] sm:$0xff]
        %v1117 = vld [vmem:[%s201 + $0x1b00] sm:$0xff]
        %v1118 = vld [vmem:[%s201 + $0x1b08] sm:$0xff]
        %v1119 = vld [vmem:[%s201 + $0x1b10] sm:$0xff]
        %v1120 = vld [vmem:[%s201 + $0x1b18] sm:$0xff]
        %v1121 = vld [vmem:[%s201 + $0x1b20] sm:$0xff]
        %v1122 = vld [vmem:[%s201 + $0x1b28] sm:$0xff]
        %v1123 = vld [vmem:[%s201 + $0x1b30] sm:$0xff]
        %v1124 = vld [vmem:[%s201 + $0x1b38] sm:$0xff]
        %v1125 = vld [vmem:[%s201 + $0x1b40] sm:$0xff]
        %v1126 = vld [vmem:[%s201 + $0x1b48] sm:$0xff]
        %v1127 = vld [vmem:[%s201 + $0x1b50] sm:$0xff]
        %v1128 = vld [vmem:[%s201 + $0x1b58] sm:$0xff]
        %v1129 = vld [vmem:[%s201 + $0x1b60] sm:$0xff]
        %v1130 = vld [vmem:[%s201 + $0x1b68] sm:$0xff]
        %v1131 = vld [vmem:[%s201 + $0x1b70] sm:$0xff]
        %v1132 = vld [vmem:[%s201 + $0x1b78] sm:$0xff]
        %v1133 = vld [vmem:[%s201 + $0x1b80] sm:$0xff]
        %v1134 = vld [vmem:[%s201 + $0x1b88] sm:$0xff]
        %v1135 = vld [vmem:[%s201 + $0x1b90] sm:$0xff]
        %v1136 = vld [vmem:[%s201 + $0x1b98] sm:$0xff]
        %v1137 = vld [vmem:[%s201 + $0x1ba0] sm:$0xff]
        %v1138 = vld [vmem:[%s201 + $0x1ba8] sm:$0xff]
        %v1139 = vld [vmem:[%s201 + $0x1bb0] sm:$0xff]
        %v1140 = vld [vmem:[%s201 + $0x1bb8] sm:$0xff]
        %v1141 = vld [vmem:[%s201 + $0x1bc0] sm:$0xff]
        %v1142 = vld [vmem:[%s201 + $0x1bc8] sm:$0xff]
        %v1143 = vld [vmem:[%s201 + $0x1bd0] sm:$0xff]
        %v1144 = vld [vmem:[%s201 + $0x1bd8] sm:$0xff]
        %v1145 = vld [vmem:[%s201 + $0x1be0] sm:$0xff]
        %v1146 = vld [vmem:[%s201 + $0x1be8] sm:$0xff]
        %v1147 = vld [vmem:[%s201 + $0x1bf0] sm:$0xff]
        %v1148 = vld [vmem:[%s201 + $0x1bf8] sm:$0xff]
        %v1149 = vld [vmem:[%s201 + $0x1c00] sm:$0xff]
        %v1150 = vld [vmem:[%s201 + $0x1c08] sm:$0xff]
        %v1151 = vld [vmem:[%s201 + $0x1c10] sm:$0xff]
        %v1152 = vld [vmem:[%s201 + $0x1c18] sm:$0xff]
        %v1153 = vld [vmem:[%s201 + $0x1c20] sm:$0xff]
        %v1154 = vld [vmem:[%s201 + $0x1c28] sm:$0xff]
        %v1155 = vld [vmem:[%s201 + $0x1c30] sm:$0xff]
        %v1156 = vld [vmem:[%s201 + $0x1c38] sm:$0xff]
        %v1157 = vld [vmem:[%s201 + $0x1c40] sm:$0xff]
        %v1158 = vld [vmem:[%s201 + $0x1c48] sm:$0xff]
        %v1159 = vld [vmem:[%s201 + $0x1c50] sm:$0xff]
        %v1160 = vld [vmem:[%s201 + $0x1c58] sm:$0xff]
        %v1161 = vld [vmem:[%s201 + $0x1c60] sm:$0xff]
        %v1162 = vld [vmem:[%s201 + $0x1c68] sm:$0xff]
        %v1163 = vld [vmem:[%s201 + $0x1c70] sm:$0xff]
        %v1164 = vld [vmem:[%s201 + $0x1c78] sm:$0xff]
        %v1165 = vld [vmem:[%s201 + $0x1c80] sm:$0xff]
        %v1166 = vld [vmem:[%s201 + $0x1c88] sm:$0xff]
        %v1167 = vld [vmem:[%s201 + $0x1c90] sm:$0xff]
        %v1168 = vld [vmem:[%s201 + $0x1c98] sm:$0xff]
        %v1169 = vld [vmem:[%s201 + $0x1ca0] sm:$0xff]
        %v1170 = vld [vmem:[%s201 + $0x1ca8] sm:$0xff]
        %v1171 = vld [vmem:[%s201 + $0x1cb0] sm:$0xff]
        %v1172 = vld [vmem:[%s201 + $0x1cb8] sm:$0xff]
        %v1173 = vld [vmem:[%s201 + $0x1cc0] sm:$0xff]
        %v1174 = vld [vmem:[%s201 + $0x1cc8] sm:$0xff]
        %v1175 = vld [vmem:[%s201 + $0x1cd0] sm:$0xff]
        %v1176 = vld [vmem:[%s201 + $0x1cd8] sm:$0xff]
        %v1177 = vld [vmem:[%s201 + $0x1ce0] sm:$0xff]
        %v1178 = vld [vmem:[%s201 + $0x1ce8] sm:$0xff]
        %v1179 = vld [vmem:[%s201 + $0x1cf0] sm:$0xff]
        %v1180 = vld [vmem:[%s201 + $0x1cf8] sm:$0xff]
        %v1181 = vld [vmem:[%s201 + $0x1d00] sm:$0xff]
        %v1182 = vld [vmem:[%s201 + $0x1d08] sm:$0xff]
        %v1183 = vld [vmem:[%s201 + $0x1d10] sm:$0xff]
        %v1184 = vld [vmem:[%s201 + $0x1d18] sm:$0xff]
        %v1185 = vld [vmem:[%s201 + $0x1d20] sm:$0xff]
        %v1186 = vld [vmem:[%s201 + $0x1d28] sm:$0xff]
        %v1187 = vld [vmem:[%s201 + $0x1d30] sm:$0xff]
        %v1188 = vld [vmem:[%s201 + $0x1d38] sm:$0xff]
        %v1189 = vld [vmem:[%s201 + $0x1d40] sm:$0xff]
        %v1190 = vld [vmem:[%s201 + $0x1d48] sm:$0xff]
        %v1191 = vld [vmem:[%s201 + $0x1d50] sm:$0xff]
        %v1192 = vld [vmem:[%s201 + $0x1d58] sm:$0xff]
        %v1193 = vld [vmem:[%s201 + $0x1d60] sm:$0xff]
        %v1194 = vld [vmem:[%s201 + $0x1d68] sm:$0xff]
        %v1195 = vld [vmem:[%s201 + $0x1d70] sm:$0xff]
        %v1196 = vld [vmem:[%s201 + $0x1d78] sm:$0xff]
        %v1197 = vld [vmem:[%s201 + $0x1d80] sm:$0xff]
        %v1198 = vld [vmem:[%s201 + $0x1d88] sm:$0xff]
        %v1199 = vld [vmem:[%s201 + $0x1d90] sm:$0xff]
        %v1200 = vld [vmem:[%s201 + $0x1d98] sm:$0xff]
        %v1201 = vld [vmem:[%s201 + $0x1da0] sm:$0xff]
        %v1202 = vld [vmem:[%s201 + $0x1da8] sm:$0xff]
        %v1203 = vld [vmem:[%s201 + $0x1db0] sm:$0xff]
        %v1204 = vld [vmem:[%s201 + $0x1db8] sm:$0xff]
        %v1205 = vld [vmem:[%s201 + $0x1dc0] sm:$0xff]
        %v1206 = vld [vmem:[%s201 + $0x1dc8] sm:$0xff]
        %v1207 = vld [vmem:[%s201 + $0x1dd0] sm:$0xff]
        %v1208 = vld [vmem:[%s201 + $0x1dd8] sm:$0xff]
        %v1209 = vld [vmem:[%s201 + $0x1de0] sm:$0xff]
        %v1210 = vld [vmem:[%s201 + $0x1de8] sm:$0xff]
        %v1211 = vld [vmem:[%s201 + $0x1df0] sm:$0xff]
        %v1212 = vld [vmem:[%s201 + $0x1df8] sm:$0xff]
        %v1213 = vld [vmem:[%s201 + $0x1e00] sm:$0xff]
        %v1214 = vld [vmem:[%s201 + $0x1e08] sm:$0xff]
        %v1215 = vld [vmem:[%s201 + $0x1e10] sm:$0xff]
        %v1216 = vld [vmem:[%s201 + $0x1e18] sm:$0xff]
        %v1217 = vld [vmem:[%s201 + $0x1e20] sm:$0xff]
        %v1218 = vld [vmem:[%s201 + $0x1e28] sm:$0xff]
        %v1219 = vld [vmem:[%s201 + $0x1e30] sm:$0xff]
        %v1220 = vld [vmem:[%s201 + $0x1e38] sm:$0xff]
        %v1221 = vld [vmem:[%s201 + $0x1e40] sm:$0xff]
        %v1222 = vld [vmem:[%s201 + $0x1e48] sm:$0xff]
        %v1223 = vld [vmem:[%s201 + $0x1e50] sm:$0xff]
        %v1224 = vld [vmem:[%s201 + $0x1e58] sm:$0xff]
        %v1225 = vld [vmem:[%s201 + $0x1e60] sm:$0xff]
        %v1226 = vld [vmem:[%s201 + $0x1e68] sm:$0xff]
        %v1227 = vld [vmem:[%s201 + $0x1e70] sm:$0xff]
        %v1228 = vld [vmem:[%s201 + $0x1e78] sm:$0xff]
        %v1229 = vld [vmem:[%s201 + $0x1e80] sm:$0xff]
        %v1230 = vld [vmem:[%s201 + $0x1e88] sm:$0xff]
        %v1231 = vld [vmem:[%s201 + $0x1e90] sm:$0xff]
        %v1232 = vld [vmem:[%s201 + $0x1e98] sm:$0xff]
        %v1233 = vld [vmem:[%s201 + $0x1ea0] sm:$0xff]
        %v1234 = vld [vmem:[%s201 + $0x1ea8] sm:$0xff]
        %v1235 = vld [vmem:[%s201 + $0x1eb0] sm:$0xff]
        %v1236 = vld [vmem:[%s201 + $0x1eb8] sm:$0xff]
        %v1237 = vld [vmem:[%s201 + $0x1ec0] sm:$0xff]
        %v1238 = vld [vmem:[%s201 + $0x1ec8] sm:$0xff]
        %v1239 = vld [vmem:[%s201 + $0x1ed0] sm:$0xff]
        %v1240 = vld [vmem:[%s201 + $0x1ed8] sm:$0xff]
        %v1241 = vld [vmem:[%s201 + $0x1ee0] sm:$0xff]
        %v1242 = vld [vmem:[%s201 + $0x1ee8] sm:$0xff]
        %v1243 = vld [vmem:[%s201 + $0x1ef0] sm:$0xff]
        %v1244 = vld [vmem:[%s201 + $0x1ef8] sm:$0xff]
        %v1245 = vld [vmem:[%s201 + $0x1f00] sm:$0xff]
        %v1246 = vld [vmem:[%s201 + $0x1f08] sm:$0xff]
        %v1247 = vld [vmem:[%s201 + $0x1f10] sm:$0xff]
        %v1248 = vld [vmem:[%s201 + $0x1f18] sm:$0xff]
        %v1249 = vld [vmem:[%s201 + $0x1f20] sm:$0xff]
        %v1250 = vld [vmem:[%s201 + $0x1f28] sm:$0xff]
        %v1251 = vld [vmem:[%s201 + $0x1f30] sm:$0xff]
        %v1252 = vld [vmem:[%s201 + $0x1f38] sm:$0xff]
        %v1253 = vld [vmem:[%s201 + $0x1f40] sm:$0xff]
        %v1254 = vld [vmem:[%s201 + $0x1f48] sm:$0xff]
        %v1255 = vld [vmem:[%s201 + $0x1f50] sm:$0xff]
        %v1256 = vld [vmem:[%s201 + $0x1f58] sm:$0xff]
        %v1257 = vld [vmem:[%s201 + $0x1f60] sm:$0xff]
        %v1258 = vld [vmem:[%s201 + $0x1f68] sm:$0xff]
        %v1259 = vld [vmem:[%s201 + $0x1f70] sm:$0xff]
        %v1260 = vld [vmem:[%s201 + $0x1f78] sm:$0xff]
        %v1261 = vld [vmem:[%s201 + $0x1f80] sm:$0xff]
        %v1262 = vld [vmem:[%s201 + $0x1f88] sm:$0xff]
        %v1263 = vld [vmem:[%s201 + $0x1f90] sm:$0xff]
        %v1264 = vld [vmem:[%s201 + $0x1f98] sm:$0xff]
        %v1265 = vld [vmem:[%s201 + $0x1fa0] sm:$0xff]
        %v1266 = vld [vmem:[%s201 + $0x1fa8] sm:$0xff]
        %v1267 = vld [vmem:[%s201 + $0x1fb0] sm:$0xff]
        %v1268 = vld [vmem:[%s201 + $0x1fb8] sm:$0xff]
        %v1269 = vld [vmem:[%s201 + $0x1fc0] sm:$0xff]
        %v1270 = vld [vmem:[%s201 + $0x1fc8] sm:$0xff]
        %v1271 = vld [vmem:[%s201 + $0x1fd0] sm:$0xff]
        %v1272 = vld [vmem:[%s201 + $0x1fd8] sm:$0xff]
        %v1273 = vld [vmem:[%s201 + $0x1fe0] sm:$0xff]
        %v1274 = vld [vmem:[%s201 + $0x1fe8] sm:$0xff]
        %v1275 = vld [vmem:[%s201 + $0x1ff0] sm:$0xff]
        %v1276 = vld [vmem:[%s201 + $0x1ff8] sm:$0xff]
        %v1277 = vld [vmem:[%s211] sm:$0xff]
        %v1278 = vld [vmem:[%s211 + $0x8] sm:$0xff]
        %v1279 = vld [vmem:[%s211 + $0x10] sm:$0xff]
        %v1280 = vld [vmem:[%s211 + $0x18] sm:$0xff]
        %v1281 = vld [vmem:[%s211 + $0x20] sm:$0xff]
        %v1282 = vld [vmem:[%s211 + $0x28] sm:$0xff]
        %v1283 = vld [vmem:[%s211 + $0x30] sm:$0xff]
        %v1284 = vld [vmem:[%s211 + $0x38] sm:$0xff]
        %v1285 = vld [vmem:[%s211 + $0x40] sm:$0xff]
        %v1286 = vld [vmem:[%s211 + $0x48] sm:$0xff]
        %v1287 = vld [vmem:[%s211 + $0x50] sm:$0xff]
        %v1288 = vld [vmem:[%s211 + $0x58] sm:$0xff]
        %v1289 = vld [vmem:[%s211 + $0x60] sm:$0xff]
        %v1290 = vld [vmem:[%s211 + $0x68] sm:$0xff]
        %v1291 = vld [vmem:[%s211 + $0x70] sm:$0xff]
        %v1292 = vld [vmem:[%s211 + $0x78] sm:$0xff]
        %v1293 = vld [vmem:[%s211 + $0x80] sm:$0xff]
        %v1294 = vld [vmem:[%s211 + $0x88] sm:$0xff]
        %v1295 = vld [vmem:[%s211 + $0x90] sm:$0xff]
        %v1296 = vld [vmem:[%s211 + $0x98] sm:$0xff]
        %v1297 = vld [vmem:[%s211 + $0xa0] sm:$0xff]
        %v1298 = vld [vmem:[%s211 + $0xa8] sm:$0xff]
        %v1299 = vld [vmem:[%s211 + $0xb0] sm:$0xff]
        %v1300 = vld [vmem:[%s211 + $0xb8] sm:$0xff]
        %v1301 = vld [vmem:[%s211 + $0xc0] sm:$0xff]
        %v1302 = vld [vmem:[%s211 + $0xc8] sm:$0xff]
        %v1303 = vld [vmem:[%s211 + $0xd0] sm:$0xff]
        %v1304 = vld [vmem:[%s211 + $0xd8] sm:$0xff]
        %v1305 = vld [vmem:[%s211 + $0xe0] sm:$0xff]
        %v1306 = vld [vmem:[%s211 + $0xe8] sm:$0xff]
        %v1307 = vld [vmem:[%s211 + $0xf0] sm:$0xff]
        %v1308 = vld [vmem:[%s211 + $0xf8] sm:$0xff]
        %v1309 = vld [vmem:[%s211 + $0x100] sm:$0xff]
        %v1310 = vld [vmem:[%s211 + $0x108] sm:$0xff]
        %v1311 = vld [vmem:[%s211 + $0x110] sm:$0xff]
        %v1312 = vld [vmem:[%s211 + $0x118] sm:$0xff]
        %v1313 = vld [vmem:[%s211 + $0x120] sm:$0xff]
        %v1314 = vld [vmem:[%s211 + $0x128] sm:$0xff]
        %v1315 = vld [vmem:[%s211 + $0x130] sm:$0xff]
        %v1316 = vld [vmem:[%s211 + $0x138] sm:$0xff]
        %v1317 = vld [vmem:[%s211 + $0x140] sm:$0xff]
        %v1318 = vld [vmem:[%s211 + $0x148] sm:$0xff]
        %v1319 = vld [vmem:[%s211 + $0x150] sm:$0xff]
        %v1320 = vld [vmem:[%s211 + $0x158] sm:$0xff]
        %v1321 = vld [vmem:[%s211 + $0x160] sm:$0xff]
        %v1322 = vld [vmem:[%s211 + $0x168] sm:$0xff]
        %v1323 = vld [vmem:[%s211 + $0x170] sm:$0xff]
        %v1324 = vld [vmem:[%s211 + $0x178] sm:$0xff]
        %v1325 = vld [vmem:[%s211 + $0x180] sm:$0xff]
        %v1326 = vld [vmem:[%s211 + $0x188] sm:$0xff]
        %v1327 = vld [vmem:[%s211 + $0x190] sm:$0xff]
        %v1328 = vld [vmem:[%s211 + $0x198] sm:$0xff]
        %v1329 = vld [vmem:[%s211 + $0x1a0] sm:$0xff]
        %v1330 = vld [vmem:[%s211 + $0x1a8] sm:$0xff]
        %v1331 = vld [vmem:[%s211 + $0x1b0] sm:$0xff]
        %v1332 = vld [vmem:[%s211 + $0x1b8] sm:$0xff]
        %v1333 = vld [vmem:[%s211 + $0x1c0] sm:$0xff]
        %v1334 = vld [vmem:[%s211 + $0x1c8] sm:$0xff]
        %v1335 = vld [vmem:[%s211 + $0x1d0] sm:$0xff]
        %v1336 = vld [vmem:[%s211 + $0x1d8] sm:$0xff]
        %v1337 = vld [vmem:[%s211 + $0x1e0] sm:$0xff]
        %v1338 = vld [vmem:[%s211 + $0x1e8] sm:$0xff]
        %v1339 = vld [vmem:[%s211 + $0x1f0] sm:$0xff]
        %v1340 = vld [vmem:[%s211 + $0x1f8] sm:$0xff]
        %v1341 = vld [vmem:[%s211 + $0x200] sm:$0xff]
        %v1342 = vld [vmem:[%s211 + $0x208] sm:$0xff]
        %v1343 = vld [vmem:[%s211 + $0x210] sm:$0xff]
        %v1344 = vld [vmem:[%s211 + $0x218] sm:$0xff]
        %v1345 = vld [vmem:[%s211 + $0x220] sm:$0xff]
        %v1346 = vld [vmem:[%s211 + $0x228] sm:$0xff]
        %v1347 = vld [vmem:[%s211 + $0x230] sm:$0xff]
        %v1348 = vld [vmem:[%s211 + $0x238] sm:$0xff]
        %v1349 = vld [vmem:[%s211 + $0x240] sm:$0xff]
        %v1350 = vld [vmem:[%s211 + $0x248] sm:$0xff]
        %v1351 = vld [vmem:[%s211 + $0x250] sm:$0xff]
        %v1352 = vld [vmem:[%s211 + $0x258] sm:$0xff]
        %v1353 = vld [vmem:[%s211 + $0x260] sm:$0xff]
        %v1354 = vld [vmem:[%s211 + $0x268] sm:$0xff]
        %v1355 = vld [vmem:[%s211 + $0x270] sm:$0xff]
        %v1356 = vld [vmem:[%s211 + $0x278] sm:$0xff]
        %v1357 = vld [vmem:[%s211 + $0x280] sm:$0xff]
        %v1358 = vld [vmem:[%s211 + $0x288] sm:$0xff]
        %v1359 = vld [vmem:[%s211 + $0x290] sm:$0xff]
        %v1360 = vld [vmem:[%s211 + $0x298] sm:$0xff]
        %v1361 = vld [vmem:[%s211 + $0x2a0] sm:$0xff]
        %v1362 = vld [vmem:[%s211 + $0x2a8] sm:$0xff]
        %v1363 = vld [vmem:[%s211 + $0x2b0] sm:$0xff]
        %v1364 = vld [vmem:[%s211 + $0x2b8] sm:$0xff]
        %v1365 = vld [vmem:[%s211 + $0x2c0] sm:$0xff]
        %v1366 = vld [vmem:[%s211 + $0x2c8] sm:$0xff]
        %v1367 = vld [vmem:[%s211 + $0x2d0] sm:$0xff]
        %v1368 = vld [vmem:[%s211 + $0x2d8] sm:$0xff]
        %v1369 = vld [vmem:[%s211 + $0x2e0] sm:$0xff]
        %v1370 = vld [vmem:[%s211 + $0x2e8] sm:$0xff]
        %v1371 = vld [vmem:[%s211 + $0x2f0] sm:$0xff]
        %v1372 = vld [vmem:[%s211 + $0x2f8] sm:$0xff]
        %v1373 = vld [vmem:[%s211 + $0x300] sm:$0xff]
        %v1374 = vld [vmem:[%s211 + $0x308] sm:$0xff]
        %v1375 = vld [vmem:[%s211 + $0x310] sm:$0xff]
        %v1376 = vld [vmem:[%s211 + $0x318] sm:$0xff]
        %v1377 = vld [vmem:[%s211 + $0x320] sm:$0xff]
        %v1378 = vld [vmem:[%s211 + $0x328] sm:$0xff]
        %v1379 = vld [vmem:[%s211 + $0x330] sm:$0xff]
        %v1380 = vld [vmem:[%s211 + $0x338] sm:$0xff]
        %v1381 = vld [vmem:[%s211 + $0x340] sm:$0xff]
        %v1382 = vld [vmem:[%s211 + $0x348] sm:$0xff]
        %v1383 = vld [vmem:[%s211 + $0x350] sm:$0xff]
        %v1384 = vld [vmem:[%s211 + $0x358] sm:$0xff]
        %v1385 = vld [vmem:[%s211 + $0x360] sm:$0xff]
        %v1386 = vld [vmem:[%s211 + $0x368] sm:$0xff]
        %v1387 = vld [vmem:[%s211 + $0x370] sm:$0xff]
        %v1388 = vld [vmem:[%s211 + $0x378] sm:$0xff]
        %v1389 = vld [vmem:[%s211 + $0x380] sm:$0xff]
        %v1390 = vld [vmem:[%s211 + $0x388] sm:$0xff]
        %v1391 = vld [vmem:[%s211 + $0x390] sm:$0xff]
        %v1392 = vld [vmem:[%s211 + $0x398] sm:$0xff]
        %v1393 = vld [vmem:[%s211 + $0x3a0] sm:$0xff]
        %v1394 = vld [vmem:[%s211 + $0x3a8] sm:$0xff]
        %v1395 = vld [vmem:[%s211 + $0x3b0] sm:$0xff]
        %v1396 = vld [vmem:[%s211 + $0x3b8] sm:$0xff]
        %v1397 = vld [vmem:[%s211 + $0x3c0] sm:$0xff]
        %v1398 = vld [vmem:[%s211 + $0x3c8] sm:$0xff]
        %v1399 = vld [vmem:[%s211 + $0x3d0] sm:$0xff]
        %v1400 = vld [vmem:[%s211 + $0x3d8] sm:$0xff]
        %v1401 = vld [vmem:[%s211 + $0x3e0] sm:$0xff]
        %v1402 = vld [vmem:[%s211 + $0x3e8] sm:$0xff]
        %v1403 = vld [vmem:[%s211 + $0x3f0] sm:$0xff]
        %v1404 = vld [vmem:[%s211 + $0x3f8] sm:$0xff]
        %v1405 = vld [vmem:[%s211 + $0x400] sm:$0xff]
        %v1406 = vld [vmem:[%s211 + $0x408] sm:$0xff]
        %v1407 = vld [vmem:[%s211 + $0x410] sm:$0xff]
        %v1408 = vld [vmem:[%s211 + $0x418] sm:$0xff]
        %v1409 = vld [vmem:[%s211 + $0x420] sm:$0xff]
        %v1410 = vld [vmem:[%s211 + $0x428] sm:$0xff]
        %v1411 = vld [vmem:[%s211 + $0x430] sm:$0xff]
        %v1412 = vld [vmem:[%s211 + $0x438] sm:$0xff]
        %v1413 = vld [vmem:[%s211 + $0x440] sm:$0xff]
        %v1414 = vld [vmem:[%s211 + $0x448] sm:$0xff]
        %v1415 = vld [vmem:[%s211 + $0x450] sm:$0xff]
        %v1416 = vld [vmem:[%s211 + $0x458] sm:$0xff]
        %v1417 = vld [vmem:[%s211 + $0x460] sm:$0xff]
        %v1418 = vld [vmem:[%s211 + $0x468] sm:$0xff]
        %v1419 = vld [vmem:[%s211 + $0x470] sm:$0xff]
        %v1420 = vld [vmem:[%s211 + $0x478] sm:$0xff]
        %v1421 = vld [vmem:[%s211 + $0x480] sm:$0xff]
        %v1422 = vld [vmem:[%s211 + $0x488] sm:$0xff]
        %v1423 = vld [vmem:[%s211 + $0x490] sm:$0xff]
        %v1424 = vld [vmem:[%s211 + $0x498] sm:$0xff]
        %v1425 = vld [vmem:[%s211 + $0x4a0] sm:$0xff]
        %v1426 = vld [vmem:[%s211 + $0x4a8] sm:$0xff]
        %v1427 = vld [vmem:[%s211 + $0x4b0] sm:$0xff]
        %v1428 = vld [vmem:[%s211 + $0x4b8] sm:$0xff]
        %v1429 = vld [vmem:[%s211 + $0x4c0] sm:$0xff]
        %v1430 = vld [vmem:[%s211 + $0x4c8] sm:$0xff]
        %v1431 = vld [vmem:[%s211 + $0x4d0] sm:$0xff]
        %v1432 = vld [vmem:[%s211 + $0x4d8] sm:$0xff]
        %v1433 = vld [vmem:[%s211 + $0x4e0] sm:$0xff]
        %v1434 = vld [vmem:[%s211 + $0x4e8] sm:$0xff]
        %v1435 = vld [vmem:[%s211 + $0x4f0] sm:$0xff]
        %v1436 = vld [vmem:[%s211 + $0x4f8] sm:$0xff]
        %v1437 = vld [vmem:[%s211 + $0x500] sm:$0xff]
        %v1438 = vld [vmem:[%s211 + $0x508] sm:$0xff]
        %v1439 = vld [vmem:[%s211 + $0x510] sm:$0xff]
        %v1440 = vld [vmem:[%s211 + $0x518] sm:$0xff]
        %v1441 = vld [vmem:[%s211 + $0x520] sm:$0xff]
        %v1442 = vld [vmem:[%s211 + $0x528] sm:$0xff]
        %v1443 = vld [vmem:[%s211 + $0x530] sm:$0xff]
        %v1444 = vld [vmem:[%s211 + $0x538] sm:$0xff]
        %v1445 = vld [vmem:[%s211 + $0x540] sm:$0xff]
        %v1446 = vld [vmem:[%s211 + $0x548] sm:$0xff]
        %v1447 = vld [vmem:[%s211 + $0x550] sm:$0xff]
        %v1448 = vld [vmem:[%s211 + $0x558] sm:$0xff]
        %v1449 = vld [vmem:[%s211 + $0x560] sm:$0xff]
        %v1450 = vld [vmem:[%s211 + $0x568] sm:$0xff]
        %v1451 = vld [vmem:[%s211 + $0x570] sm:$0xff]
        %v1452 = vld [vmem:[%s211 + $0x578] sm:$0xff]
        %v1453 = vld [vmem:[%s211 + $0x580] sm:$0xff]
        %v1454 = vld [vmem:[%s211 + $0x588] sm:$0xff]
        %v1455 = vld [vmem:[%s211 + $0x590] sm:$0xff]
        %v1456 = vld [vmem:[%s211 + $0x598] sm:$0xff]
        %v1457 = vld [vmem:[%s211 + $0x5a0] sm:$0xff]
        %v1458 = vld [vmem:[%s211 + $0x5a8] sm:$0xff]
        %v1459 = vld [vmem:[%s211 + $0x5b0] sm:$0xff]
        %v1460 = vld [vmem:[%s211 + $0x5b8] sm:$0xff]
        %v1461 = vld [vmem:[%s211 + $0x5c0] sm:$0xff]
        %v1462 = vld [vmem:[%s211 + $0x5c8] sm:$0xff]
        %v1463 = vld [vmem:[%s211 + $0x5d0] sm:$0xff]
        %v1464 = vld [vmem:[%s211 + $0x5d8] sm:$0xff]
        %v1465 = vld [vmem:[%s211 + $0x5e0] sm:$0xff]
        %v1466 = vld [vmem:[%s211 + $0x5e8] sm:$0xff]
        %v1467 = vld [vmem:[%s211 + $0x5f0] sm:$0xff]
        %v1468 = vld [vmem:[%s211 + $0x5f8] sm:$0xff]
        %v1469 = vld [vmem:[%s211 + $0x600] sm:$0xff]
        %v1470 = vld [vmem:[%s211 + $0x608] sm:$0xff]
        %v1471 = vld [vmem:[%s211 + $0x610] sm:$0xff]
        %v1472 = vld [vmem:[%s211 + $0x618] sm:$0xff]
        %v1473 = vld [vmem:[%s211 + $0x620] sm:$0xff]
        %v1474 = vld [vmem:[%s211 + $0x628] sm:$0xff]
        %v1475 = vld [vmem:[%s211 + $0x630] sm:$0xff]
        %v1476 = vld [vmem:[%s211 + $0x638] sm:$0xff]
        %v1477 = vld [vmem:[%s211 + $0x640] sm:$0xff]
        %v1478 = vld [vmem:[%s211 + $0x648] sm:$0xff]
        %v1479 = vld [vmem:[%s211 + $0x650] sm:$0xff]
        %v1480 = vld [vmem:[%s211 + $0x658] sm:$0xff]
        %v1481 = vld [vmem:[%s211 + $0x660] sm:$0xff]
        %v1482 = vld [vmem:[%s211 + $0x668] sm:$0xff]
        %v1483 = vld [vmem:[%s211 + $0x670] sm:$0xff]
        %v1484 = vld [vmem:[%s211 + $0x678] sm:$0xff]
        %v1485 = vld [vmem:[%s211 + $0x680] sm:$0xff]
        %v1486 = vld [vmem:[%s211 + $0x688] sm:$0xff]
        %v1487 = vld [vmem:[%s211 + $0x690] sm:$0xff]
        %v1488 = vld [vmem:[%s211 + $0x698] sm:$0xff]
        %v1489 = vld [vmem:[%s211 + $0x6a0] sm:$0xff]
        %v1490 = vld [vmem:[%s211 + $0x6a8] sm:$0xff]
        %v1491 = vld [vmem:[%s211 + $0x6b0] sm:$0xff]
        %v1492 = vld [vmem:[%s211 + $0x6b8] sm:$0xff]
        %v1493 = vld [vmem:[%s211 + $0x6c0] sm:$0xff]
        %v1494 = vld [vmem:[%s211 + $0x6c8] sm:$0xff]
        %v1495 = vld [vmem:[%s211 + $0x6d0] sm:$0xff]
        %v1496 = vld [vmem:[%s211 + $0x6d8] sm:$0xff]
        %v1497 = vld [vmem:[%s211 + $0x6e0] sm:$0xff]
        %v1498 = vld [vmem:[%s211 + $0x6e8] sm:$0xff]
        %v1499 = vld [vmem:[%s211 + $0x6f0] sm:$0xff]
        %v1500 = vld [vmem:[%s211 + $0x6f8] sm:$0xff]
        %v1501 = vld [vmem:[%s211 + $0x700] sm:$0xff]
        %v1502 = vld [vmem:[%s211 + $0x708] sm:$0xff]
        %v1503 = vld [vmem:[%s211 + $0x710] sm:$0xff]
        %v1504 = vld [vmem:[%s211 + $0x718] sm:$0xff]
        %v1505 = vld [vmem:[%s211 + $0x720] sm:$0xff]
        %v1506 = vld [vmem:[%s211 + $0x728] sm:$0xff]
        %v1507 = vld [vmem:[%s211 + $0x730] sm:$0xff]
        %v1508 = vld [vmem:[%s211 + $0x738] sm:$0xff]
        %v1509 = vld [vmem:[%s211 + $0x740] sm:$0xff]
        %v1510 = vld [vmem:[%s211 + $0x748] sm:$0xff]
        %v1511 = vld [vmem:[%s211 + $0x750] sm:$0xff]
        %v1512 = vld [vmem:[%s211 + $0x758] sm:$0xff]
        %v1513 = vld [vmem:[%s211 + $0x760] sm:$0xff]
        %v1514 = vld [vmem:[%s211 + $0x768] sm:$0xff]
        %v1515 = vld [vmem:[%s211 + $0x770] sm:$0xff]
        %v1516 = vld [vmem:[%s211 + $0x778] sm:$0xff]
        %v1517 = vld [vmem:[%s211 + $0x780] sm:$0xff]
        %v1518 = vld [vmem:[%s211 + $0x788] sm:$0xff]
        %v1519 = vld [vmem:[%s211 + $0x790] sm:$0xff]
        %v1520 = vld [vmem:[%s211 + $0x798] sm:$0xff]
        %v1521 = vld [vmem:[%s211 + $0x7a0] sm:$0xff]
        %v1522 = vld [vmem:[%s211 + $0x7a8] sm:$0xff]
        %v1523 = vld [vmem:[%s211 + $0x7b0] sm:$0xff]
        %v1524 = vld [vmem:[%s211 + $0x7b8] sm:$0xff]
        %v1525 = vld [vmem:[%s211 + $0x7c0] sm:$0xff]
        %v1526 = vld [vmem:[%s211 + $0x7c8] sm:$0xff]
        %v1527 = vld [vmem:[%s211 + $0x7d0] sm:$0xff]
        %v1528 = vld [vmem:[%s211 + $0x7d8] sm:$0xff]
        %v1529 = vld [vmem:[%s211 + $0x7e0] sm:$0xff]
        %v1530 = vld [vmem:[%s211 + $0x7e8] sm:$0xff]
        %v1531 = vld [vmem:[%s211 + $0x7f0] sm:$0xff]
        %v1532 = vld [vmem:[%s211 + $0x7f8] sm:$0xff]
        %v1533 = vld [vmem:[%s211 + $0x800] sm:$0xff]
        %v1534 = vld [vmem:[%s211 + $0x808] sm:$0xff]
        %v1535 = vld [vmem:[%s211 + $0x810] sm:$0xff]
        %v1536 = vld [vmem:[%s211 + $0x818] sm:$0xff]
        %v1537 = vld [vmem:[%s211 + $0x820] sm:$0xff]
        %v1538 = vld [vmem:[%s211 + $0x828] sm:$0xff]
        %v1539 = vld [vmem:[%s211 + $0x830] sm:$0xff]
        %v1540 = vld [vmem:[%s211 + $0x838] sm:$0xff]
        %v1541 = vld [vmem:[%s211 + $0x840] sm:$0xff]
        %v1542 = vld [vmem:[%s211 + $0x848] sm:$0xff]
        %v1543 = vld [vmem:[%s211 + $0x850] sm:$0xff]
        %v1544 = vld [vmem:[%s211 + $0x858] sm:$0xff]
        %v1545 = vld [vmem:[%s211 + $0x860] sm:$0xff]
        %v1546 = vld [vmem:[%s211 + $0x868] sm:$0xff]
        %v1547 = vld [vmem:[%s211 + $0x870] sm:$0xff]
        %v1548 = vld [vmem:[%s211 + $0x878] sm:$0xff]
        %v1549 = vld [vmem:[%s211 + $0x880] sm:$0xff]
        %v1550 = vld [vmem:[%s211 + $0x888] sm:$0xff]
        %v1551 = vld [vmem:[%s211 + $0x890] sm:$0xff]
        %v1552 = vld [vmem:[%s211 + $0x898] sm:$0xff]
        %v1553 = vld [vmem:[%s211 + $0x8a0] sm:$0xff]
        %v1554 = vld [vmem:[%s211 + $0x8a8] sm:$0xff]
        %v1555 = vld [vmem:[%s211 + $0x8b0] sm:$0xff]
        %v1556 = vld [vmem:[%s211 + $0x8b8] sm:$0xff]
        %v1557 = vld [vmem:[%s211 + $0x8c0] sm:$0xff]
        %v1558 = vld [vmem:[%s211 + $0x8c8] sm:$0xff]
        %v1559 = vld [vmem:[%s211 + $0x8d0] sm:$0xff]
        %v1560 = vld [vmem:[%s211 + $0x8d8] sm:$0xff]
        %v1561 = vld [vmem:[%s211 + $0x8e0] sm:$0xff]
        %v1562 = vld [vmem:[%s211 + $0x8e8] sm:$0xff]
        %v1563 = vld [vmem:[%s211 + $0x8f0] sm:$0xff]
        %v1564 = vld [vmem:[%s211 + $0x8f8] sm:$0xff]
        %v1565 = vld [vmem:[%s211 + $0x900] sm:$0xff]
        %v1566 = vld [vmem:[%s211 + $0x908] sm:$0xff]
        %v1567 = vld [vmem:[%s211 + $0x910] sm:$0xff]
        %v1568 = vld [vmem:[%s211 + $0x918] sm:$0xff]
        %v1569 = vld [vmem:[%s211 + $0x920] sm:$0xff]
        %v1570 = vld [vmem:[%s211 + $0x928] sm:$0xff]
        %v1571 = vld [vmem:[%s211 + $0x930] sm:$0xff]
        %v1572 = vld [vmem:[%s211 + $0x938] sm:$0xff]
        %v1573 = vld [vmem:[%s211 + $0x940] sm:$0xff]
        %v1574 = vld [vmem:[%s211 + $0x948] sm:$0xff]
        %v1575 = vld [vmem:[%s211 + $0x950] sm:$0xff]
        %v1576 = vld [vmem:[%s211 + $0x958] sm:$0xff]
        %v1577 = vld [vmem:[%s211 + $0x960] sm:$0xff]
        %v1578 = vld [vmem:[%s211 + $0x968] sm:$0xff]
        %v1579 = vld [vmem:[%s211 + $0x970] sm:$0xff]
        %v1580 = vld [vmem:[%s211 + $0x978] sm:$0xff]
        %v1581 = vld [vmem:[%s211 + $0x980] sm:$0xff]
        %v1582 = vld [vmem:[%s211 + $0x988] sm:$0xff]
        %v1583 = vld [vmem:[%s211 + $0x990] sm:$0xff]
        %v1584 = vld [vmem:[%s211 + $0x998] sm:$0xff]
        %v1585 = vld [vmem:[%s211 + $0x9a0] sm:$0xff]
        %v1586 = vld [vmem:[%s211 + $0x9a8] sm:$0xff]
        %v1587 = vld [vmem:[%s211 + $0x9b0] sm:$0xff]
        %v1588 = vld [vmem:[%s211 + $0x9b8] sm:$0xff]
        %v1589 = vld [vmem:[%s211 + $0x9c0] sm:$0xff]
        %v1590 = vld [vmem:[%s211 + $0x9c8] sm:$0xff]
        %v1591 = vld [vmem:[%s211 + $0x9d0] sm:$0xff]
        %v1592 = vld [vmem:[%s211 + $0x9d8] sm:$0xff]
        %v1593 = vld [vmem:[%s211 + $0x9e0] sm:$0xff]
        %v1594 = vld [vmem:[%s211 + $0x9e8] sm:$0xff]
        %v1595 = vld [vmem:[%s211 + $0x9f0] sm:$0xff]
        %v1596 = vld [vmem:[%s211 + $0x9f8] sm:$0xff]
        %v1597 = vld [vmem:[%s211 + $0xa00] sm:$0xff]
        %v1598 = vld [vmem:[%s211 + $0xa08] sm:$0xff]
        %v1599 = vld [vmem:[%s211 + $0xa10] sm:$0xff]
        %v1600 = vld [vmem:[%s211 + $0xa18] sm:$0xff]
        %v1601 = vld [vmem:[%s211 + $0xa20] sm:$0xff]
        %v1602 = vld [vmem:[%s211 + $0xa28] sm:$0xff]
        %v1603 = vld [vmem:[%s211 + $0xa30] sm:$0xff]
        %v1604 = vld [vmem:[%s211 + $0xa38] sm:$0xff]
        %v1605 = vld [vmem:[%s211 + $0xa40] sm:$0xff]
        %v1606 = vld [vmem:[%s211 + $0xa48] sm:$0xff]
        %v1607 = vld [vmem:[%s211 + $0xa50] sm:$0xff]
        %v1608 = vld [vmem:[%s211 + $0xa58] sm:$0xff]
        %v1609 = vld [vmem:[%s211 + $0xa60] sm:$0xff]
        %v1610 = vld [vmem:[%s211 + $0xa68] sm:$0xff]
        %v1611 = vld [vmem:[%s211 + $0xa70] sm:$0xff]
        %v1612 = vld [vmem:[%s211 + $0xa78] sm:$0xff]
        %v1613 = vld [vmem:[%s211 + $0xa80] sm:$0xff]
        %v1614 = vld [vmem:[%s211 + $0xa88] sm:$0xff]
        %v1615 = vld [vmem:[%s211 + $0xa90] sm:$0xff]
        %v1616 = vld [vmem:[%s211 + $0xa98] sm:$0xff]
        %v1617 = vld [vmem:[%s211 + $0xaa0] sm:$0xff]
        %v1618 = vld [vmem:[%s211 + $0xaa8] sm:$0xff]
        %v1619 = vld [vmem:[%s211 + $0xab0] sm:$0xff]
        %v1620 = vld [vmem:[%s211 + $0xab8] sm:$0xff]
        %v1621 = vld [vmem:[%s211 + $0xac0] sm:$0xff]
        %v1622 = vld [vmem:[%s211 + $0xac8] sm:$0xff]
        %v1623 = vld [vmem:[%s211 + $0xad0] sm:$0xff]
        %v1624 = vld [vmem:[%s211 + $0xad8] sm:$0xff]
        %v1625 = vld [vmem:[%s211 + $0xae0] sm:$0xff]
        %v1626 = vld [vmem:[%s211 + $0xae8] sm:$0xff]
        %v1627 = vld [vmem:[%s211 + $0xaf0] sm:$0xff]
        %v1628 = vld [vmem:[%s211 + $0xaf8] sm:$0xff]
        %v1629 = vld [vmem:[%s211 + $0xb00] sm:$0xff]
        %v1630 = vld [vmem:[%s211 + $0xb08] sm:$0xff]
        %v1631 = vld [vmem:[%s211 + $0xb10] sm:$0xff]
        %v1632 = vld [vmem:[%s211 + $0xb18] sm:$0xff]
        %v1633 = vld [vmem:[%s211 + $0xb20] sm:$0xff]
        %v1634 = vld [vmem:[%s211 + $0xb28] sm:$0xff]
        %v1635 = vld [vmem:[%s211 + $0xb30] sm:$0xff]
        %v1636 = vld [vmem:[%s211 + $0xb38] sm:$0xff]
        %v1637 = vld [vmem:[%s211 + $0xb40] sm:$0xff]
        %v1638 = vld [vmem:[%s211 + $0xb48] sm:$0xff]
        %v1639 = vld [vmem:[%s211 + $0xb50] sm:$0xff]
        %v1640 = vld [vmem:[%s211 + $0xb58] sm:$0xff]
        %v1641 = vld [vmem:[%s211 + $0xb60] sm:$0xff]
        %v1642 = vld [vmem:[%s211 + $0xb68] sm:$0xff]
        %v1643 = vld [vmem:[%s211 + $0xb70] sm:$0xff]
        %v1644 = vld [vmem:[%s211 + $0xb78] sm:$0xff]
        %v1645 = vld [vmem:[%s211 + $0xb80] sm:$0xff]
        %v1646 = vld [vmem:[%s211 + $0xb88] sm:$0xff]
        %v1647 = vld [vmem:[%s211 + $0xb90] sm:$0xff]
        %v1648 = vld [vmem:[%s211 + $0xb98] sm:$0xff]
        %v1649 = vld [vmem:[%s211 + $0xba0] sm:$0xff]
        %v1650 = vld [vmem:[%s211 + $0xba8] sm:$0xff]
        %v1651 = vld [vmem:[%s211 + $0xbb0] sm:$0xff]
        %v1652 = vld [vmem:[%s211 + $0xbb8] sm:$0xff]
        %v1653 = vld [vmem:[%s211 + $0xbc0] sm:$0xff]
        %v1654 = vld [vmem:[%s211 + $0xbc8] sm:$0xff]
        %v1655 = vld [vmem:[%s211 + $0xbd0] sm:$0xff]
        %v1656 = vld [vmem:[%s211 + $0xbd8] sm:$0xff]
        %v1657 = vld [vmem:[%s211 + $0xbe0] sm:$0xff]
        %v1658 = vld [vmem:[%s211 + $0xbe8] sm:$0xff]
        %v1659 = vld [vmem:[%s211 + $0xbf0] sm:$0xff]
        %v1660 = vld [vmem:[%s211 + $0xbf8] sm:$0xff]
        %v1661 = vld [vmem:[%s211 + $0xc00] sm:$0xff]
        %v1662 = vld [vmem:[%s211 + $0xc08] sm:$0xff]
        %v1663 = vld [vmem:[%s211 + $0xc10] sm:$0xff]
        %v1664 = vld [vmem:[%s211 + $0xc18] sm:$0xff]
        %v1665 = vld [vmem:[%s211 + $0xc20] sm:$0xff]
        %v1666 = vld [vmem:[%s211 + $0xc28] sm:$0xff]
        %v1667 = vld [vmem:[%s211 + $0xc30] sm:$0xff]
        %v1668 = vld [vmem:[%s211 + $0xc38] sm:$0xff]
        %v1669 = vld [vmem:[%s211 + $0xc40] sm:$0xff]
        %v1670 = vld [vmem:[%s211 + $0xc48] sm:$0xff]
        %v1671 = vld [vmem:[%s211 + $0xc50] sm:$0xff]
        %v1672 = vld [vmem:[%s211 + $0xc58] sm:$0xff]
        %v1673 = vld [vmem:[%s211 + $0xc60] sm:$0xff]
        %v1674 = vld [vmem:[%s211 + $0xc68] sm:$0xff]
        %v1675 = vld [vmem:[%s211 + $0xc70] sm:$0xff]
        %v1676 = vld [vmem:[%s211 + $0xc78] sm:$0xff]
        %v1677 = vld [vmem:[%s211 + $0xc80] sm:$0xff]
        %v1678 = vld [vmem:[%s211 + $0xc88] sm:$0xff]
        %v1679 = vld [vmem:[%s211 + $0xc90] sm:$0xff]
        %v1680 = vld [vmem:[%s211 + $0xc98] sm:$0xff]
        %v1681 = vld [vmem:[%s211 + $0xca0] sm:$0xff]
        %v1682 = vld [vmem:[%s211 + $0xca8] sm:$0xff]
        %v1683 = vld [vmem:[%s211 + $0xcb0] sm:$0xff]
        %v1684 = vld [vmem:[%s211 + $0xcb8] sm:$0xff]
        %v1685 = vld [vmem:[%s211 + $0xcc0] sm:$0xff]
        %v1686 = vld [vmem:[%s211 + $0xcc8] sm:$0xff]
        %v1687 = vld [vmem:[%s211 + $0xcd0] sm:$0xff]
        %v1688 = vld [vmem:[%s211 + $0xcd8] sm:$0xff]
        %v1689 = vld [vmem:[%s211 + $0xce0] sm:$0xff]
        %v1690 = vld [vmem:[%s211 + $0xce8] sm:$0xff]
        %v1691 = vld [vmem:[%s211 + $0xcf0] sm:$0xff]
        %v1692 = vld [vmem:[%s211 + $0xcf8] sm:$0xff]
        %v1693 = vld [vmem:[%s211 + $0xd00] sm:$0xff]
        %v1694 = vld [vmem:[%s211 + $0xd08] sm:$0xff]
        %v1695 = vld [vmem:[%s211 + $0xd10] sm:$0xff]
        %v1696 = vld [vmem:[%s211 + $0xd18] sm:$0xff]
        %v1697 = vld [vmem:[%s211 + $0xd20] sm:$0xff]
        %v1698 = vld [vmem:[%s211 + $0xd28] sm:$0xff]
        %v1699 = vld [vmem:[%s211 + $0xd30] sm:$0xff]
        %v1700 = vld [vmem:[%s211 + $0xd38] sm:$0xff]
        %v1701 = vld [vmem:[%s211 + $0xd40] sm:$0xff]
        %v1702 = vld [vmem:[%s211 + $0xd48] sm:$0xff]
        %v1703 = vld [vmem:[%s211 + $0xd50] sm:$0xff]
        %v1704 = vld [vmem:[%s211 + $0xd58] sm:$0xff]
        %v1705 = vld [vmem:[%s211 + $0xd60] sm:$0xff]
        %v1706 = vld [vmem:[%s211 + $0xd68] sm:$0xff]
        %v1707 = vld [vmem:[%s211 + $0xd70] sm:$0xff]
        %v1708 = vld [vmem:[%s211 + $0xd78] sm:$0xff]
        %v1709 = vld [vmem:[%s211 + $0xd80] sm:$0xff]
        %v1710 = vld [vmem:[%s211 + $0xd88] sm:$0xff]
        %v1711 = vld [vmem:[%s211 + $0xd90] sm:$0xff]
        %v1712 = vld [vmem:[%s211 + $0xd98] sm:$0xff]
        %v1713 = vld [vmem:[%s211 + $0xda0] sm:$0xff]
        %v1714 = vld [vmem:[%s211 + $0xda8] sm:$0xff]
        %v1715 = vld [vmem:[%s211 + $0xdb0] sm:$0xff]
        %v1716 = vld [vmem:[%s211 + $0xdb8] sm:$0xff]
        %v1717 = vld [vmem:[%s211 + $0xdc0] sm:$0xff]
        %v1718 = vld [vmem:[%s211 + $0xdc8] sm:$0xff]
        %v1719 = vld [vmem:[%s211 + $0xdd0] sm:$0xff]
        %v1720 = vld [vmem:[%s211 + $0xdd8] sm:$0xff]
        %v1721 = vld [vmem:[%s211 + $0xde0] sm:$0xff]
        %v1722 = vld [vmem:[%s211 + $0xde8] sm:$0xff]
        %v1723 = vld [vmem:[%s211 + $0xdf0] sm:$0xff]
        %v1724 = vld [vmem:[%s211 + $0xdf8] sm:$0xff]
        %v1725 = vld [vmem:[%s211 + $0xe00] sm:$0xff]
        %v1726 = vld [vmem:[%s211 + $0xe08] sm:$0xff]
        %v1727 = vld [vmem:[%s211 + $0xe10] sm:$0xff]
        %v1728 = vld [vmem:[%s211 + $0xe18] sm:$0xff]
        %v1729 = vld [vmem:[%s211 + $0xe20] sm:$0xff]
        %v1730 = vld [vmem:[%s211 + $0xe28] sm:$0xff]
        %v1731 = vld [vmem:[%s211 + $0xe30] sm:$0xff]
        %v1732 = vld [vmem:[%s211 + $0xe38] sm:$0xff]
        %v1733 = vld [vmem:[%s211 + $0xe40] sm:$0xff]
        %v1734 = vld [vmem:[%s211 + $0xe48] sm:$0xff]
        %v1735 = vld [vmem:[%s211 + $0xe50] sm:$0xff]
        %v1736 = vld [vmem:[%s211 + $0xe58] sm:$0xff]
        %v1737 = vld [vmem:[%s211 + $0xe60] sm:$0xff]
        %v1738 = vld [vmem:[%s211 + $0xe68] sm:$0xff]
        %v1739 = vld [vmem:[%s211 + $0xe70] sm:$0xff]
        %v1740 = vld [vmem:[%s211 + $0xe78] sm:$0xff]
        %v1741 = vld [vmem:[%s211 + $0xe80] sm:$0xff]
        %v1742 = vld [vmem:[%s211 + $0xe88] sm:$0xff]
        %v1743 = vld [vmem:[%s211 + $0xe90] sm:$0xff]
        %v1744 = vld [vmem:[%s211 + $0xe98] sm:$0xff]
        %v1745 = vld [vmem:[%s211 + $0xea0] sm:$0xff]
        %v1746 = vld [vmem:[%s211 + $0xea8] sm:$0xff]
        %v1747 = vld [vmem:[%s211 + $0xeb0] sm:$0xff]
        %v1748 = vld [vmem:[%s211 + $0xeb8] sm:$0xff]
        %v1749 = vld [vmem:[%s211 + $0xec0] sm:$0xff]
        %v1750 = vld [vmem:[%s211 + $0xec8] sm:$0xff]
        %v1751 = vld [vmem:[%s211 + $0xed0] sm:$0xff]
        %v1752 = vld [vmem:[%s211 + $0xed8] sm:$0xff]
        %v1753 = vld [vmem:[%s211 + $0xee0] sm:$0xff]
        %v1754 = vld [vmem:[%s211 + $0xee8] sm:$0xff]
        %v1755 = vld [vmem:[%s211 + $0xef0] sm:$0xff]
        %v1756 = vld [vmem:[%s211 + $0xef8] sm:$0xff]
        %v1757 = vld [vmem:[%s211 + $0xf00] sm:$0xff]
        %v1758 = vld [vmem:[%s211 + $0xf08] sm:$0xff]
        %v1759 = vld [vmem:[%s211 + $0xf10] sm:$0xff]
        %v1760 = vld [vmem:[%s211 + $0xf18] sm:$0xff]
        %v1761 = vld [vmem:[%s211 + $0xf20] sm:$0xff]
        %v1762 = vld [vmem:[%s211 + $0xf28] sm:$0xff]
        %v1763 = vld [vmem:[%s211 + $0xf30] sm:$0xff]
        %v1764 = vld [vmem:[%s211 + $0xf38] sm:$0xff]
        %v1765 = vld [vmem:[%s211 + $0xf40] sm:$0xff]
        %v1766 = vld [vmem:[%s211 + $0xf48] sm:$0xff]
        %v1767 = vld [vmem:[%s211 + $0xf50] sm:$0xff]
        %v1768 = vld [vmem:[%s211 + $0xf58] sm:$0xff]
        %v1769 = vld [vmem:[%s211 + $0xf60] sm:$0xff]
        %v1770 = vld [vmem:[%s211 + $0xf68] sm:$0xff]
        %v1771 = vld [vmem:[%s211 + $0xf70] sm:$0xff]
        %v1772 = vld [vmem:[%s211 + $0xf78] sm:$0xff]
        %v1773 = vld [vmem:[%s211 + $0xf80] sm:$0xff]
        %v1774 = vld [vmem:[%s211 + $0xf88] sm:$0xff]
        %v1775 = vld [vmem:[%s211 + $0xf90] sm:$0xff]
        %v1776 = vld [vmem:[%s211 + $0xf98] sm:$0xff]
        %v1777 = vld [vmem:[%s211 + $0xfa0] sm:$0xff]
        %v1778 = vld [vmem:[%s211 + $0xfa8] sm:$0xff]
        %v1779 = vld [vmem:[%s211 + $0xfb0] sm:$0xff]
        %v1780 = vld [vmem:[%s211 + $0xfb8] sm:$0xff]
        %v1781 = vld [vmem:[%s211 + $0xfc0] sm:$0xff]
        %v1782 = vld [vmem:[%s211 + $0xfc8] sm:$0xff]
        %v1783 = vld [vmem:[%s211 + $0xfd0] sm:$0xff]
        %v1784 = vld [vmem:[%s211 + $0xfd8] sm:$0xff]
        %v1785 = vld [vmem:[%s211 + $0xfe0] sm:$0xff]
        %v1786 = vld [vmem:[%s211 + $0xfe8] sm:$0xff]
        %v1787 = vld [vmem:[%s211 + $0xff0] sm:$0xff]
        %v1788 = vld [vmem:[%s211 + $0xff8] sm:$0xff]
        %v1789 = vld [vmem:[%s211 + $0x1000] sm:$0xff]
        %v1790 = vld [vmem:[%s211 + $0x1008] sm:$0xff]
        %v1791 = vld [vmem:[%s211 + $0x1010] sm:$0xff]
        %v1792 = vld [vmem:[%s211 + $0x1018] sm:$0xff]
        %v1793 = vld [vmem:[%s211 + $0x1020] sm:$0xff]
        %v1794 = vld [vmem:[%s211 + $0x1028] sm:$0xff]
        %v1795 = vld [vmem:[%s211 + $0x1030] sm:$0xff]
        %v1796 = vld [vmem:[%s211 + $0x1038] sm:$0xff]
        %v1797 = vld [vmem:[%s211 + $0x1040] sm:$0xff]
        %v1798 = vld [vmem:[%s211 + $0x1048] sm:$0xff]
        %v1799 = vld [vmem:[%s211 + $0x1050] sm:$0xff]
        %v1800 = vld [vmem:[%s211 + $0x1058] sm:$0xff]
        %v1801 = vld [vmem:[%s211 + $0x1060] sm:$0xff]
        %v1802 = vld [vmem:[%s211 + $0x1068] sm:$0xff]
        %v1803 = vld [vmem:[%s211 + $0x1070] sm:$0xff]
        %v1804 = vld [vmem:[%s211 + $0x1078] sm:$0xff]
        %v1805 = vld [vmem:[%s211 + $0x1080] sm:$0xff]
        %v1806 = vld [vmem:[%s211 + $0x1088] sm:$0xff]
        %v1807 = vld [vmem:[%s211 + $0x1090] sm:$0xff]
        %v1808 = vld [vmem:[%s211 + $0x1098] sm:$0xff]
        %v1809 = vld [vmem:[%s211 + $0x10a0] sm:$0xff]
        %v1810 = vld [vmem:[%s211 + $0x10a8] sm:$0xff]
        %v1811 = vld [vmem:[%s211 + $0x10b0] sm:$0xff]
        %v1812 = vld [vmem:[%s211 + $0x10b8] sm:$0xff]
        %v1813 = vld [vmem:[%s211 + $0x10c0] sm:$0xff]
        %v1814 = vld [vmem:[%s211 + $0x10c8] sm:$0xff]
        %v1815 = vld [vmem:[%s211 + $0x10d0] sm:$0xff]
        %v1816 = vld [vmem:[%s211 + $0x10d8] sm:$0xff]
        %v1817 = vld [vmem:[%s211 + $0x10e0] sm:$0xff]
        %v1818 = vld [vmem:[%s211 + $0x10e8] sm:$0xff]
        %v1819 = vld [vmem:[%s211 + $0x10f0] sm:$0xff]
        %v1820 = vld [vmem:[%s211 + $0x10f8] sm:$0xff]
        %v1821 = vld [vmem:[%s211 + $0x1100] sm:$0xff]
        %v1822 = vld [vmem:[%s211 + $0x1108] sm:$0xff]
        %v1823 = vld [vmem:[%s211 + $0x1110] sm:$0xff]
        %v1824 = vld [vmem:[%s211 + $0x1118] sm:$0xff]
        %v1825 = vld [vmem:[%s211 + $0x1120] sm:$0xff]
        %v1826 = vld [vmem:[%s211 + $0x1128] sm:$0xff]
        %v1827 = vld [vmem:[%s211 + $0x1130] sm:$0xff]
        %v1828 = vld [vmem:[%s211 + $0x1138] sm:$0xff]
        %v1829 = vld [vmem:[%s211 + $0x1140] sm:$0xff]
        %v1830 = vld [vmem:[%s211 + $0x1148] sm:$0xff]
        %v1831 = vld [vmem:[%s211 + $0x1150] sm:$0xff]
        %v1832 = vld [vmem:[%s211 + $0x1158] sm:$0xff]
        %v1833 = vld [vmem:[%s211 + $0x1160] sm:$0xff]
        %v1834 = vld [vmem:[%s211 + $0x1168] sm:$0xff]
        %v1835 = vld [vmem:[%s211 + $0x1170] sm:$0xff]
        %v1836 = vld [vmem:[%s211 + $0x1178] sm:$0xff]
        %v1837 = vld [vmem:[%s211 + $0x1180] sm:$0xff]
        %v1838 = vld [vmem:[%s211 + $0x1188] sm:$0xff]
        %v1839 = vld [vmem:[%s211 + $0x1190] sm:$0xff]
        %v1840 = vld [vmem:[%s211 + $0x1198] sm:$0xff]
        %v1841 = vld [vmem:[%s211 + $0x11a0] sm:$0xff]
        %v1842 = vld [vmem:[%s211 + $0x11a8] sm:$0xff]
        %v1843 = vld [vmem:[%s211 + $0x11b0] sm:$0xff]
        %v1844 = vld [vmem:[%s211 + $0x11b8] sm:$0xff]
        %v1845 = vld [vmem:[%s211 + $0x11c0] sm:$0xff]
        %v1846 = vld [vmem:[%s211 + $0x11c8] sm:$0xff]
        %v1847 = vld [vmem:[%s211 + $0x11d0] sm:$0xff]
        %v1848 = vld [vmem:[%s211 + $0x11d8] sm:$0xff]
        %v1849 = vld [vmem:[%s211 + $0x11e0] sm:$0xff]
        %v1850 = vld [vmem:[%s211 + $0x11e8] sm:$0xff]
        %v1851 = vld [vmem:[%s211 + $0x11f0] sm:$0xff]
        %v1852 = vld [vmem:[%s211 + $0x11f8] sm:$0xff]
        %v1853 = vld [vmem:[%s211 + $0x1200] sm:$0xff]
        %v1854 = vld [vmem:[%s211 + $0x1208] sm:$0xff]
        %v1855 = vld [vmem:[%s211 + $0x1210] sm:$0xff]
        %v1856 = vld [vmem:[%s211 + $0x1218] sm:$0xff]
        %v1857 = vld [vmem:[%s211 + $0x1220] sm:$0xff]
        %v1858 = vld [vmem:[%s211 + $0x1228] sm:$0xff]
        %v1859 = vld [vmem:[%s211 + $0x1230] sm:$0xff]
        %v1860 = vld [vmem:[%s211 + $0x1238] sm:$0xff]
        %v1861 = vld [vmem:[%s211 + $0x1240] sm:$0xff]
        %v1862 = vld [vmem:[%s211 + $0x1248] sm:$0xff]
        %v1863 = vld [vmem:[%s211 + $0x1250] sm:$0xff]
        %v1864 = vld [vmem:[%s211 + $0x1258] sm:$0xff]
        %v1865 = vld [vmem:[%s211 + $0x1260] sm:$0xff]
        %v1866 = vld [vmem:[%s211 + $0x1268] sm:$0xff]
        %v1867 = vld [vmem:[%s211 + $0x1270] sm:$0xff]
        %v1868 = vld [vmem:[%s211 + $0x1278] sm:$0xff]
        %v1869 = vld [vmem:[%s211 + $0x1280] sm:$0xff]
        %v1870 = vld [vmem:[%s211 + $0x1288] sm:$0xff]
        %v1871 = vld [vmem:[%s211 + $0x1290] sm:$0xff]
        %v1872 = vld [vmem:[%s211 + $0x1298] sm:$0xff]
        %v1873 = vld [vmem:[%s211 + $0x12a0] sm:$0xff]
        %v1874 = vld [vmem:[%s211 + $0x12a8] sm:$0xff]
        %v1875 = vld [vmem:[%s211 + $0x12b0] sm:$0xff]
        %v1876 = vld [vmem:[%s211 + $0x12b8] sm:$0xff]
        %v1877 = vld [vmem:[%s211 + $0x12c0] sm:$0xff]
        %v1878 = vld [vmem:[%s211 + $0x12c8] sm:$0xff]
        %v1879 = vld [vmem:[%s211 + $0x12d0] sm:$0xff]
        %v1880 = vld [vmem:[%s211 + $0x12d8] sm:$0xff]
        %v1881 = vld [vmem:[%s211 + $0x12e0] sm:$0xff]
        %v1882 = vld [vmem:[%s211 + $0x12e8] sm:$0xff]
        %v1883 = vld [vmem:[%s211 + $0x12f0] sm:$0xff]
        %v1884 = vld [vmem:[%s211 + $0x12f8] sm:$0xff]
        %v1885 = vld [vmem:[%s211 + $0x1300] sm:$0xff]
        %v1886 = vld [vmem:[%s211 + $0x1308] sm:$0xff]
        %v1887 = vld [vmem:[%s211 + $0x1310] sm:$0xff]
        %v1888 = vld [vmem:[%s211 + $0x1318] sm:$0xff]
        %v1889 = vld [vmem:[%s211 + $0x1320] sm:$0xff]
        %v1890 = vld [vmem:[%s211 + $0x1328] sm:$0xff]
        %v1891 = vld [vmem:[%s211 + $0x1330] sm:$0xff]
        %v1892 = vld [vmem:[%s211 + $0x1338] sm:$0xff]
        %v1893 = vld [vmem:[%s211 + $0x1340] sm:$0xff]
        %v1894 = vld [vmem:[%s211 + $0x1348] sm:$0xff]
        %v1895 = vld [vmem:[%s211 + $0x1350] sm:$0xff]
        %v1896 = vld [vmem:[%s211 + $0x1358] sm:$0xff]
        %v1897 = vld [vmem:[%s211 + $0x1360] sm:$0xff]
        %v1898 = vld [vmem:[%s211 + $0x1368] sm:$0xff]
        %v1899 = vld [vmem:[%s211 + $0x1370] sm:$0xff]
        %v1900 = vld [vmem:[%s211 + $0x1378] sm:$0xff]
        %v1901 = vld [vmem:[%s211 + $0x1380] sm:$0xff]
        %v1902 = vld [vmem:[%s211 + $0x1388] sm:$0xff]
        %v1903 = vld [vmem:[%s211 + $0x1390] sm:$0xff]
        %v1904 = vld [vmem:[%s211 + $0x1398] sm:$0xff]
        %v1905 = vld [vmem:[%s211 + $0x13a0] sm:$0xff]
        %v1906 = vld [vmem:[%s211 + $0x13a8] sm:$0xff]
        %v1907 = vld [vmem:[%s211 + $0x13b0] sm:$0xff]
        %v1908 = vld [vmem:[%s211 + $0x13b8] sm:$0xff]
        %v1909 = vld [vmem:[%s211 + $0x13c0] sm:$0xff]
        %v1910 = vld [vmem:[%s211 + $0x13c8] sm:$0xff]
        %v1911 = vld [vmem:[%s211 + $0x13d0] sm:$0xff]
        %v1912 = vld [vmem:[%s211 + $0x13d8] sm:$0xff]
        %v1913 = vld [vmem:[%s211 + $0x13e0] sm:$0xff]
        %v1914 = vld [vmem:[%s211 + $0x13e8] sm:$0xff]
        %v1915 = vld [vmem:[%s211 + $0x13f0] sm:$0xff]
        %v1916 = vld [vmem:[%s211 + $0x13f8] sm:$0xff]
        %v1917 = vld [vmem:[%s211 + $0x1400] sm:$0xff]
        %v1918 = vld [vmem:[%s211 + $0x1408] sm:$0xff]
        %v1919 = vld [vmem:[%s211 + $0x1410] sm:$0xff]
        %v1920 = vld [vmem:[%s211 + $0x1418] sm:$0xff]
        %v1921 = vld [vmem:[%s211 + $0x1420] sm:$0xff]
        %v1922 = vld [vmem:[%s211 + $0x1428] sm:$0xff]
        %v1923 = vld [vmem:[%s211 + $0x1430] sm:$0xff]
        %v1924 = vld [vmem:[%s211 + $0x1438] sm:$0xff]
        %v1925 = vld [vmem:[%s211 + $0x1440] sm:$0xff]
        %v1926 = vld [vmem:[%s211 + $0x1448] sm:$0xff]
        %v1927 = vld [vmem:[%s211 + $0x1450] sm:$0xff]
        %v1928 = vld [vmem:[%s211 + $0x1458] sm:$0xff]
        %v1929 = vld [vmem:[%s211 + $0x1460] sm:$0xff]
        %v1930 = vld [vmem:[%s211 + $0x1468] sm:$0xff]
        %v1931 = vld [vmem:[%s211 + $0x1470] sm:$0xff]
        %v1932 = vld [vmem:[%s211 + $0x1478] sm:$0xff]
        %v1933 = vld [vmem:[%s211 + $0x1480] sm:$0xff]
        %v1934 = vld [vmem:[%s211 + $0x1488] sm:$0xff]
        %v1935 = vld [vmem:[%s211 + $0x1490] sm:$0xff]
        %v1936 = vld [vmem:[%s211 + $0x1498] sm:$0xff]
        %v1937 = vld [vmem:[%s211 + $0x14a0] sm:$0xff]
        %v1938 = vld [vmem:[%s211 + $0x14a8] sm:$0xff]
        %v1939 = vld [vmem:[%s211 + $0x14b0] sm:$0xff]
        %v1940 = vld [vmem:[%s211 + $0x14b8] sm:$0xff]
        %v1941 = vld [vmem:[%s211 + $0x14c0] sm:$0xff]
        %v1942 = vld [vmem:[%s211 + $0x14c8] sm:$0xff]
        %v1943 = vld [vmem:[%s211 + $0x14d0] sm:$0xff]
        %v1944 = vld [vmem:[%s211 + $0x14d8] sm:$0xff]
        %v1945 = vld [vmem:[%s211 + $0x14e0] sm:$0xff]
        %v1946 = vld [vmem:[%s211 + $0x14e8] sm:$0xff]
        %v1947 = vld [vmem:[%s211 + $0x14f0] sm:$0xff]
        %v1948 = vld [vmem:[%s211 + $0x14f8] sm:$0xff]
        %v1949 = vld [vmem:[%s211 + $0x1500] sm:$0xff]
        %v1950 = vld [vmem:[%s211 + $0x1508] sm:$0xff]
        %v1951 = vld [vmem:[%s211 + $0x1510] sm:$0xff]
        %v1952 = vld [vmem:[%s211 + $0x1518] sm:$0xff]
        %v1953 = vld [vmem:[%s211 + $0x1520] sm:$0xff]
        %v1954 = vld [vmem:[%s211 + $0x1528] sm:$0xff]
        %v1955 = vld [vmem:[%s211 + $0x1530] sm:$0xff]
        %v1956 = vld [vmem:[%s211 + $0x1538] sm:$0xff]
        %v1957 = vld [vmem:[%s211 + $0x1540] sm:$0xff]
        %v1958 = vld [vmem:[%s211 + $0x1548] sm:$0xff]
        %v1959 = vld [vmem:[%s211 + $0x1550] sm:$0xff]
        %v1960 = vld [vmem:[%s211 + $0x1558] sm:$0xff]
        %v1961 = vld [vmem:[%s211 + $0x1560] sm:$0xff]
        %v1962 = vld [vmem:[%s211 + $0x1568] sm:$0xff]
        %v1963 = vld [vmem:[%s211 + $0x1570] sm:$0xff]
        %v1964 = vld [vmem:[%s211 + $0x1578] sm:$0xff]
        %v1965 = vld [vmem:[%s211 + $0x1580] sm:$0xff]
        %v1966 = vld [vmem:[%s211 + $0x1588] sm:$0xff]
        %v1967 = vld [vmem:[%s211 + $0x1590] sm:$0xff]
        %v1968 = vld [vmem:[%s211 + $0x1598] sm:$0xff]
        %v1969 = vld [vmem:[%s211 + $0x15a0] sm:$0xff]
        %v1970 = vld [vmem:[%s211 + $0x15a8] sm:$0xff]
        %v1971 = vld [vmem:[%s211 + $0x15b0] sm:$0xff]
        %v1972 = vld [vmem:[%s211 + $0x15b8] sm:$0xff]
        %v1973 = vld [vmem:[%s211 + $0x15c0] sm:$0xff]
        %v1974 = vld [vmem:[%s211 + $0x15c8] sm:$0xff]
        %v1975 = vld [vmem:[%s211 + $0x15d0] sm:$0xff]
        %v1976 = vld [vmem:[%s211 + $0x15d8] sm:$0xff]
        %v1977 = vld [vmem:[%s211 + $0x15e0] sm:$0xff]
        %v1978 = vld [vmem:[%s211 + $0x15e8] sm:$0xff]
        %v1979 = vld [vmem:[%s211 + $0x15f0] sm:$0xff]
        %v1980 = vld [vmem:[%s211 + $0x15f8] sm:$0xff]
        %v1981 = vld [vmem:[%s211 + $0x1600] sm:$0xff]
        %v1982 = vld [vmem:[%s211 + $0x1608] sm:$0xff]
        %v1983 = vld [vmem:[%s211 + $0x1610] sm:$0xff]
        %v1984 = vld [vmem:[%s211 + $0x1618] sm:$0xff]
        %v1985 = vld [vmem:[%s211 + $0x1620] sm:$0xff]
        %v1986 = vld [vmem:[%s211 + $0x1628] sm:$0xff]
        %v1987 = vld [vmem:[%s211 + $0x1630] sm:$0xff]
        %v1988 = vld [vmem:[%s211 + $0x1638] sm:$0xff]
        %v1989 = vld [vmem:[%s211 + $0x1640] sm:$0xff]
        %v1990 = vld [vmem:[%s211 + $0x1648] sm:$0xff]
        %v1991 = vld [vmem:[%s211 + $0x1650] sm:$0xff]
        %v1992 = vld [vmem:[%s211 + $0x1658] sm:$0xff]
        %v1993 = vld [vmem:[%s211 + $0x1660] sm:$0xff]
        %v1994 = vld [vmem:[%s211 + $0x1668] sm:$0xff]
        %v1995 = vld [vmem:[%s211 + $0x1670] sm:$0xff]
        %v1996 = vld [vmem:[%s211 + $0x1678] sm:$0xff]
        %v1997 = vld [vmem:[%s211 + $0x1680] sm:$0xff]
        %v1998 = vld [vmem:[%s211 + $0x1688] sm:$0xff]
        %v1999 = vld [vmem:[%s211 + $0x1690] sm:$0xff]
        %v2000 = vld [vmem:[%s211 + $0x1698] sm:$0xff]
        %v2001 = vld [vmem:[%s211 + $0x16a0] sm:$0xff]
        %v2002 = vld [vmem:[%s211 + $0x16a8] sm:$0xff]
        %v2003 = vld [vmem:[%s211 + $0x16b0] sm:$0xff]
        %v2004 = vld [vmem:[%s211 + $0x16b8] sm:$0xff]
        %v2005 = vld [vmem:[%s211 + $0x16c0] sm:$0xff]
        %v2006 = vld [vmem:[%s211 + $0x16c8] sm:$0xff]
        %v2007 = vld [vmem:[%s211 + $0x16d0] sm:$0xff]
        %v2008 = vld [vmem:[%s211 + $0x16d8] sm:$0xff]
        %v2009 = vld [vmem:[%s211 + $0x16e0] sm:$0xff]
        %v2010 = vld [vmem:[%s211 + $0x16e8] sm:$0xff]
        %v2011 = vld [vmem:[%s211 + $0x16f0] sm:$0xff]
        %v2012 = vld [vmem:[%s211 + $0x16f8] sm:$0xff]
        %v2013 = vld [vmem:[%s211 + $0x1700] sm:$0xff]
        %v2014 = vld [vmem:[%s211 + $0x1708] sm:$0xff]
        %v2015 = vld [vmem:[%s211 + $0x1710] sm:$0xff]
        %v2016 = vld [vmem:[%s211 + $0x1718] sm:$0xff]
        %v2017 = vld [vmem:[%s211 + $0x1720] sm:$0xff]
        %v2018 = vld [vmem:[%s211 + $0x1728] sm:$0xff]
        %v2019 = vld [vmem:[%s211 + $0x1730] sm:$0xff]
        %v2020 = vld [vmem:[%s211 + $0x1738] sm:$0xff]
        %v2021 = vld [vmem:[%s211 + $0x1740] sm:$0xff]
        %v2022 = vld [vmem:[%s211 + $0x1748] sm:$0xff]
        %v2023 = vld [vmem:[%s211 + $0x1750] sm:$0xff]
        %v2024 = vld [vmem:[%s211 + $0x1758] sm:$0xff]
        %v2025 = vld [vmem:[%s211 + $0x1760] sm:$0xff]
        %v2026 = vld [vmem:[%s211 + $0x1768] sm:$0xff]
        %v2027 = vld [vmem:[%s211 + $0x1770] sm:$0xff]
        %v2028 = vld [vmem:[%s211 + $0x1778] sm:$0xff]
        %v2029 = vld [vmem:[%s211 + $0x1780] sm:$0xff]
        %v2030 = vld [vmem:[%s211 + $0x1788] sm:$0xff]
        %v2031 = vld [vmem:[%s211 + $0x1790] sm:$0xff]
        %v2032 = vld [vmem:[%s211 + $0x1798] sm:$0xff]
        %v2033 = vld [vmem:[%s211 + $0x17a0] sm:$0xff]
        %v2034 = vld [vmem:[%s211 + $0x17a8] sm:$0xff]
        %v2035 = vld [vmem:[%s211 + $0x17b0] sm:$0xff]
        %v2036 = vld [vmem:[%s211 + $0x17b8] sm:$0xff]
        %v2037 = vld [vmem:[%s211 + $0x17c0] sm:$0xff]
        %v2038 = vld [vmem:[%s211 + $0x17c8] sm:$0xff]
        %v2039 = vld [vmem:[%s211 + $0x17d0] sm:$0xff]
        %v2040 = vld [vmem:[%s211 + $0x17d8] sm:$0xff]
        %v2041 = vld [vmem:[%s211 + $0x17e0] sm:$0xff]
        %v2042 = vld [vmem:[%s211 + $0x17e8] sm:$0xff]
        %v2043 = vld [vmem:[%s211 + $0x17f0] sm:$0xff]
        %v2044 = vld [vmem:[%s211 + $0x17f8] sm:$0xff]
        %v2045 = vld [vmem:[%s211 + $0x1800] sm:$0xff]
        %v2046 = vld [vmem:[%s211 + $0x1808] sm:$0xff]
        %v2047 = vld [vmem:[%s211 + $0x1810] sm:$0xff]
        %v2048 = vld [vmem:[%s211 + $0x1818] sm:$0xff]
        %v2049 = vld [vmem:[%s211 + $0x1820] sm:$0xff]
        %v2050 = vld [vmem:[%s211 + $0x1828] sm:$0xff]
        %v2051 = vld [vmem:[%s211 + $0x1830] sm:$0xff]
        %v2052 = vld [vmem:[%s211 + $0x1838] sm:$0xff]
        %v2053 = vld [vmem:[%s211 + $0x1840] sm:$0xff]
        %v2054 = vld [vmem:[%s211 + $0x1848] sm:$0xff]
        %v2055 = vld [vmem:[%s211 + $0x1850] sm:$0xff]
        %v2056 = vld [vmem:[%s211 + $0x1858] sm:$0xff]
        %v2057 = vld [vmem:[%s211 + $0x1860] sm:$0xff]
        %v2058 = vld [vmem:[%s211 + $0x1868] sm:$0xff]
        %v2059 = vld [vmem:[%s211 + $0x1870] sm:$0xff]
        %v2060 = vld [vmem:[%s211 + $0x1878] sm:$0xff]
        %v2061 = vld [vmem:[%s211 + $0x1880] sm:$0xff]
        %v2062 = vld [vmem:[%s211 + $0x1888] sm:$0xff]
        %v2063 = vld [vmem:[%s211 + $0x1890] sm:$0xff]
        %v2064 = vld [vmem:[%s211 + $0x1898] sm:$0xff]
        %v2065 = vld [vmem:[%s211 + $0x18a0] sm:$0xff]
        %v2066 = vld [vmem:[%s211 + $0x18a8] sm:$0xff]
        %v2067 = vld [vmem:[%s211 + $0x18b0] sm:$0xff]
        %v2068 = vld [vmem:[%s211 + $0x18b8] sm:$0xff]
        %v2069 = vld [vmem:[%s211 + $0x18c0] sm:$0xff]
        %v2070 = vld [vmem:[%s211 + $0x18c8] sm:$0xff]
        %v2071 = vld [vmem:[%s211 + $0x18d0] sm:$0xff]
        %v2072 = vld [vmem:[%s211 + $0x18d8] sm:$0xff]
        %v2073 = vld [vmem:[%s211 + $0x18e0] sm:$0xff]
        %v2074 = vld [vmem:[%s211 + $0x18e8] sm:$0xff]
        %v2075 = vld [vmem:[%s211 + $0x18f0] sm:$0xff]
        %v2076 = vld [vmem:[%s211 + $0x18f8] sm:$0xff]
        %v2077 = vld [vmem:[%s211 + $0x1900] sm:$0xff]
        %v2078 = vld [vmem:[%s211 + $0x1908] sm:$0xff]
        %v2079 = vld [vmem:[%s211 + $0x1910] sm:$0xff]
        %v2080 = vld [vmem:[%s211 + $0x1918] sm:$0xff]
        %v2081 = vld [vmem:[%s211 + $0x1920] sm:$0xff]
        %v2082 = vld [vmem:[%s211 + $0x1928] sm:$0xff]
        %v2083 = vld [vmem:[%s211 + $0x1930] sm:$0xff]
        %v2084 = vld [vmem:[%s211 + $0x1938] sm:$0xff]
        %v2085 = vld [vmem:[%s211 + $0x1940] sm:$0xff]
        %v2086 = vld [vmem:[%s211 + $0x1948] sm:$0xff]
        %v2087 = vld [vmem:[%s211 + $0x1950] sm:$0xff]
        %v2088 = vld [vmem:[%s211 + $0x1958] sm:$0xff]
        %v2089 = vld [vmem:[%s211 + $0x1960] sm:$0xff]
        %v2090 = vld [vmem:[%s211 + $0x1968] sm:$0xff]
        %v2091 = vld [vmem:[%s211 + $0x1970] sm:$0xff]
        %v2092 = vld [vmem:[%s211 + $0x1978] sm:$0xff]
        %v2093 = vld [vmem:[%s211 + $0x1980] sm:$0xff]
        %v2094 = vld [vmem:[%s211 + $0x1988] sm:$0xff]
        %v2095 = vld [vmem:[%s211 + $0x1990] sm:$0xff]
        %v2096 = vld [vmem:[%s211 + $0x1998] sm:$0xff]
        %v2097 = vld [vmem:[%s211 + $0x19a0] sm:$0xff]
        %v2098 = vld [vmem:[%s211 + $0x19a8] sm:$0xff]
        %v2099 = vld [vmem:[%s211 + $0x19b0] sm:$0xff]
        %v2100 = vld [vmem:[%s211 + $0x19b8] sm:$0xff]
        %v2101 = vld [vmem:[%s211 + $0x19c0] sm:$0xff]
        %v2102 = vld [vmem:[%s211 + $0x19c8] sm:$0xff]
        %v2103 = vld [vmem:[%s211 + $0x19d0] sm:$0xff]
        %v2104 = vld [vmem:[%s211 + $0x19d8] sm:$0xff]
        %v2105 = vld [vmem:[%s211 + $0x19e0] sm:$0xff]
        %v2106 = vld [vmem:[%s211 + $0x19e8] sm:$0xff]
        %v2107 = vld [vmem:[%s211 + $0x19f0] sm:$0xff]
        %v2108 = vld [vmem:[%s211 + $0x19f8] sm:$0xff]
        %v2109 = vld [vmem:[%s211 + $0x1a00] sm:$0xff]
        %v2110 = vld [vmem:[%s211 + $0x1a08] sm:$0xff]
        %v2111 = vld [vmem:[%s211 + $0x1a10] sm:$0xff]
        %v2112 = vld [vmem:[%s211 + $0x1a18] sm:$0xff]
        %v2113 = vld [vmem:[%s211 + $0x1a20] sm:$0xff]
        %v2114 = vld [vmem:[%s211 + $0x1a28] sm:$0xff]
        %v2115 = vld [vmem:[%s211 + $0x1a30] sm:$0xff]
        %v2116 = vld [vmem:[%s211 + $0x1a38] sm:$0xff]
        %v2117 = vld [vmem:[%s211 + $0x1a40] sm:$0xff]
        %v2118 = vld [vmem:[%s211 + $0x1a48] sm:$0xff]
        %v2119 = vld [vmem:[%s211 + $0x1a50] sm:$0xff]
        %v2120 = vld [vmem:[%s211 + $0x1a58] sm:$0xff]
        %v2121 = vld [vmem:[%s211 + $0x1a60] sm:$0xff]
        %v2122 = vld [vmem:[%s211 + $0x1a68] sm:$0xff]
        %v2123 = vld [vmem:[%s211 + $0x1a70] sm:$0xff]
        %v2124 = vld [vmem:[%s211 + $0x1a78] sm:$0xff]
        %v2125 = vld [vmem:[%s211 + $0x1a80] sm:$0xff]
        %v2126 = vld [vmem:[%s211 + $0x1a88] sm:$0xff]
        %v2127 = vld [vmem:[%s211 + $0x1a90] sm:$0xff]
        %v2128 = vld [vmem:[%s211 + $0x1a98] sm:$0xff]
        %v2129 = vld [vmem:[%s211 + $0x1aa0] sm:$0xff]
        %v2130 = vld [vmem:[%s211 + $0x1aa8] sm:$0xff]
        %v2131 = vld [vmem:[%s211 + $0x1ab0] sm:$0xff]
        %v2132 = vld [vmem:[%s211 + $0x1ab8] sm:$0xff]
        %v2133 = vld [vmem:[%s211 + $0x1ac0] sm:$0xff]
        %v2134 = vld [vmem:[%s211 + $0x1ac8] sm:$0xff]
        %v2135 = vld [vmem:[%s211 + $0x1ad0] sm:$0xff]
        %v2136 = vld [vmem:[%s211 + $0x1ad8] sm:$0xff]
        %v2137 = vld [vmem:[%s211 + $0x1ae0] sm:$0xff]
        %v2138 = vld [vmem:[%s211 + $0x1ae8] sm:$0xff]
        %v2139 = vld [vmem:[%s211 + $0x1af0] sm:$0xff]
        %v2140 = vld [vmem:[%s211 + $0x1af8] sm:$0xff]
        %v2141 = vld [vmem:[%s211 + $0x1b00] sm:$0xff]
        %v2142 = vld [vmem:[%s211 + $0x1b08] sm:$0xff]
        %v2143 = vld [vmem:[%s211 + $0x1b10] sm:$0xff]
        %v2144 = vld [vmem:[%s211 + $0x1b18] sm:$0xff]
        %v2145 = vld [vmem:[%s211 + $0x1b20] sm:$0xff]
        %v2146 = vld [vmem:[%s211 + $0x1b28] sm:$0xff]
        %v2147 = vld [vmem:[%s211 + $0x1b30] sm:$0xff]
        %v2148 = vld [vmem:[%s211 + $0x1b38] sm:$0xff]
        %v2149 = vld [vmem:[%s211 + $0x1b40] sm:$0xff]
        %v2150 = vld [vmem:[%s211 + $0x1b48] sm:$0xff]
        %v2151 = vld [vmem:[%s211 + $0x1b50] sm:$0xff]
        %v2152 = vld [vmem:[%s211 + $0x1b58] sm:$0xff]
        %v2153 = vld [vmem:[%s211 + $0x1b60] sm:$0xff]
        %v2154 = vld [vmem:[%s211 + $0x1b68] sm:$0xff]
        %v2155 = vld [vmem:[%s211 + $0x1b70] sm:$0xff]
        %v2156 = vld [vmem:[%s211 + $0x1b78] sm:$0xff]
        %v2157 = vld [vmem:[%s211 + $0x1b80] sm:$0xff]
        %v2158 = vld [vmem:[%s211 + $0x1b88] sm:$0xff]
        %v2159 = vld [vmem:[%s211 + $0x1b90] sm:$0xff]
        %v2160 = vld [vmem:[%s211 + $0x1b98] sm:$0xff]
        %v2161 = vld [vmem:[%s211 + $0x1ba0] sm:$0xff]
        %v2162 = vld [vmem:[%s211 + $0x1ba8] sm:$0xff]
        %v2163 = vld [vmem:[%s211 + $0x1bb0] sm:$0xff]
        %v2164 = vld [vmem:[%s211 + $0x1bb8] sm:$0xff]
        %v2165 = vld [vmem:[%s211 + $0x1bc0] sm:$0xff]
        %v2166 = vld [vmem:[%s211 + $0x1bc8] sm:$0xff]
        %v2167 = vld [vmem:[%s211 + $0x1bd0] sm:$0xff]
        %v2168 = vld [vmem:[%s211 + $0x1bd8] sm:$0xff]
        %v2169 = vld [vmem:[%s211 + $0x1be0] sm:$0xff]
        %v2170 = vld [vmem:[%s211 + $0x1be8] sm:$0xff]
        %v2171 = vld [vmem:[%s211 + $0x1bf0] sm:$0xff]
        %v2172 = vld [vmem:[%s211 + $0x1bf8] sm:$0xff]
        %v2173 = vld [vmem:[%s211 + $0x1c00] sm:$0xff]
        %v2174 = vld [vmem:[%s211 + $0x1c08] sm:$0xff]
        %v2175 = vld [vmem:[%s211 + $0x1c10] sm:$0xff]
        %v2176 = vld [vmem:[%s211 + $0x1c18] sm:$0xff]
        %v2177 = vld [vmem:[%s211 + $0x1c20] sm:$0xff]
        %v2178 = vld [vmem:[%s211 + $0x1c28] sm:$0xff]
        %v2179 = vld [vmem:[%s211 + $0x1c30] sm:$0xff]
        %v2180 = vld [vmem:[%s211 + $0x1c38] sm:$0xff]
        %v2181 = vld [vmem:[%s211 + $0x1c40] sm:$0xff]
        %v2182 = vld [vmem:[%s211 + $0x1c48] sm:$0xff]
        %v2183 = vld [vmem:[%s211 + $0x1c50] sm:$0xff]
        %v2184 = vld [vmem:[%s211 + $0x1c58] sm:$0xff]
        %v2185 = vld [vmem:[%s211 + $0x1c60] sm:$0xff]
        %v2186 = vld [vmem:[%s211 + $0x1c68] sm:$0xff]
        %v2187 = vld [vmem:[%s211 + $0x1c70] sm:$0xff]
        %v2188 = vld [vmem:[%s211 + $0x1c78] sm:$0xff]
        %v2189 = vld [vmem:[%s211 + $0x1c80] sm:$0xff]
        %v2190 = vld [vmem:[%s211 + $0x1c88] sm:$0xff]
        %v2191 = vld [vmem:[%s211 + $0x1c90] sm:$0xff]
        %v2192 = vld [vmem:[%s211 + $0x1c98] sm:$0xff]
        %v2193 = vld [vmem:[%s211 + $0x1ca0] sm:$0xff]
        %v2194 = vld [vmem:[%s211 + $0x1ca8] sm:$0xff]
        %v2195 = vld [vmem:[%s211 + $0x1cb0] sm:$0xff]
        %v2196 = vld [vmem:[%s211 + $0x1cb8] sm:$0xff]
        %v2197 = vld [vmem:[%s211 + $0x1cc0] sm:$0xff]
        %v2198 = vld [vmem:[%s211 + $0x1cc8] sm:$0xff]
        %v2199 = vld [vmem:[%s211 + $0x1cd0] sm:$0xff]
        %v2200 = vld [vmem:[%s211 + $0x1cd8] sm:$0xff]
        %v2201 = vld [vmem:[%s211 + $0x1ce0] sm:$0xff]
        %v2202 = vld [vmem:[%s211 + $0x1ce8] sm:$0xff]
        %v2203 = vld [vmem:[%s211 + $0x1cf0] sm:$0xff]
        %v2204 = vld [vmem:[%s211 + $0x1cf8] sm:$0xff]
        %v2205 = vld [vmem:[%s211 + $0x1d00] sm:$0xff]
        %v2206 = vld [vmem:[%s211 + $0x1d08] sm:$0xff]
        %v2207 = vld [vmem:[%s211 + $0x1d10] sm:$0xff]
        %v2208 = vld [vmem:[%s211 + $0x1d18] sm:$0xff]
        %v2209 = vld [vmem:[%s211 + $0x1d20] sm:$0xff]
        %v2210 = vld [vmem:[%s211 + $0x1d28] sm:$0xff]
        %v2211 = vld [vmem:[%s211 + $0x1d30] sm:$0xff]
        %v2212 = vld [vmem:[%s211 + $0x1d38] sm:$0xff]
        %v2213 = vld [vmem:[%s211 + $0x1d40] sm:$0xff]
        %v2214 = vld [vmem:[%s211 + $0x1d48] sm:$0xff]
        %v2215 = vld [vmem:[%s211 + $0x1d50] sm:$0xff]
        %v2216 = vld [vmem:[%s211 + $0x1d58] sm:$0xff]
        %v2217 = vld [vmem:[%s211 + $0x1d60] sm:$0xff]
        %v2218 = vld [vmem:[%s211 + $0x1d68] sm:$0xff]
        %v2219 = vld [vmem:[%s211 + $0x1d70] sm:$0xff]
        %v2220 = vld [vmem:[%s211 + $0x1d78] sm:$0xff]
        %v2221 = vld [vmem:[%s211 + $0x1d80] sm:$0xff]
        %v2222 = vld [vmem:[%s211 + $0x1d88] sm:$0xff]
        %v2223 = vld [vmem:[%s211 + $0x1d90] sm:$0xff]
        %v2224 = vld [vmem:[%s211 + $0x1d98] sm:$0xff]
        %v2225 = vld [vmem:[%s211 + $0x1da0] sm:$0xff]
        %v2226 = vld [vmem:[%s211 + $0x1da8] sm:$0xff]
        %v2227 = vld [vmem:[%s211 + $0x1db0] sm:$0xff]
        %v2228 = vld [vmem:[%s211 + $0x1db8] sm:$0xff]
        %v2229 = vld [vmem:[%s211 + $0x1dc0] sm:$0xff]
        %v2230 = vld [vmem:[%s211 + $0x1dc8] sm:$0xff]
        %v2231 = vld [vmem:[%s211 + $0x1dd0] sm:$0xff]
        %v2232 = vld [vmem:[%s211 + $0x1dd8] sm:$0xff]
        %v2233 = vld [vmem:[%s211 + $0x1de0] sm:$0xff]
        %v2234 = vld [vmem:[%s211 + $0x1de8] sm:$0xff]
        %v2235 = vld [vmem:[%s211 + $0x1df0] sm:$0xff]
        %v2236 = vld [vmem:[%s211 + $0x1df8] sm:$0xff]
        %v2237 = vld [vmem:[%s211 + $0x1e00] sm:$0xff]
        %v2238 = vld [vmem:[%s211 + $0x1e08] sm:$0xff]
        %v2239 = vld [vmem:[%s211 + $0x1e10] sm:$0xff]
        %v2240 = vld [vmem:[%s211 + $0x1e18] sm:$0xff]
        %v2241 = vld [vmem:[%s211 + $0x1e20] sm:$0xff]
        %v2242 = vld [vmem:[%s211 + $0x1e28] sm:$0xff]
        %v2243 = vld [vmem:[%s211 + $0x1e30] sm:$0xff]
        %v2244 = vld [vmem:[%s211 + $0x1e38] sm:$0xff]
        %v2245 = vld [vmem:[%s211 + $0x1e40] sm:$0xff]
        %v2246 = vld [vmem:[%s211 + $0x1e48] sm:$0xff]
        %v2247 = vld [vmem:[%s211 + $0x1e50] sm:$0xff]
        %v2248 = vld [vmem:[%s211 + $0x1e58] sm:$0xff]
        %v2249 = vld [vmem:[%s211 + $0x1e60] sm:$0xff]
        %v2250 = vld [vmem:[%s211 + $0x1e68] sm:$0xff]
        %v2251 = vld [vmem:[%s211 + $0x1e70] sm:$0xff]
        %v2252 = vld [vmem:[%s211 + $0x1e78] sm:$0xff]
        %v2253 = vld [vmem:[%s211 + $0x1e80] sm:$0xff]
        %v2254 = vld [vmem:[%s211 + $0x1e88] sm:$0xff]
        %v2255 = vld [vmem:[%s211 + $0x1e90] sm:$0xff]
        %v2256 = vld [vmem:[%s211 + $0x1e98] sm:$0xff]
        %v2257 = vld [vmem:[%s211 + $0x1ea0] sm:$0xff]
        %v2258 = vld [vmem:[%s211 + $0x1ea8] sm:$0xff]
        %v2259 = vld [vmem:[%s211 + $0x1eb0] sm:$0xff]
        %v2260 = vld [vmem:[%s211 + $0x1eb8] sm:$0xff]
        %v2261 = vld [vmem:[%s211 + $0x1ec0] sm:$0xff]
        %v2262 = vld [vmem:[%s211 + $0x1ec8] sm:$0xff]
        %v2263 = vld [vmem:[%s211 + $0x1ed0] sm:$0xff]
        %v2264 = vld [vmem:[%s211 + $0x1ed8] sm:$0xff]
        %v2265 = vld [vmem:[%s211 + $0x1ee0] sm:$0xff]
        %v2266 = vld [vmem:[%s211 + $0x1ee8] sm:$0xff]
        %v2267 = vld [vmem:[%s211 + $0x1ef0] sm:$0xff]
        %v2268 = vld [vmem:[%s211 + $0x1ef8] sm:$0xff]
        %v2269 = vld [vmem:[%s211 + $0x1f00] sm:$0xff]
        %v2270 = vld [vmem:[%s211 + $0x1f08] sm:$0xff]
        %v2271 = vld [vmem:[%s211 + $0x1f10] sm:$0xff]
        %v2272 = vld [vmem:[%s211 + $0x1f18] sm:$0xff]
        %v2273 = vld [vmem:[%s211 + $0x1f20] sm:$0xff]
        %v2274 = vld [vmem:[%s211 + $0x1f28] sm:$0xff]
        %v2275 = vld [vmem:[%s211 + $0x1f30] sm:$0xff]
        %v2276 = vld [vmem:[%s211 + $0x1f38] sm:$0xff]
        %v2277 = vld [vmem:[%s211 + $0x1f40] sm:$0xff]
        %v2278 = vld [vmem:[%s211 + $0x1f48] sm:$0xff]
        %v2279 = vld [vmem:[%s211 + $0x1f50] sm:$0xff]
        %v2280 = vld [vmem:[%s211 + $0x1f58] sm:$0xff]
        %v2281 = vld [vmem:[%s211 + $0x1f60] sm:$0xff]
        %v2282 = vld [vmem:[%s211 + $0x1f68] sm:$0xff]
        %v2283 = vld [vmem:[%s211 + $0x1f70] sm:$0xff]
        %v2284 = vld [vmem:[%s211 + $0x1f78] sm:$0xff]
        %v2285 = vld [vmem:[%s211 + $0x1f80] sm:$0xff]
        %v2286 = vld [vmem:[%s211 + $0x1f88] sm:$0xff]
        %v2287 = vld [vmem:[%s211 + $0x1f90] sm:$0xff]
        %v2288 = vld [vmem:[%s211 + $0x1f98] sm:$0xff]
        %v2289 = vld [vmem:[%s211 + $0x1fa0] sm:$0xff]
        %v2290 = vld [vmem:[%s211 + $0x1fa8] sm:$0xff]
        %v2291 = vld [vmem:[%s211 + $0x1fb0] sm:$0xff]
        %v2292 = vld [vmem:[%s211 + $0x1fb8] sm:$0xff]
        %v2293 = vld [vmem:[%s211 + $0x1fc0] sm:$0xff]
        %v2294 = vld [vmem:[%s211 + $0x1fc8] sm:$0xff]
        %v2295 = vld [vmem:[%s211 + $0x1fd0] sm:$0xff]
        %v2296 = vld [vmem:[%s211 + $0x1fd8] sm:$0xff]
        %v2297 = vld [vmem:[%s211 + $0x1fe0] sm:$0xff]
        %v2298 = vld [vmem:[%s211 + $0x1fe8] sm:$0xff]
        %v2299 = vld [vmem:[%s211 + $0x1ff0] sm:$0xff]
        %v2300 = vld [vmem:[%s211 + $0x1ff8] sm:$0xff]
        %v2301 = vadd.f32 %v253, %v1277
        %v2302 = vadd.f32 %v254, %v1278
        %v2303 = vadd.f32 %v255, %v1279
        %v2304 = vadd.f32 %v256, %v1280
        %v2305 = vadd.f32 %v257, %v1281
        %v2306 = vadd.f32 %v258, %v1282
        %v2307 = vadd.f32 %v259, %v1283
        %v2308 = vadd.f32 %v260, %v1284
        %v2309 = vadd.f32 %v261, %v1285
        %v2310 = vadd.f32 %v262, %v1286
        %v2311 = vadd.f32 %v263, %v1287
        %v2312 = vadd.f32 %v264, %v1288
        %v2313 = vadd.f32 %v265, %v1289
        %v2314 = vadd.f32 %v266, %v1290
        %v2315 = vadd.f32 %v267, %v1291
        %v2316 = vadd.f32 %v268, %v1292
        %v2317 = vadd.f32 %v269, %v1293
        %v2318 = vadd.f32 %v270, %v1294
        %v2319 = vadd.f32 %v271, %v1295
        %v2320 = vadd.f32 %v272, %v1296
        %v2321 = vadd.f32 %v273, %v1297
        %v2322 = vadd.f32 %v274, %v1298
        %v2323 = vadd.f32 %v275, %v1299
        %v2324 = vadd.f32 %v276, %v1300
        %v2325 = vadd.f32 %v277, %v1301
        %v2326 = vadd.f32 %v278, %v1302
        %v2327 = vadd.f32 %v279, %v1303
        %v2328 = vadd.f32 %v280, %v1304
        %v2329 = vadd.f32 %v281, %v1305
        %v2330 = vadd.f32 %v282, %v1306
        %v2331 = vadd.f32 %v283, %v1307
        %v2332 = vadd.f32 %v284, %v1308
        %v2333 = vadd.f32 %v285, %v1309
        %v2334 = vadd.f32 %v286, %v1310
        %v2335 = vadd.f32 %v287, %v1311
        %v2336 = vadd.f32 %v288, %v1312
        %v2337 = vadd.f32 %v289, %v1313
        %v2338 = vadd.f32 %v290, %v1314
        %v2339 = vadd.f32 %v291, %v1315
        %v2340 = vadd.f32 %v292, %v1316
        %v2341 = vadd.f32 %v293, %v1317
        %v2342 = vadd.f32 %v294, %v1318
        %v2343 = vadd.f32 %v295, %v1319
        %v2344 = vadd.f32 %v296, %v1320
        %v2345 = vadd.f32 %v297, %v1321
        %v2346 = vadd.f32 %v298, %v1322
        %v2347 = vadd.f32 %v299, %v1323
        %v2348 = vadd.f32 %v300, %v1324
        %v2349 = vadd.f32 %v301, %v1325
        %v2350 = vadd.f32 %v302, %v1326
        %v2351 = vadd.f32 %v303, %v1327
        %v2352 = vadd.f32 %v304, %v1328
        %v2353 = vadd.f32 %v305, %v1329
        %v2354 = vadd.f32 %v306, %v1330
        %v2355 = vadd.f32 %v307, %v1331
        %v2356 = vadd.f32 %v308, %v1332
        %v2357 = vadd.f32 %v309, %v1333
        %v2358 = vadd.f32 %v310, %v1334
        %v2359 = vadd.f32 %v311, %v1335
        %v2360 = vadd.f32 %v312, %v1336
        %v2361 = vadd.f32 %v313, %v1337
        %v2362 = vadd.f32 %v314, %v1338
        %v2363 = vadd.f32 %v315, %v1339
        %v2364 = vadd.f32 %v316, %v1340
        %v2365 = vadd.f32 %v317, %v1341
        %v2366 = vadd.f32 %v318, %v1342
        %v2367 = vadd.f32 %v319, %v1343
        %v2368 = vadd.f32 %v320, %v1344
        %v2369 = vadd.f32 %v321, %v1345
        %v2370 = vadd.f32 %v322, %v1346
        %v2371 = vadd.f32 %v323, %v1347
        %v2372 = vadd.f32 %v324, %v1348
        %v2373 = vadd.f32 %v325, %v1349
        %v2374 = vadd.f32 %v326, %v1350
        %v2375 = vadd.f32 %v327, %v1351
        %v2376 = vadd.f32 %v328, %v1352
        %v2377 = vadd.f32 %v329, %v1353
        %v2378 = vadd.f32 %v330, %v1354
        %v2379 = vadd.f32 %v331, %v1355
        %v2380 = vadd.f32 %v332, %v1356
        %v2381 = vadd.f32 %v333, %v1357
        %v2382 = vadd.f32 %v334, %v1358
        %v2383 = vadd.f32 %v335, %v1359
        %v2384 = vadd.f32 %v336, %v1360
        %v2385 = vadd.f32 %v337, %v1361
        %v2386 = vadd.f32 %v338, %v1362
        %v2387 = vadd.f32 %v339, %v1363
        %v2388 = vadd.f32 %v340, %v1364
        %v2389 = vadd.f32 %v341, %v1365
        %v2390 = vadd.f32 %v342, %v1366
        %v2391 = vadd.f32 %v343, %v1367
        %v2392 = vadd.f32 %v344, %v1368
        %v2393 = vadd.f32 %v345, %v1369
        %v2394 = vadd.f32 %v346, %v1370
        %v2395 = vadd.f32 %v347, %v1371
        %v2396 = vadd.f32 %v348, %v1372
        %v2397 = vadd.f32 %v349, %v1373
        %v2398 = vadd.f32 %v350, %v1374
        %v2399 = vadd.f32 %v351, %v1375
        %v2400 = vadd.f32 %v352, %v1376
        %v2401 = vadd.f32 %v353, %v1377
        %v2402 = vadd.f32 %v354, %v1378
        %v2403 = vadd.f32 %v355, %v1379
        %v2404 = vadd.f32 %v356, %v1380
        %v2405 = vadd.f32 %v357, %v1381
        %v2406 = vadd.f32 %v358, %v1382
        %v2407 = vadd.f32 %v359, %v1383
        %v2408 = vadd.f32 %v360, %v1384
        %v2409 = vadd.f32 %v361, %v1385
        %v2410 = vadd.f32 %v362, %v1386
        %v2411 = vadd.f32 %v363, %v1387
        %v2412 = vadd.f32 %v364, %v1388
        %v2413 = vadd.f32 %v365, %v1389
        %v2414 = vadd.f32 %v366, %v1390
        %v2415 = vadd.f32 %v367, %v1391
        %v2416 = vadd.f32 %v368, %v1392
        %v2417 = vadd.f32 %v369, %v1393
        %v2418 = vadd.f32 %v370, %v1394
        %v2419 = vadd.f32 %v371, %v1395
        %v2420 = vadd.f32 %v372, %v1396
        %v2421 = vadd.f32 %v373, %v1397
        %v2422 = vadd.f32 %v374, %v1398
        %v2423 = vadd.f32 %v375, %v1399
        %v2424 = vadd.f32 %v376, %v1400
        %v2425 = vadd.f32 %v377, %v1401
        %v2426 = vadd.f32 %v378, %v1402
        %v2427 = vadd.f32 %v379, %v1403
        %v2428 = vadd.f32 %v380, %v1404
        %v2429 = vadd.f32 %v381, %v1405
        %v2430 = vadd.f32 %v382, %v1406
        %v2431 = vadd.f32 %v383, %v1407
        %v2432 = vadd.f32 %v384, %v1408
        %v2433 = vadd.f32 %v385, %v1409
        %v2434 = vadd.f32 %v386, %v1410
        %v2435 = vadd.f32 %v387, %v1411
        %v2436 = vadd.f32 %v388, %v1412
        %v2437 = vadd.f32 %v389, %v1413
        %v2438 = vadd.f32 %v390, %v1414
        %v2439 = vadd.f32 %v391, %v1415
        %v2440 = vadd.f32 %v392, %v1416
        %v2441 = vadd.f32 %v393, %v1417
        %v2442 = vadd.f32 %v394, %v1418
        %v2443 = vadd.f32 %v395, %v1419
        %v2444 = vadd.f32 %v396, %v1420
        %v2445 = vadd.f32 %v397, %v1421
        %v2446 = vadd.f32 %v398, %v1422
        %v2447 = vadd.f32 %v399, %v1423
        %v2448 = vadd.f32 %v400, %v1424
        %v2449 = vadd.f32 %v401, %v1425
        %v2450 = vadd.f32 %v402, %v1426
        %v2451 = vadd.f32 %v403, %v1427
        %v2452 = vadd.f32 %v404, %v1428
        %v2453 = vadd.f32 %v405, %v1429
        %v2454 = vadd.f32 %v406, %v1430
        %v2455 = vadd.f32 %v407, %v1431
        %v2456 = vadd.f32 %v408, %v1432
        %v2457 = vadd.f32 %v409, %v1433
        %v2458 = vadd.f32 %v410, %v1434
        %v2459 = vadd.f32 %v411, %v1435
        %v2460 = vadd.f32 %v412, %v1436
        %v2461 = vadd.f32 %v413, %v1437
        %v2462 = vadd.f32 %v414, %v1438
        %v2463 = vadd.f32 %v415, %v1439
        %v2464 = vadd.f32 %v416, %v1440
        %v2465 = vadd.f32 %v417, %v1441
        %v2466 = vadd.f32 %v418, %v1442
        %v2467 = vadd.f32 %v419, %v1443
        %v2468 = vadd.f32 %v420, %v1444
        %v2469 = vadd.f32 %v421, %v1445
        %v2470 = vadd.f32 %v422, %v1446
        %v2471 = vadd.f32 %v423, %v1447
        %v2472 = vadd.f32 %v424, %v1448
        %v2473 = vadd.f32 %v425, %v1449
        %v2474 = vadd.f32 %v426, %v1450
        %v2475 = vadd.f32 %v427, %v1451
        %v2476 = vadd.f32 %v428, %v1452
        %v2477 = vadd.f32 %v429, %v1453
        %v2478 = vadd.f32 %v430, %v1454
        %v2479 = vadd.f32 %v431, %v1455
        %v2480 = vadd.f32 %v432, %v1456
        %v2481 = vadd.f32 %v433, %v1457
        %v2482 = vadd.f32 %v434, %v1458
        %v2483 = vadd.f32 %v435, %v1459
        %v2484 = vadd.f32 %v436, %v1460
        %v2485 = vadd.f32 %v437, %v1461
        %v2486 = vadd.f32 %v438, %v1462
        %v2487 = vadd.f32 %v439, %v1463
        %v2488 = vadd.f32 %v440, %v1464
        %v2489 = vadd.f32 %v441, %v1465
        %v2490 = vadd.f32 %v442, %v1466
        %v2491 = vadd.f32 %v443, %v1467
        %v2492 = vadd.f32 %v444, %v1468
        %v2493 = vadd.f32 %v445, %v1469
        %v2494 = vadd.f32 %v446, %v1470
        %v2495 = vadd.f32 %v447, %v1471
        %v2496 = vadd.f32 %v448, %v1472
        %v2497 = vadd.f32 %v449, %v1473
        %v2498 = vadd.f32 %v450, %v1474
        %v2499 = vadd.f32 %v451, %v1475
        %v2500 = vadd.f32 %v452, %v1476
        %v2501 = vadd.f32 %v453, %v1477
        %v2502 = vadd.f32 %v454, %v1478
        %v2503 = vadd.f32 %v455, %v1479
        %v2504 = vadd.f32 %v456, %v1480
        %v2505 = vadd.f32 %v457, %v1481
        %v2506 = vadd.f32 %v458, %v1482
        %v2507 = vadd.f32 %v459, %v1483
        %v2508 = vadd.f32 %v460, %v1484
        %v2509 = vadd.f32 %v461, %v1485
        %v2510 = vadd.f32 %v462, %v1486
        %v2511 = vadd.f32 %v463, %v1487
        %v2512 = vadd.f32 %v464, %v1488
        %v2513 = vadd.f32 %v465, %v1489
        %v2514 = vadd.f32 %v466, %v1490
        %v2515 = vadd.f32 %v467, %v1491
        %v2516 = vadd.f32 %v468, %v1492
        %v2517 = vadd.f32 %v469, %v1493
        %v2518 = vadd.f32 %v470, %v1494
        %v2519 = vadd.f32 %v471, %v1495
        %v2520 = vadd.f32 %v472, %v1496
        %v2521 = vadd.f32 %v473, %v1497
        %v2522 = vadd.f32 %v474, %v1498
        %v2523 = vadd.f32 %v475, %v1499
        %v2524 = vadd.f32 %v476, %v1500
        %v2525 = vadd.f32 %v477, %v1501
        %v2526 = vadd.f32 %v478, %v1502
        %v2527 = vadd.f32 %v479, %v1503
        %v2528 = vadd.f32 %v480, %v1504
        %v2529 = vadd.f32 %v481, %v1505
        %v2530 = vadd.f32 %v482, %v1506
        %v2531 = vadd.f32 %v483, %v1507
        %v2532 = vadd.f32 %v484, %v1508
        %v2533 = vadd.f32 %v485, %v1509
        %v2534 = vadd.f32 %v486, %v1510
        %v2535 = vadd.f32 %v487, %v1511
        %v2536 = vadd.f32 %v488, %v1512
        %v2537 = vadd.f32 %v489, %v1513
        %v2538 = vadd.f32 %v490, %v1514
        %v2539 = vadd.f32 %v491, %v1515
        %v2540 = vadd.f32 %v492, %v1516
        %v2541 = vadd.f32 %v493, %v1517
        %v2542 = vadd.f32 %v494, %v1518
        %v2543 = vadd.f32 %v495, %v1519
        %v2544 = vadd.f32 %v496, %v1520
        %v2545 = vadd.f32 %v497, %v1521
        %v2546 = vadd.f32 %v498, %v1522
        %v2547 = vadd.f32 %v499, %v1523
        %v2548 = vadd.f32 %v500, %v1524
        %v2549 = vadd.f32 %v501, %v1525
        %v2550 = vadd.f32 %v502, %v1526
        %v2551 = vadd.f32 %v503, %v1527
        %v2552 = vadd.f32 %v504, %v1528
        %v2553 = vadd.f32 %v505, %v1529
        %v2554 = vadd.f32 %v506, %v1530
        %v2555 = vadd.f32 %v507, %v1531
        %v2556 = vadd.f32 %v508, %v1532
        %v2557 = vadd.f32 %v509, %v1533
        %v2558 = vadd.f32 %v510, %v1534
        %v2559 = vadd.f32 %v511, %v1535
        %v2560 = vadd.f32 %v512, %v1536
        %v2561 = vadd.f32 %v513, %v1537
        %v2562 = vadd.f32 %v514, %v1538
        %v2563 = vadd.f32 %v515, %v1539
        %v2564 = vadd.f32 %v516, %v1540
        %v2565 = vadd.f32 %v517, %v1541
        %v2566 = vadd.f32 %v518, %v1542
        %v2567 = vadd.f32 %v519, %v1543
        %v2568 = vadd.f32 %v520, %v1544
        %v2569 = vadd.f32 %v521, %v1545
        %v2570 = vadd.f32 %v522, %v1546
        %v2571 = vadd.f32 %v523, %v1547
        %v2572 = vadd.f32 %v524, %v1548
        %v2573 = vadd.f32 %v525, %v1549
        %v2574 = vadd.f32 %v526, %v1550
        %v2575 = vadd.f32 %v527, %v1551
        %v2576 = vadd.f32 %v528, %v1552
        %v2577 = vadd.f32 %v529, %v1553
        %v2578 = vadd.f32 %v530, %v1554
        %v2579 = vadd.f32 %v531, %v1555
        %v2580 = vadd.f32 %v532, %v1556
        %v2581 = vadd.f32 %v533, %v1557
        %v2582 = vadd.f32 %v534, %v1558
        %v2583 = vadd.f32 %v535, %v1559
        %v2584 = vadd.f32 %v536, %v1560
        %v2585 = vadd.f32 %v537, %v1561
        %v2586 = vadd.f32 %v538, %v1562
        %v2587 = vadd.f32 %v539, %v1563
        %v2588 = vadd.f32 %v540, %v1564
        %v2589 = vadd.f32 %v541, %v1565
        %v2590 = vadd.f32 %v542, %v1566
        %v2591 = vadd.f32 %v543, %v1567
        %v2592 = vadd.f32 %v544, %v1568
        %v2593 = vadd.f32 %v545, %v1569
        %v2594 = vadd.f32 %v546, %v1570
        %v2595 = vadd.f32 %v547, %v1571
        %v2596 = vadd.f32 %v548, %v1572
        %v2597 = vadd.f32 %v549, %v1573
        %v2598 = vadd.f32 %v550, %v1574
        %v2599 = vadd.f32 %v551, %v1575
        %v2600 = vadd.f32 %v552, %v1576
        %v2601 = vadd.f32 %v553, %v1577
        %v2602 = vadd.f32 %v554, %v1578
        %v2603 = vadd.f32 %v555, %v1579
        %v2604 = vadd.f32 %v556, %v1580
        %v2605 = vadd.f32 %v557, %v1581
        %v2606 = vadd.f32 %v558, %v1582
        %v2607 = vadd.f32 %v559, %v1583
        %v2608 = vadd.f32 %v560, %v1584
        %v2609 = vadd.f32 %v561, %v1585
        %v2610 = vadd.f32 %v562, %v1586
        %v2611 = vadd.f32 %v563, %v1587
        %v2612 = vadd.f32 %v564, %v1588
        %v2613 = vadd.f32 %v565, %v1589
        %v2614 = vadd.f32 %v566, %v1590
        %v2615 = vadd.f32 %v567, %v1591
        %v2616 = vadd.f32 %v568, %v1592
        %v2617 = vadd.f32 %v569, %v1593
        %v2618 = vadd.f32 %v570, %v1594
        %v2619 = vadd.f32 %v571, %v1595
        %v2620 = vadd.f32 %v572, %v1596
        %v2621 = vadd.f32 %v573, %v1597
        %v2622 = vadd.f32 %v574, %v1598
        %v2623 = vadd.f32 %v575, %v1599
        %v2624 = vadd.f32 %v576, %v1600
        %v2625 = vadd.f32 %v577, %v1601
        %v2626 = vadd.f32 %v578, %v1602
        %v2627 = vadd.f32 %v579, %v1603
        %v2628 = vadd.f32 %v580, %v1604
        %v2629 = vadd.f32 %v581, %v1605
        %v2630 = vadd.f32 %v582, %v1606
        %v2631 = vadd.f32 %v583, %v1607
        %v2632 = vadd.f32 %v584, %v1608
        %v2633 = vadd.f32 %v585, %v1609
        %v2634 = vadd.f32 %v586, %v1610
        %v2635 = vadd.f32 %v587, %v1611
        %v2636 = vadd.f32 %v588, %v1612
        %v2637 = vadd.f32 %v589, %v1613
        %v2638 = vadd.f32 %v590, %v1614
        %v2639 = vadd.f32 %v591, %v1615
        %v2640 = vadd.f32 %v592, %v1616
        %v2641 = vadd.f32 %v593, %v1617
        %v2642 = vadd.f32 %v594, %v1618
        %v2643 = vadd.f32 %v595, %v1619
        %v2644 = vadd.f32 %v596, %v1620
        %v2645 = vadd.f32 %v597, %v1621
        %v2646 = vadd.f32 %v598, %v1622
        %v2647 = vadd.f32 %v599, %v1623
        %v2648 = vadd.f32 %v600, %v1624
        %v2649 = vadd.f32 %v601, %v1625
        %v2650 = vadd.f32 %v602, %v1626
        %v2651 = vadd.f32 %v603, %v1627
        %v2652 = vadd.f32 %v604, %v1628
        %v2653 = vadd.f32 %v605, %v1629
        %v2654 = vadd.f32 %v606, %v1630
        %v2655 = vadd.f32 %v607, %v1631
        %v2656 = vadd.f32 %v608, %v1632
        %v2657 = vadd.f32 %v609, %v1633
        %v2658 = vadd.f32 %v610, %v1634
        %v2659 = vadd.f32 %v611, %v1635
        %v2660 = vadd.f32 %v612, %v1636
        %v2661 = vadd.f32 %v613, %v1637
        %v2662 = vadd.f32 %v614, %v1638
        %v2663 = vadd.f32 %v615, %v1639
        %v2664 = vadd.f32 %v616, %v1640
        %v2665 = vadd.f32 %v617, %v1641
        %v2666 = vadd.f32 %v618, %v1642
        %v2667 = vadd.f32 %v619, %v1643
        %v2668 = vadd.f32 %v620, %v1644
        %v2669 = vadd.f32 %v621, %v1645
        %v2670 = vadd.f32 %v622, %v1646
        %v2671 = vadd.f32 %v623, %v1647
        %v2672 = vadd.f32 %v624, %v1648
        %v2673 = vadd.f32 %v625, %v1649
        %v2674 = vadd.f32 %v626, %v1650
        %v2675 = vadd.f32 %v627, %v1651
        %v2676 = vadd.f32 %v628, %v1652
        %v2677 = vadd.f32 %v629, %v1653
        %v2678 = vadd.f32 %v630, %v1654
        %v2679 = vadd.f32 %v631, %v1655
        %v2680 = vadd.f32 %v632, %v1656
        %v2681 = vadd.f32 %v633, %v1657
        %v2682 = vadd.f32 %v634, %v1658
        %v2683 = vadd.f32 %v635, %v1659
        %v2684 = vadd.f32 %v636, %v1660
        %v2685 = vadd.f32 %v637, %v1661
        %v2686 = vadd.f32 %v638, %v1662
        %v2687 = vadd.f32 %v639, %v1663
        %v2688 = vadd.f32 %v640, %v1664
        %v2689 = vadd.f32 %v641, %v1665
        %v2690 = vadd.f32 %v642, %v1666
        %v2691 = vadd.f32 %v643, %v1667
        %v2692 = vadd.f32 %v644, %v1668
        %v2693 = vadd.f32 %v645, %v1669
        %v2694 = vadd.f32 %v646, %v1670
        %v2695 = vadd.f32 %v647, %v1671
        %v2696 = vadd.f32 %v648, %v1672
        %v2697 = vadd.f32 %v649, %v1673
        %v2698 = vadd.f32 %v650, %v1674
        %v2699 = vadd.f32 %v651, %v1675
        %v2700 = vadd.f32 %v652, %v1676
        %v2701 = vadd.f32 %v653, %v1677
        %v2702 = vadd.f32 %v654, %v1678
        %v2703 = vadd.f32 %v655, %v1679
        %v2704 = vadd.f32 %v656, %v1680
        %v2705 = vadd.f32 %v657, %v1681
        %v2706 = vadd.f32 %v658, %v1682
        %v2707 = vadd.f32 %v659, %v1683
        %v2708 = vadd.f32 %v660, %v1684
        %v2709 = vadd.f32 %v661, %v1685
        %v2710 = vadd.f32 %v662, %v1686
        %v2711 = vadd.f32 %v663, %v1687
        %v2712 = vadd.f32 %v664, %v1688
        %v2713 = vadd.f32 %v665, %v1689
        %v2714 = vadd.f32 %v666, %v1690
        %v2715 = vadd.f32 %v667, %v1691
        %v2716 = vadd.f32 %v668, %v1692
        %v2717 = vadd.f32 %v669, %v1693
        %v2718 = vadd.f32 %v670, %v1694
        %v2719 = vadd.f32 %v671, %v1695
        %v2720 = vadd.f32 %v672, %v1696
        %v2721 = vadd.f32 %v673, %v1697
        %v2722 = vadd.f32 %v674, %v1698
        %v2723 = vadd.f32 %v675, %v1699
        %v2724 = vadd.f32 %v676, %v1700
        %v2725 = vadd.f32 %v677, %v1701
        %v2726 = vadd.f32 %v678, %v1702
        %v2727 = vadd.f32 %v679, %v1703
        %v2728 = vadd.f32 %v680, %v1704
        %v2729 = vadd.f32 %v681, %v1705
        %v2730 = vadd.f32 %v682, %v1706
        %v2731 = vadd.f32 %v683, %v1707
        %v2732 = vadd.f32 %v684, %v1708
        %v2733 = vadd.f32 %v685, %v1709
        %v2734 = vadd.f32 %v686, %v1710
        %v2735 = vadd.f32 %v687, %v1711
        %v2736 = vadd.f32 %v688, %v1712
        %v2737 = vadd.f32 %v689, %v1713
        %v2738 = vadd.f32 %v690, %v1714
        %v2739 = vadd.f32 %v691, %v1715
        %v2740 = vadd.f32 %v692, %v1716
        %v2741 = vadd.f32 %v693, %v1717
        %v2742 = vadd.f32 %v694, %v1718
        %v2743 = vadd.f32 %v695, %v1719
        %v2744 = vadd.f32 %v696, %v1720
        %v2745 = vadd.f32 %v697, %v1721
        %v2746 = vadd.f32 %v698, %v1722
        %v2747 = vadd.f32 %v699, %v1723
        %v2748 = vadd.f32 %v700, %v1724
        %v2749 = vadd.f32 %v701, %v1725
        %v2750 = vadd.f32 %v702, %v1726
        %v2751 = vadd.f32 %v703, %v1727
        %v2752 = vadd.f32 %v704, %v1728
        %v2753 = vadd.f32 %v705, %v1729
        %v2754 = vadd.f32 %v706, %v1730
        %v2755 = vadd.f32 %v707, %v1731
        %v2756 = vadd.f32 %v708, %v1732
        %v2757 = vadd.f32 %v709, %v1733
        %v2758 = vadd.f32 %v710, %v1734
        %v2759 = vadd.f32 %v711, %v1735
        %v2760 = vadd.f32 %v712, %v1736
        %v2761 = vadd.f32 %v713, %v1737
        %v2762 = vadd.f32 %v714, %v1738
        %v2763 = vadd.f32 %v715, %v1739
        %v2764 = vadd.f32 %v716, %v1740
        %v2765 = vadd.f32 %v717, %v1741
        %v2766 = vadd.f32 %v718, %v1742
        %v2767 = vadd.f32 %v719, %v1743
        %v2768 = vadd.f32 %v720, %v1744
        %v2769 = vadd.f32 %v721, %v1745
        %v2770 = vadd.f32 %v722, %v1746
        %v2771 = vadd.f32 %v723, %v1747
        %v2772 = vadd.f32 %v724, %v1748
        %v2773 = vadd.f32 %v725, %v1749
        %v2774 = vadd.f32 %v726, %v1750
        %v2775 = vadd.f32 %v727, %v1751
        %v2776 = vadd.f32 %v728, %v1752
        %v2777 = vadd.f32 %v729, %v1753
        %v2778 = vadd.f32 %v730, %v1754
        %v2779 = vadd.f32 %v731, %v1755
        %v2780 = vadd.f32 %v732, %v1756
        %v2781 = vadd.f32 %v733, %v1757
        %v2782 = vadd.f32 %v734, %v1758
        %v2783 = vadd.f32 %v735, %v1759
        %v2784 = vadd.f32 %v736, %v1760
        %v2785 = vadd.f32 %v737, %v1761
        %v2786 = vadd.f32 %v738, %v1762
        %v2787 = vadd.f32 %v739, %v1763
        %v2788 = vadd.f32 %v740, %v1764
        %v2789 = vadd.f32 %v741, %v1765
        %v2790 = vadd.f32 %v742, %v1766
        %v2791 = vadd.f32 %v743, %v1767
        %v2792 = vadd.f32 %v744, %v1768
        %v2793 = vadd.f32 %v745, %v1769
        %v2794 = vadd.f32 %v746, %v1770
        %v2795 = vadd.f32 %v747, %v1771
        %v2796 = vadd.f32 %v748, %v1772
        %v2797 = vadd.f32 %v749, %v1773
        %v2798 = vadd.f32 %v750, %v1774
        %v2799 = vadd.f32 %v751, %v1775
        %v2800 = vadd.f32 %v752, %v1776
        %v2801 = vadd.f32 %v753, %v1777
        %v2802 = vadd.f32 %v754, %v1778
        %v2803 = vadd.f32 %v755, %v1779
        %v2804 = vadd.f32 %v756, %v1780
        %v2805 = vadd.f32 %v757, %v1781
        %v2806 = vadd.f32 %v758, %v1782
        %v2807 = vadd.f32 %v759, %v1783
        %v2808 = vadd.f32 %v760, %v1784
        %v2809 = vadd.f32 %v761, %v1785
        %v2810 = vadd.f32 %v762, %v1786
        %v2811 = vadd.f32 %v763, %v1787
        %v2812 = vadd.f32 %v764, %v1788
        %v2813 = vadd.f32 %v765, %v1789
        %v2814 = vadd.f32 %v766, %v1790
        %v2815 = vadd.f32 %v767, %v1791
        %v2816 = vadd.f32 %v768, %v1792
        %v2817 = vadd.f32 %v769, %v1793
        %v2818 = vadd.f32 %v770, %v1794
        %v2819 = vadd.f32 %v771, %v1795
        %v2820 = vadd.f32 %v772, %v1796
        %v2821 = vadd.f32 %v773, %v1797
        %v2822 = vadd.f32 %v774, %v1798
        %v2823 = vadd.f32 %v775, %v1799
        %v2824 = vadd.f32 %v776, %v1800
        %v2825 = vadd.f32 %v777, %v1801
        %v2826 = vadd.f32 %v778, %v1802
        %v2827 = vadd.f32 %v779, %v1803
        %v2828 = vadd.f32 %v780, %v1804
        %v2829 = vadd.f32 %v781, %v1805
        %v2830 = vadd.f32 %v782, %v1806
        %v2831 = vadd.f32 %v783, %v1807
        %v2832 = vadd.f32 %v784, %v1808
        %v2833 = vadd.f32 %v785, %v1809
        %v2834 = vadd.f32 %v786, %v1810
        %v2835 = vadd.f32 %v787, %v1811
        %v2836 = vadd.f32 %v788, %v1812
        %v2837 = vadd.f32 %v789, %v1813
        %v2838 = vadd.f32 %v790, %v1814
        %v2839 = vadd.f32 %v791, %v1815
        %v2840 = vadd.f32 %v792, %v1816
        %v2841 = vadd.f32 %v793, %v1817
        %v2842 = vadd.f32 %v794, %v1818
        %v2843 = vadd.f32 %v795, %v1819
        %v2844 = vadd.f32 %v796, %v1820
        %v2845 = vadd.f32 %v797, %v1821
        %v2846 = vadd.f32 %v798, %v1822
        %v2847 = vadd.f32 %v799, %v1823
        %v2848 = vadd.f32 %v800, %v1824
        %v2849 = vadd.f32 %v801, %v1825
        %v2850 = vadd.f32 %v802, %v1826
        %v2851 = vadd.f32 %v803, %v1827
        %v2852 = vadd.f32 %v804, %v1828
        %v2853 = vadd.f32 %v805, %v1829
        %v2854 = vadd.f32 %v806, %v1830
        %v2855 = vadd.f32 %v807, %v1831
        %v2856 = vadd.f32 %v808, %v1832
        %v2857 = vadd.f32 %v809, %v1833
        %v2858 = vadd.f32 %v810, %v1834
        %v2859 = vadd.f32 %v811, %v1835
        %v2860 = vadd.f32 %v812, %v1836
        %v2861 = vadd.f32 %v813, %v1837
        %v2862 = vadd.f32 %v814, %v1838
        %v2863 = vadd.f32 %v815, %v1839
        %v2864 = vadd.f32 %v816, %v1840
        %v2865 = vadd.f32 %v817, %v1841
        %v2866 = vadd.f32 %v818, %v1842
        %v2867 = vadd.f32 %v819, %v1843
        %v2868 = vadd.f32 %v820, %v1844
        %v2869 = vadd.f32 %v821, %v1845
        %v2870 = vadd.f32 %v822, %v1846
        %v2871 = vadd.f32 %v823, %v1847
        %v2872 = vadd.f32 %v824, %v1848
        %v2873 = vadd.f32 %v825, %v1849
        %v2874 = vadd.f32 %v826, %v1850
        %v2875 = vadd.f32 %v827, %v1851
        %v2876 = vadd.f32 %v828, %v1852
        %v2877 = vadd.f32 %v829, %v1853
        %v2878 = vadd.f32 %v830, %v1854
        %v2879 = vadd.f32 %v831, %v1855
        %v2880 = vadd.f32 %v832, %v1856
        %v2881 = vadd.f32 %v833, %v1857
        %v2882 = vadd.f32 %v834, %v1858
        %v2883 = vadd.f32 %v835, %v1859
        %v2884 = vadd.f32 %v836, %v1860
        %v2885 = vadd.f32 %v837, %v1861
        %v2886 = vadd.f32 %v838, %v1862
        %v2887 = vadd.f32 %v839, %v1863
        %v2888 = vadd.f32 %v840, %v1864
        %v2889 = vadd.f32 %v841, %v1865
        %v2890 = vadd.f32 %v842, %v1866
        %v2891 = vadd.f32 %v843, %v1867
        %v2892 = vadd.f32 %v844, %v1868
        %v2893 = vadd.f32 %v845, %v1869
        %v2894 = vadd.f32 %v846, %v1870
        %v2895 = vadd.f32 %v847, %v1871
        %v2896 = vadd.f32 %v848, %v1872
        %v2897 = vadd.f32 %v849, %v1873
        %v2898 = vadd.f32 %v850, %v1874
        %v2899 = vadd.f32 %v851, %v1875
        %v2900 = vadd.f32 %v852, %v1876
        %v2901 = vadd.f32 %v853, %v1877
        %v2902 = vadd.f32 %v854, %v1878
        %v2903 = vadd.f32 %v855, %v1879
        %v2904 = vadd.f32 %v856, %v1880
        %v2905 = vadd.f32 %v857, %v1881
        %v2906 = vadd.f32 %v858, %v1882
        %v2907 = vadd.f32 %v859, %v1883
        %v2908 = vadd.f32 %v860, %v1884
        %v2909 = vadd.f32 %v861, %v1885
        %v2910 = vadd.f32 %v862, %v1886
        %v2911 = vadd.f32 %v863, %v1887
        %v2912 = vadd.f32 %v864, %v1888
        %v2913 = vadd.f32 %v865, %v1889
        %v2914 = vadd.f32 %v866, %v1890
        %v2915 = vadd.f32 %v867, %v1891
        %v2916 = vadd.f32 %v868, %v1892
        %v2917 = vadd.f32 %v869, %v1893
        %v2918 = vadd.f32 %v870, %v1894
        %v2919 = vadd.f32 %v871, %v1895
        %v2920 = vadd.f32 %v872, %v1896
        %v2921 = vadd.f32 %v873, %v1897
        %v2922 = vadd.f32 %v874, %v1898
        %v2923 = vadd.f32 %v875, %v1899
        %v2924 = vadd.f32 %v876, %v1900
        %v2925 = vadd.f32 %v877, %v1901
        %v2926 = vadd.f32 %v878, %v1902
        %v2927 = vadd.f32 %v879, %v1903
        %v2928 = vadd.f32 %v880, %v1904
        %v2929 = vadd.f32 %v881, %v1905
        %v2930 = vadd.f32 %v882, %v1906
        %v2931 = vadd.f32 %v883, %v1907
        %v2932 = vadd.f32 %v884, %v1908
        %v2933 = vadd.f32 %v885, %v1909
        %v2934 = vadd.f32 %v886, %v1910
        %v2935 = vadd.f32 %v887, %v1911
        %v2936 = vadd.f32 %v888, %v1912
        %v2937 = vadd.f32 %v889, %v1913
        %v2938 = vadd.f32 %v890, %v1914
        %v2939 = vadd.f32 %v891, %v1915
        %v2940 = vadd.f32 %v892, %v1916
        %v2941 = vadd.f32 %v893, %v1917
        %v2942 = vadd.f32 %v894, %v1918
        %v2943 = vadd.f32 %v895, %v1919
        %v2944 = vadd.f32 %v896, %v1920
        %v2945 = vadd.f32 %v897, %v1921
        %v2946 = vadd.f32 %v898, %v1922
        %v2947 = vadd.f32 %v899, %v1923
        %v2948 = vadd.f32 %v900, %v1924
        %v2949 = vadd.f32 %v901, %v1925
        %v2950 = vadd.f32 %v902, %v1926
        %v2951 = vadd.f32 %v903, %v1927
        %v2952 = vadd.f32 %v904, %v1928
        %v2953 = vadd.f32 %v905, %v1929
        %v2954 = vadd.f32 %v906, %v1930
        %v2955 = vadd.f32 %v907, %v1931
        %v2956 = vadd.f32 %v908, %v1932
        %v2957 = vadd.f32 %v909, %v1933
        %v2958 = vadd.f32 %v910, %v1934
        %v2959 = vadd.f32 %v911, %v1935
        %v2960 = vadd.f32 %v912, %v1936
        %v2961 = vadd.f32 %v913, %v1937
        %v2962 = vadd.f32 %v914, %v1938
        %v2963 = vadd.f32 %v915, %v1939
        %v2964 = vadd.f32 %v916, %v1940
        %v2965 = vadd.f32 %v917, %v1941
        %v2966 = vadd.f32 %v918, %v1942
        %v2967 = vadd.f32 %v919, %v1943
        %v2968 = vadd.f32 %v920, %v1944
        %v2969 = vadd.f32 %v921, %v1945
        %v2970 = vadd.f32 %v922, %v1946
        %v2971 = vadd.f32 %v923, %v1947
        %v2972 = vadd.f32 %v924, %v1948
        %v2973 = vadd.f32 %v925, %v1949
        %v2974 = vadd.f32 %v926, %v1950
        %v2975 = vadd.f32 %v927, %v1951
        %v2976 = vadd.f32 %v928, %v1952
        %v2977 = vadd.f32 %v929, %v1953
        %v2978 = vadd.f32 %v930, %v1954
        %v2979 = vadd.f32 %v931, %v1955
        %v2980 = vadd.f32 %v932, %v1956
        %v2981 = vadd.f32 %v933, %v1957
        %v2982 = vadd.f32 %v934, %v1958
        %v2983 = vadd.f32 %v935, %v1959
        %v2984 = vadd.f32 %v936, %v1960
        %v2985 = vadd.f32 %v937, %v1961
        %v2986 = vadd.f32 %v938, %v1962
        %v2987 = vadd.f32 %v939, %v1963
        %v2988 = vadd.f32 %v940, %v1964
        %v2989 = vadd.f32 %v941, %v1965
        %v2990 = vadd.f32 %v942, %v1966
        %v2991 = vadd.f32 %v943, %v1967
        %v2992 = vadd.f32 %v944, %v1968
        %v2993 = vadd.f32 %v945, %v1969
        %v2994 = vadd.f32 %v946, %v1970
        %v2995 = vadd.f32 %v947, %v1971
        %v2996 = vadd.f32 %v948, %v1972
        %v2997 = vadd.f32 %v949, %v1973
        %v2998 = vadd.f32 %v950, %v1974
        %v2999 = vadd.f32 %v951, %v1975
        %v3000 = vadd.f32 %v952, %v1976
        %v3001 = vadd.f32 %v953, %v1977
        %v3002 = vadd.f32 %v954, %v1978
        %v3003 = vadd.f32 %v955, %v1979
        %v3004 = vadd.f32 %v956, %v1980
        %v3005 = vadd.f32 %v957, %v1981
        %v3006 = vadd.f32 %v958, %v1982
        %v3007 = vadd.f32 %v959, %v1983
        %v3008 = vadd.f32 %v960, %v1984
        %v3009 = vadd.f32 %v961, %v1985
        %v3010 = vadd.f32 %v962, %v1986
        %v3011 = vadd.f32 %v963, %v1987
        %v3012 = vadd.f32 %v964, %v1988
        %v3013 = vadd.f32 %v965, %v1989
        %v3014 = vadd.f32 %v966, %v1990
        %v3015 = vadd.f32 %v967, %v1991
        %v3016 = vadd.f32 %v968, %v1992
        %v3017 = vadd.f32 %v969, %v1993
        %v3018 = vadd.f32 %v970, %v1994
        %v3019 = vadd.f32 %v971, %v1995
        %v3020 = vadd.f32 %v972, %v1996
        %v3021 = vadd.f32 %v973, %v1997
        %v3022 = vadd.f32 %v974, %v1998
        %v3023 = vadd.f32 %v975, %v1999
        %v3024 = vadd.f32 %v976, %v2000
        %v3025 = vadd.f32 %v977, %v2001
        %v3026 = vadd.f32 %v978, %v2002
        %v3027 = vadd.f32 %v979, %v2003
        %v3028 = vadd.f32 %v980, %v2004
        %v3029 = vadd.f32 %v981, %v2005
        %v3030 = vadd.f32 %v982, %v2006
        %v3031 = vadd.f32 %v983, %v2007
        %v3032 = vadd.f32 %v984, %v2008
        %v3033 = vadd.f32 %v985, %v2009
        %v3034 = vadd.f32 %v986, %v2010
        %v3035 = vadd.f32 %v987, %v2011
        %v3036 = vadd.f32 %v988, %v2012
        %v3037 = vadd.f32 %v989, %v2013
        %v3038 = vadd.f32 %v990, %v2014
        %v3039 = vadd.f32 %v991, %v2015
        %v3040 = vadd.f32 %v992, %v2016
        %v3041 = vadd.f32 %v993, %v2017
        %v3042 = vadd.f32 %v994, %v2018
        %v3043 = vadd.f32 %v995, %v2019
        %v3044 = vadd.f32 %v996, %v2020
        %v3045 = vadd.f32 %v997, %v2021
        %v3046 = vadd.f32 %v998, %v2022
        %v3047 = vadd.f32 %v999, %v2023
        %v3048 = vadd.f32 %v1000, %v2024
        %v3049 = vadd.f32 %v1001, %v2025
        %v3050 = vadd.f32 %v1002, %v2026
        %v3051 = vadd.f32 %v1003, %v2027
        %v3052 = vadd.f32 %v1004, %v2028
        %v3053 = vadd.f32 %v1005, %v2029
        %v3054 = vadd.f32 %v1006, %v2030
        %v3055 = vadd.f32 %v1007, %v2031
        %v3056 = vadd.f32 %v1008, %v2032
        %v3057 = vadd.f32 %v1009, %v2033
        %v3058 = vadd.f32 %v1010, %v2034
        %v3059 = vadd.f32 %v1011, %v2035
        %v3060 = vadd.f32 %v1012, %v2036
        %v3061 = vadd.f32 %v1013, %v2037
        %v3062 = vadd.f32 %v1014, %v2038
        %v3063 = vadd.f32 %v1015, %v2039
        %v3064 = vadd.f32 %v1016, %v2040
        %v3065 = vadd.f32 %v1017, %v2041
        %v3066 = vadd.f32 %v1018, %v2042
        %v3067 = vadd.f32 %v1019, %v2043
        %v3068 = vadd.f32 %v1020, %v2044
        %v3069 = vadd.f32 %v1021, %v2045
        %v3070 = vadd.f32 %v1022, %v2046
        %v3071 = vadd.f32 %v1023, %v2047
        %v3072 = vadd.f32 %v1024, %v2048
        %v3073 = vadd.f32 %v1025, %v2049
        %v3074 = vadd.f32 %v1026, %v2050
        %v3075 = vadd.f32 %v1027, %v2051
        %v3076 = vadd.f32 %v1028, %v2052
        %v3077 = vadd.f32 %v1029, %v2053
        %v3078 = vadd.f32 %v1030, %v2054
        %v3079 = vadd.f32 %v1031, %v2055
        %v3080 = vadd.f32 %v1032, %v2056
        %v3081 = vadd.f32 %v1033, %v2057
        %v3082 = vadd.f32 %v1034, %v2058
        %v3083 = vadd.f32 %v1035, %v2059
        %v3084 = vadd.f32 %v1036, %v2060
        %v3085 = vadd.f32 %v1037, %v2061
        %v3086 = vadd.f32 %v1038, %v2062
        %v3087 = vadd.f32 %v1039, %v2063
        %v3088 = vadd.f32 %v1040, %v2064
        %v3089 = vadd.f32 %v1041, %v2065
        %v3090 = vadd.f32 %v1042, %v2066
        %v3091 = vadd.f32 %v1043, %v2067
        %v3092 = vadd.f32 %v1044, %v2068
        %v3093 = vadd.f32 %v1045, %v2069
        %v3094 = vadd.f32 %v1046, %v2070
        %v3095 = vadd.f32 %v1047, %v2071
        %v3096 = vadd.f32 %v1048, %v2072
        %v3097 = vadd.f32 %v1049, %v2073
        %v3098 = vadd.f32 %v1050, %v2074
        %v3099 = vadd.f32 %v1051, %v2075
        %v3100 = vadd.f32 %v1052, %v2076
        %v3101 = vadd.f32 %v1053, %v2077
        %v3102 = vadd.f32 %v1054, %v2078
        %v3103 = vadd.f32 %v1055, %v2079
        %v3104 = vadd.f32 %v1056, %v2080
        %v3105 = vadd.f32 %v1057, %v2081
        %v3106 = vadd.f32 %v1058, %v2082
        %v3107 = vadd.f32 %v1059, %v2083
        %v3108 = vadd.f32 %v1060, %v2084
        %v3109 = vadd.f32 %v1061, %v2085
        %v3110 = vadd.f32 %v1062, %v2086
        %v3111 = vadd.f32 %v1063, %v2087
        %v3112 = vadd.f32 %v1064, %v2088
        %v3113 = vadd.f32 %v1065, %v2089
        %v3114 = vadd.f32 %v1066, %v2090
        %v3115 = vadd.f32 %v1067, %v2091
        %v3116 = vadd.f32 %v1068, %v2092
        %v3117 = vadd.f32 %v1069, %v2093
        %v3118 = vadd.f32 %v1070, %v2094
        %v3119 = vadd.f32 %v1071, %v2095
        %v3120 = vadd.f32 %v1072, %v2096
        %v3121 = vadd.f32 %v1073, %v2097
        %v3122 = vadd.f32 %v1074, %v2098
        %v3123 = vadd.f32 %v1075, %v2099
        %v3124 = vadd.f32 %v1076, %v2100
        %v3125 = vadd.f32 %v1077, %v2101
        %v3126 = vadd.f32 %v1078, %v2102
        %v3127 = vadd.f32 %v1079, %v2103
        %v3128 = vadd.f32 %v1080, %v2104
        %v3129 = vadd.f32 %v1081, %v2105
        %v3130 = vadd.f32 %v1082, %v2106
        %v3131 = vadd.f32 %v1083, %v2107
        %v3132 = vadd.f32 %v1084, %v2108
        %v3133 = vadd.f32 %v1085, %v2109
        %v3134 = vadd.f32 %v1086, %v2110
        %v3135 = vadd.f32 %v1087, %v2111
        %v3136 = vadd.f32 %v1088, %v2112
        %v3137 = vadd.f32 %v1089, %v2113
        %v3138 = vadd.f32 %v1090, %v2114
        %v3139 = vadd.f32 %v1091, %v2115
        %v3140 = vadd.f32 %v1092, %v2116
        %v3141 = vadd.f32 %v1093, %v2117
        %v3142 = vadd.f32 %v1094, %v2118
        %v3143 = vadd.f32 %v1095, %v2119
        %v3144 = vadd.f32 %v1096, %v2120
        %v3145 = vadd.f32 %v1097, %v2121
        %v3146 = vadd.f32 %v1098, %v2122
        %v3147 = vadd.f32 %v1099, %v2123
        %v3148 = vadd.f32 %v1100, %v2124
        %v3149 = vadd.f32 %v1101, %v2125
        %v3150 = vadd.f32 %v1102, %v2126
        %v3151 = vadd.f32 %v1103, %v2127
        %v3152 = vadd.f32 %v1104, %v2128
        %v3153 = vadd.f32 %v1105, %v2129
        %v3154 = vadd.f32 %v1106, %v2130
        %v3155 = vadd.f32 %v1107, %v2131
        %v3156 = vadd.f32 %v1108, %v2132
        %v3157 = vadd.f32 %v1109, %v2133
        %v3158 = vadd.f32 %v1110, %v2134
        %v3159 = vadd.f32 %v1111, %v2135
        %v3160 = vadd.f32 %v1112, %v2136
        %v3161 = vadd.f32 %v1113, %v2137
        %v3162 = vadd.f32 %v1114, %v2138
        %v3163 = vadd.f32 %v1115, %v2139
        %v3164 = vadd.f32 %v1116, %v2140
        %v3165 = vadd.f32 %v1117, %v2141
        %v3166 = vadd.f32 %v1118, %v2142
        %v3167 = vadd.f32 %v1119, %v2143
        %v3168 = vadd.f32 %v1120, %v2144
        %v3169 = vadd.f32 %v1121, %v2145
        %v3170 = vadd.f32 %v1122, %v2146
        %v3171 = vadd.f32 %v1123, %v2147
        %v3172 = vadd.f32 %v1124, %v2148
        %v3173 = vadd.f32 %v1125, %v2149
        %v3174 = vadd.f32 %v1126, %v2150
        %v3175 = vadd.f32 %v1127, %v2151
        %v3176 = vadd.f32 %v1128, %v2152
        %v3177 = vadd.f32 %v1129, %v2153
        %v3178 = vadd.f32 %v1130, %v2154
        %v3179 = vadd.f32 %v1131, %v2155
        %v3180 = vadd.f32 %v1132, %v2156
        %v3181 = vadd.f32 %v1133, %v2157
        %v3182 = vadd.f32 %v1134, %v2158
        %v3183 = vadd.f32 %v1135, %v2159
        %v3184 = vadd.f32 %v1136, %v2160
        %v3185 = vadd.f32 %v1137, %v2161
        %v3186 = vadd.f32 %v1138, %v2162
        %v3187 = vadd.f32 %v1139, %v2163
        %v3188 = vadd.f32 %v1140, %v2164
        %v3189 = vadd.f32 %v1141, %v2165
        %v3190 = vadd.f32 %v1142, %v2166
        %v3191 = vadd.f32 %v1143, %v2167
        %v3192 = vadd.f32 %v1144, %v2168
        %v3193 = vadd.f32 %v1145, %v2169
        %v3194 = vadd.f32 %v1146, %v2170
        %v3195 = vadd.f32 %v1147, %v2171
        %v3196 = vadd.f32 %v1148, %v2172
        %v3197 = vadd.f32 %v1149, %v2173
        %v3198 = vadd.f32 %v1150, %v2174
        %v3199 = vadd.f32 %v1151, %v2175
        %v3200 = vadd.f32 %v1152, %v2176
        %v3201 = vadd.f32 %v1153, %v2177
        %v3202 = vadd.f32 %v1154, %v2178
        %v3203 = vadd.f32 %v1155, %v2179
        %v3204 = vadd.f32 %v1156, %v2180
        %v3205 = vadd.f32 %v1157, %v2181
        %v3206 = vadd.f32 %v1158, %v2182
        %v3207 = vadd.f32 %v1159, %v2183
        %v3208 = vadd.f32 %v1160, %v2184
        %v3209 = vadd.f32 %v1161, %v2185
        %v3210 = vadd.f32 %v1162, %v2186
        %v3211 = vadd.f32 %v1163, %v2187
        %v3212 = vadd.f32 %v1164, %v2188
        %v3213 = vadd.f32 %v1165, %v2189
        %v3214 = vadd.f32 %v1166, %v2190
        %v3215 = vadd.f32 %v1167, %v2191
        %v3216 = vadd.f32 %v1168, %v2192
        %v3217 = vadd.f32 %v1169, %v2193
        %v3218 = vadd.f32 %v1170, %v2194
        %v3219 = vadd.f32 %v1171, %v2195
        %v3220 = vadd.f32 %v1172, %v2196
        %v3221 = vadd.f32 %v1173, %v2197
        %v3222 = vadd.f32 %v1174, %v2198
        %v3223 = vadd.f32 %v1175, %v2199
        %v3224 = vadd.f32 %v1176, %v2200
        %v3225 = vadd.f32 %v1177, %v2201
        %v3226 = vadd.f32 %v1178, %v2202
        %v3227 = vadd.f32 %v1179, %v2203
        %v3228 = vadd.f32 %v1180, %v2204
        %v3229 = vadd.f32 %v1181, %v2205
        %v3230 = vadd.f32 %v1182, %v2206
        %v3231 = vadd.f32 %v1183, %v2207
        %v3232 = vadd.f32 %v1184, %v2208
        %v3233 = vadd.f32 %v1185, %v2209
        %v3234 = vadd.f32 %v1186, %v2210
        %v3235 = vadd.f32 %v1187, %v2211
        %v3236 = vadd.f32 %v1188, %v2212
        %v3237 = vadd.f32 %v1189, %v2213
        %v3238 = vadd.f32 %v1190, %v2214
        %v3239 = vadd.f32 %v1191, %v2215
        %v3240 = vadd.f32 %v1192, %v2216
        %v3241 = vadd.f32 %v1193, %v2217
        %v3242 = vadd.f32 %v1194, %v2218
        %v3243 = vadd.f32 %v1195, %v2219
        %v3244 = vadd.f32 %v1196, %v2220
        %v3245 = vadd.f32 %v1197, %v2221
        %v3246 = vadd.f32 %v1198, %v2222
        %v3247 = vadd.f32 %v1199, %v2223
        %v3248 = vadd.f32 %v1200, %v2224
        %v3249 = vadd.f32 %v1201, %v2225
        %v3250 = vadd.f32 %v1202, %v2226
        %v3251 = vadd.f32 %v1203, %v2227
        %v3252 = vadd.f32 %v1204, %v2228
        %v3253 = vadd.f32 %v1205, %v2229
        %v3254 = vadd.f32 %v1206, %v2230
        %v3255 = vadd.f32 %v1207, %v2231
        %v3256 = vadd.f32 %v1208, %v2232
        %v3257 = vadd.f32 %v1209, %v2233
        %v3258 = vadd.f32 %v1210, %v2234
        %v3259 = vadd.f32 %v1211, %v2235
        %v3260 = vadd.f32 %v1212, %v2236
        %v3261 = vadd.f32 %v1213, %v2237
        %v3262 = vadd.f32 %v1214, %v2238
        %v3263 = vadd.f32 %v1215, %v2239
        %v3264 = vadd.f32 %v1216, %v2240
        %v3265 = vadd.f32 %v1217, %v2241
        %v3266 = vadd.f32 %v1218, %v2242
        %v3267 = vadd.f32 %v1219, %v2243
        %v3268 = vadd.f32 %v1220, %v2244
        %v3269 = vadd.f32 %v1221, %v2245
        %v3270 = vadd.f32 %v1222, %v2246
        %v3271 = vadd.f32 %v1223, %v2247
        %v3272 = vadd.f32 %v1224, %v2248
        %v3273 = vadd.f32 %v1225, %v2249
        %v3274 = vadd.f32 %v1226, %v2250
        %v3275 = vadd.f32 %v1227, %v2251
        %v3276 = vadd.f32 %v1228, %v2252
        %v3277 = vadd.f32 %v1229, %v2253
        %v3278 = vadd.f32 %v1230, %v2254
        %v3279 = vadd.f32 %v1231, %v2255
        %v3280 = vadd.f32 %v1232, %v2256
        %v3281 = vadd.f32 %v1233, %v2257
        %v3282 = vadd.f32 %v1234, %v2258
        %v3283 = vadd.f32 %v1235, %v2259
        %v3284 = vadd.f32 %v1236, %v2260
        %v3285 = vadd.f32 %v1237, %v2261
        %v3286 = vadd.f32 %v1238, %v2262
        %v3287 = vadd.f32 %v1239, %v2263
        %v3288 = vadd.f32 %v1240, %v2264
        %v3289 = vadd.f32 %v1241, %v2265
        %v3290 = vadd.f32 %v1242, %v2266
        %v3291 = vadd.f32 %v1243, %v2267
        %v3292 = vadd.f32 %v1244, %v2268
        %v3293 = vadd.f32 %v1245, %v2269
        %v3294 = vadd.f32 %v1246, %v2270
        %v3295 = vadd.f32 %v1247, %v2271
        %v3296 = vadd.f32 %v1248, %v2272
        %v3297 = vadd.f32 %v1249, %v2273
        %v3298 = vadd.f32 %v1250, %v2274
        %v3299 = vadd.f32 %v1251, %v2275
        %v3300 = vadd.f32 %v1252, %v2276
        %v3301 = vadd.f32 %v1253, %v2277
        %v3302 = vadd.f32 %v1254, %v2278
        %v3303 = vadd.f32 %v1255, %v2279
        %v3304 = vadd.f32 %v1256, %v2280
        %v3305 = vadd.f32 %v1257, %v2281
        %v3306 = vadd.f32 %v1258, %v2282
        %v3307 = vadd.f32 %v1259, %v2283
        %v3308 = vadd.f32 %v1260, %v2284
        %v3309 = vadd.f32 %v1261, %v2285
        %v3310 = vadd.f32 %v1262, %v2286
        %v3311 = vadd.f32 %v1263, %v2287
        %v3312 = vadd.f32 %v1264, %v2288
        %v3313 = vadd.f32 %v1265, %v2289
        %v3314 = vadd.f32 %v1266, %v2290
        %v3315 = vadd.f32 %v1267, %v2291
        %v3316 = vadd.f32 %v1268, %v2292
        %v3317 = vadd.f32 %v1269, %v2293
        %v3318 = vadd.f32 %v1270, %v2294
        %v3319 = vadd.f32 %v1271, %v2295
        %v3320 = vadd.f32 %v1272, %v2296
        %v3321 = vadd.f32 %v1273, %v2297
        %v3322 = vadd.f32 %v1274, %v2298
        %v3323 = vadd.f32 %v1275, %v2299
        %v3324 = vadd.f32 %v1276, %v2300
        %3325 = vst [vmem:[%s237] sm:$0xff] %v2301
        %3326 = vst [vmem:[%s237 + $0x8] sm:$0xff] %v2302
        %3327 = vst [vmem:[%s237 + $0x10] sm:$0xff] %v2303
        %3328 = vst [vmem:[%s237 + $0x18] sm:$0xff] %v2304
        %3329 = vst [vmem:[%s237 + $0x20] sm:$0xff] %v2305
        %3330 = vst [vmem:[%s237 + $0x28] sm:$0xff] %v2306
        %3331 = vst [vmem:[%s237 + $0x30] sm:$0xff] %v2307
        %3332 = vst [vmem:[%s237 + $0x38] sm:$0xff] %v2308
        %3333 = vst [vmem:[%s237 + $0x40] sm:$0xff] %v2309
        %3334 = vst [vmem:[%s237 + $0x48] sm:$0xff] %v2310
        %3335 = vst [vmem:[%s237 + $0x50] sm:$0xff] %v2311
        %3336 = vst [vmem:[%s237 + $0x58] sm:$0xff] %v2312
        %3337 = vst [vmem:[%s237 + $0x60] sm:$0xff] %v2313
        %3338 = vst [vmem:[%s237 + $0x68] sm:$0xff] %v2314
        %3339 = vst [vmem:[%s237 + $0x70] sm:$0xff] %v2315
        %3340 = vst [vmem:[%s237 + $0x78] sm:$0xff] %v2316
        %3341 = vst [vmem:[%s237 + $0x80] sm:$0xff] %v2317
        %3342 = vst [vmem:[%s237 + $0x88] sm:$0xff] %v2318
        %3343 = vst [vmem:[%s237 + $0x90] sm:$0xff] %v2319
        %3344 = vst [vmem:[%s237 + $0x98] sm:$0xff] %v2320
        %3345 = vst [vmem:[%s237 + $0xa0] sm:$0xff] %v2321
        %3346 = vst [vmem:[%s237 + $0xa8] sm:$0xff] %v2322
        %3347 = vst [vmem:[%s237 + $0xb0] sm:$0xff] %v2323
        %3348 = vst [vmem:[%s237 + $0xb8] sm:$0xff] %v2324
        %3349 = vst [vmem:[%s237 + $0xc0] sm:$0xff] %v2325
        %3350 = vst [vmem:[%s237 + $0xc8] sm:$0xff] %v2326
        %3351 = vst [vmem:[%s237 + $0xd0] sm:$0xff] %v2327
        %3352 = vst [vmem:[%s237 + $0xd8] sm:$0xff] %v2328
        %3353 = vst [vmem:[%s237 + $0xe0] sm:$0xff] %v2329
        %3354 = vst [vmem:[%s237 + $0xe8] sm:$0xff] %v2330
        %3355 = vst [vmem:[%s237 + $0xf0] sm:$0xff] %v2331
        %3356 = vst [vmem:[%s237 + $0xf8] sm:$0xff] %v2332
        %3357 = vst [vmem:[%s237 + $0x100] sm:$0xff] %v2333
        %3358 = vst [vmem:[%s237 + $0x108] sm:$0xff] %v2334
        %3359 = vst [vmem:[%s237 + $0x110] sm:$0xff] %v2335
        %3360 = vst [vmem:[%s237 + $0x118] sm:$0xff] %v2336
        %3361 = vst [vmem:[%s237 + $0x120] sm:$0xff] %v2337
        %3362 = vst [vmem:[%s237 + $0x128] sm:$0xff] %v2338
        %3363 = vst [vmem:[%s237 + $0x130] sm:$0xff] %v2339
        %3364 = vst [vmem:[%s237 + $0x138] sm:$0xff] %v2340
        %3365 = vst [vmem:[%s237 + $0x140] sm:$0xff] %v2341
        %3366 = vst [vmem:[%s237 + $0x148] sm:$0xff] %v2342
        %3367 = vst [vmem:[%s237 + $0x150] sm:$0xff] %v2343
        %3368 = vst [vmem:[%s237 + $0x158] sm:$0xff] %v2344
        %3369 = vst [vmem:[%s237 + $0x160] sm:$0xff] %v2345
        %3370 = vst [vmem:[%s237 + $0x168] sm:$0xff] %v2346
        %3371 = vst [vmem:[%s237 + $0x170] sm:$0xff] %v2347
        %3372 = vst [vmem:[%s237 + $0x178] sm:$0xff] %v2348
        %3373 = vst [vmem:[%s237 + $0x180] sm:$0xff] %v2349
        %3374 = vst [vmem:[%s237 + $0x188] sm:$0xff] %v2350
        %3375 = vst [vmem:[%s237 + $0x190] sm:$0xff] %v2351
        %3376 = vst [vmem:[%s237 + $0x198] sm:$0xff] %v2352
        %3377 = vst [vmem:[%s237 + $0x1a0] sm:$0xff] %v2353
        %3378 = vst [vmem:[%s237 + $0x1a8] sm:$0xff] %v2354
        %3379 = vst [vmem:[%s237 + $0x1b0] sm:$0xff] %v2355
        %3380 = vst [vmem:[%s237 + $0x1b8] sm:$0xff] %v2356
        %3381 = vst [vmem:[%s237 + $0x1c0] sm:$0xff] %v2357
        %3382 = vst [vmem:[%s237 + $0x1c8] sm:$0xff] %v2358
        %3383 = vst [vmem:[%s237 + $0x1d0] sm:$0xff] %v2359
        %3384 = vst [vmem:[%s237 + $0x1d8] sm:$0xff] %v2360
        %3385 = vst [vmem:[%s237 + $0x1e0] sm:$0xff] %v2361
        %3386 = vst [vmem:[%s237 + $0x1e8] sm:$0xff] %v2362
        %3387 = vst [vmem:[%s237 + $0x1f0] sm:$0xff] %v2363
        %3388 = vst [vmem:[%s237 + $0x1f8] sm:$0xff] %v2364
        %3389 = vst [vmem:[%s237 + $0x200] sm:$0xff] %v2365
        %3390 = vst [vmem:[%s237 + $0x208] sm:$0xff] %v2366
        %3391 = vst [vmem:[%s237 + $0x210] sm:$0xff] %v2367
        %3392 = vst [vmem:[%s237 + $0x218] sm:$0xff] %v2368
        %3393 = vst [vmem:[%s237 + $0x220] sm:$0xff] %v2369
        %3394 = vst [vmem:[%s237 + $0x228] sm:$0xff] %v2370
        %3395 = vst [vmem:[%s237 + $0x230] sm:$0xff] %v2371
        %3396 = vst [vmem:[%s237 + $0x238] sm:$0xff] %v2372
        %3397 = vst [vmem:[%s237 + $0x240] sm:$0xff] %v2373
        %3398 = vst [vmem:[%s237 + $0x248] sm:$0xff] %v2374
        %3399 = vst [vmem:[%s237 + $0x250] sm:$0xff] %v2375
        %3400 = vst [vmem:[%s237 + $0x258] sm:$0xff] %v2376
        %3401 = vst [vmem:[%s237 + $0x260] sm:$0xff] %v2377
        %3402 = vst [vmem:[%s237 + $0x268] sm:$0xff] %v2378
        %3403 = vst [vmem:[%s237 + $0x270] sm:$0xff] %v2379
        %3404 = vst [vmem:[%s237 + $0x278] sm:$0xff] %v2380
        %3405 = vst [vmem:[%s237 + $0x280] sm:$0xff] %v2381
        %3406 = vst [vmem:[%s237 + $0x288] sm:$0xff] %v2382
        %3407 = vst [vmem:[%s237 + $0x290] sm:$0xff] %v2383
        %3408 = vst [vmem:[%s237 + $0x298] sm:$0xff] %v2384
        %3409 = vst [vmem:[%s237 + $0x2a0] sm:$0xff] %v2385
        %3410 = vst [vmem:[%s237 + $0x2a8] sm:$0xff] %v2386
        %3411 = vst [vmem:[%s237 + $0x2b0] sm:$0xff] %v2387
        %3412 = vst [vmem:[%s237 + $0x2b8] sm:$0xff] %v2388
        %3413 = vst [vmem:[%s237 + $0x2c0] sm:$0xff] %v2389
        %3414 = vst [vmem:[%s237 + $0x2c8] sm:$0xff] %v2390
        %3415 = vst [vmem:[%s237 + $0x2d0] sm:$0xff] %v2391
        %3416 = vst [vmem:[%s237 + $0x2d8] sm:$0xff] %v2392
        %3417 = vst [vmem:[%s237 + $0x2e0] sm:$0xff] %v2393
        %3418 = vst [vmem:[%s237 + $0x2e8] sm:$0xff] %v2394
        %3419 = vst [vmem:[%s237 + $0x2f0] sm:$0xff] %v2395
        %3420 = vst [vmem:[%s237 + $0x2f8] sm:$0xff] %v2396
        %3421 = vst [vmem:[%s237 + $0x300] sm:$0xff] %v2397
        %3422 = vst [vmem:[%s237 + $0x308] sm:$0xff] %v2398
        %3423 = vst [vmem:[%s237 + $0x310] sm:$0xff] %v2399
        %3424 = vst [vmem:[%s237 + $0x318] sm:$0xff] %v2400
        %3425 = vst [vmem:[%s237 + $0x320] sm:$0xff] %v2401
        %3426 = vst [vmem:[%s237 + $0x328] sm:$0xff] %v2402
        %3427 = vst [vmem:[%s237 + $0x330] sm:$0xff] %v2403
        %3428 = vst [vmem:[%s237 + $0x338] sm:$0xff] %v2404
        %3429 = vst [vmem:[%s237 + $0x340] sm:$0xff] %v2405
        %3430 = vst [vmem:[%s237 + $0x348] sm:$0xff] %v2406
        %3431 = vst [vmem:[%s237 + $0x350] sm:$0xff] %v2407
        %3432 = vst [vmem:[%s237 + $0x358] sm:$0xff] %v2408
        %3433 = vst [vmem:[%s237 + $0x360] sm:$0xff] %v2409
        %3434 = vst [vmem:[%s237 + $0x368] sm:$0xff] %v2410
        %3435 = vst [vmem:[%s237 + $0x370] sm:$0xff] %v2411
        %3436 = vst [vmem:[%s237 + $0x378] sm:$0xff] %v2412
        %3437 = vst [vmem:[%s237 + $0x380] sm:$0xff] %v2413
        %3438 = vst [vmem:[%s237 + $0x388] sm:$0xff] %v2414
        %3439 = vst [vmem:[%s237 + $0x390] sm:$0xff] %v2415
        %3440 = vst [vmem:[%s237 + $0x398] sm:$0xff] %v2416
        %3441 = vst [vmem:[%s237 + $0x3a0] sm:$0xff] %v2417
        %3442 = vst [vmem:[%s237 + $0x3a8] sm:$0xff] %v2418
        %3443 = vst [vmem:[%s237 + $0x3b0] sm:$0xff] %v2419
        %3444 = vst [vmem:[%s237 + $0x3b8] sm:$0xff] %v2420
        %3445 = vst [vmem:[%s237 + $0x3c0] sm:$0xff] %v2421
        %3446 = vst [vmem:[%s237 + $0x3c8] sm:$0xff] %v2422
        %3447 = vst [vmem:[%s237 + $0x3d0] sm:$0xff] %v2423
        %3448 = vst [vmem:[%s237 + $0x3d8] sm:$0xff] %v2424
        %3449 = vst [vmem:[%s237 + $0x3e0] sm:$0xff] %v2425
        %3450 = vst [vmem:[%s237 + $0x3e8] sm:$0xff] %v2426
        %3451 = vst [vmem:[%s237 + $0x3f0] sm:$0xff] %v2427
        %3452 = vst [vmem:[%s237 + $0x3f8] sm:$0xff] %v2428
        %3453 = vst [vmem:[%s237 + $0x400] sm:$0xff] %v2429
        %3454 = vst [vmem:[%s237 + $0x408] sm:$0xff] %v2430
        %3455 = vst [vmem:[%s237 + $0x410] sm:$0xff] %v2431
        %3456 = vst [vmem:[%s237 + $0x418] sm:$0xff] %v2432
        %3457 = vst [vmem:[%s237 + $0x420] sm:$0xff] %v2433
        %3458 = vst [vmem:[%s237 + $0x428] sm:$0xff] %v2434
        %3459 = vst [vmem:[%s237 + $0x430] sm:$0xff] %v2435
        %3460 = vst [vmem:[%s237 + $0x438] sm:$0xff] %v2436
        %3461 = vst [vmem:[%s237 + $0x440] sm:$0xff] %v2437
        %3462 = vst [vmem:[%s237 + $0x448] sm:$0xff] %v2438
        %3463 = vst [vmem:[%s237 + $0x450] sm:$0xff] %v2439
        %3464 = vst [vmem:[%s237 + $0x458] sm:$0xff] %v2440
        %3465 = vst [vmem:[%s237 + $0x460] sm:$0xff] %v2441
        %3466 = vst [vmem:[%s237 + $0x468] sm:$0xff] %v2442
        %3467 = vst [vmem:[%s237 + $0x470] sm:$0xff] %v2443
        %3468 = vst [vmem:[%s237 + $0x478] sm:$0xff] %v2444
        %3469 = vst [vmem:[%s237 + $0x480] sm:$0xff] %v2445
        %3470 = vst [vmem:[%s237 + $0x488] sm:$0xff] %v2446
        %3471 = vst [vmem:[%s237 + $0x490] sm:$0xff] %v2447
        %3472 = vst [vmem:[%s237 + $0x498] sm:$0xff] %v2448
        %3473 = vst [vmem:[%s237 + $0x4a0] sm:$0xff] %v2449
        %3474 = vst [vmem:[%s237 + $0x4a8] sm:$0xff] %v2450
        %3475 = vst [vmem:[%s237 + $0x4b0] sm:$0xff] %v2451
        %3476 = vst [vmem:[%s237 + $0x4b8] sm:$0xff] %v2452
        %3477 = vst [vmem:[%s237 + $0x4c0] sm:$0xff] %v2453
        %3478 = vst [vmem:[%s237 + $0x4c8] sm:$0xff] %v2454
        %3479 = vst [vmem:[%s237 + $0x4d0] sm:$0xff] %v2455
        %3480 = vst [vmem:[%s237 + $0x4d8] sm:$0xff] %v2456
        %3481 = vst [vmem:[%s237 + $0x4e0] sm:$0xff] %v2457
        %3482 = vst [vmem:[%s237 + $0x4e8] sm:$0xff] %v2458
        %3483 = vst [vmem:[%s237 + $0x4f0] sm:$0xff] %v2459
        %3484 = vst [vmem:[%s237 + $0x4f8] sm:$0xff] %v2460
        %3485 = vst [vmem:[%s237 + $0x500] sm:$0xff] %v2461
        %3486 = vst [vmem:[%s237 + $0x508] sm:$0xff] %v2462
        %3487 = vst [vmem:[%s237 + $0x510] sm:$0xff] %v2463
        %3488 = vst [vmem:[%s237 + $0x518] sm:$0xff] %v2464
        %3489 = vst [vmem:[%s237 + $0x520] sm:$0xff] %v2465
        %3490 = vst [vmem:[%s237 + $0x528] sm:$0xff] %v2466
        %3491 = vst [vmem:[%s237 + $0x530] sm:$0xff] %v2467
        %3492 = vst [vmem:[%s237 + $0x538] sm:$0xff] %v2468
        %3493 = vst [vmem:[%s237 + $0x540] sm:$0xff] %v2469
        %3494 = vst [vmem:[%s237 + $0x548] sm:$0xff] %v2470
        %3495 = vst [vmem:[%s237 + $0x550] sm:$0xff] %v2471
        %3496 = vst [vmem:[%s237 + $0x558] sm:$0xff] %v2472
        %3497 = vst [vmem:[%s237 + $0x560] sm:$0xff] %v2473
        %3498 = vst [vmem:[%s237 + $0x568] sm:$0xff] %v2474
        %3499 = vst [vmem:[%s237 + $0x570] sm:$0xff] %v2475
        %3500 = vst [vmem:[%s237 + $0x578] sm:$0xff] %v2476
        %3501 = vst [vmem:[%s237 + $0x580] sm:$0xff] %v2477
        %3502 = vst [vmem:[%s237 + $0x588] sm:$0xff] %v2478
        %3503 = vst [vmem:[%s237 + $0x590] sm:$0xff] %v2479
        %3504 = vst [vmem:[%s237 + $0x598] sm:$0xff] %v2480
        %3505 = vst [vmem:[%s237 + $0x5a0] sm:$0xff] %v2481
        %3506 = vst [vmem:[%s237 + $0x5a8] sm:$0xff] %v2482
        %3507 = vst [vmem:[%s237 + $0x5b0] sm:$0xff] %v2483
        %3508 = vst [vmem:[%s237 + $0x5b8] sm:$0xff] %v2484
        %3509 = vst [vmem:[%s237 + $0x5c0] sm:$0xff] %v2485
        %3510 = vst [vmem:[%s237 + $0x5c8] sm:$0xff] %v2486
        %3511 = vst [vmem:[%s237 + $0x5d0] sm:$0xff] %v2487
        %3512 = vst [vmem:[%s237 + $0x5d8] sm:$0xff] %v2488
        %3513 = vst [vmem:[%s237 + $0x5e0] sm:$0xff] %v2489
        %3514 = vst [vmem:[%s237 + $0x5e8] sm:$0xff] %v2490
        %3515 = vst [vmem:[%s237 + $0x5f0] sm:$0xff] %v2491
        %3516 = vst [vmem:[%s237 + $0x5f8] sm:$0xff] %v2492
        %3517 = vst [vmem:[%s237 + $0x600] sm:$0xff] %v2493
        %3518 = vst [vmem:[%s237 + $0x608] sm:$0xff] %v2494
        %3519 = vst [vmem:[%s237 + $0x610] sm:$0xff] %v2495
        %3520 = vst [vmem:[%s237 + $0x618] sm:$0xff] %v2496
        %3521 = vst [vmem:[%s237 + $0x620] sm:$0xff] %v2497
        %3522 = vst [vmem:[%s237 + $0x628] sm:$0xff] %v2498
        %3523 = vst [vmem:[%s237 + $0x630] sm:$0xff] %v2499
        %3524 = vst [vmem:[%s237 + $0x638] sm:$0xff] %v2500
        %3525 = vst [vmem:[%s237 + $0x640] sm:$0xff] %v2501
        %3526 = vst [vmem:[%s237 + $0x648] sm:$0xff] %v2502
        %3527 = vst [vmem:[%s237 + $0x650] sm:$0xff] %v2503
        %3528 = vst [vmem:[%s237 + $0x658] sm:$0xff] %v2504
        %3529 = vst [vmem:[%s237 + $0x660] sm:$0xff] %v2505
        %3530 = vst [vmem:[%s237 + $0x668] sm:$0xff] %v2506
        %3531 = vst [vmem:[%s237 + $0x670] sm:$0xff] %v2507
        %3532 = vst [vmem:[%s237 + $0x678] sm:$0xff] %v2508
        %3533 = vst [vmem:[%s237 + $0x680] sm:$0xff] %v2509
        %3534 = vst [vmem:[%s237 + $0x688] sm:$0xff] %v2510
        %3535 = vst [vmem:[%s237 + $0x690] sm:$0xff] %v2511
        %3536 = vst [vmem:[%s237 + $0x698] sm:$0xff] %v2512
        %3537 = vst [vmem:[%s237 + $0x6a0] sm:$0xff] %v2513
        %3538 = vst [vmem:[%s237 + $0x6a8] sm:$0xff] %v2514
        %3539 = vst [vmem:[%s237 + $0x6b0] sm:$0xff] %v2515
        %3540 = vst [vmem:[%s237 + $0x6b8] sm:$0xff] %v2516
        %3541 = vst [vmem:[%s237 + $0x6c0] sm:$0xff] %v2517
        %3542 = vst [vmem:[%s237 + $0x6c8] sm:$0xff] %v2518
        %3543 = vst [vmem:[%s237 + $0x6d0] sm:$0xff] %v2519
        %3544 = vst [vmem:[%s237 + $0x6d8] sm:$0xff] %v2520
        %3545 = vst [vmem:[%s237 + $0x6e0] sm:$0xff] %v2521
        %3546 = vst [vmem:[%s237 + $0x6e8] sm:$0xff] %v2522
        %3547 = vst [vmem:[%s237 + $0x6f0] sm:$0xff] %v2523
        %3548 = vst [vmem:[%s237 + $0x6f8] sm:$0xff] %v2524
        %3549 = vst [vmem:[%s237 + $0x700] sm:$0xff] %v2525
        %3550 = vst [vmem:[%s237 + $0x708] sm:$0xff] %v2526
        %3551 = vst [vmem:[%s237 + $0x710] sm:$0xff] %v2527
        %3552 = vst [vmem:[%s237 + $0x718] sm:$0xff] %v2528
        %3553 = vst [vmem:[%s237 + $0x720] sm:$0xff] %v2529
        %3554 = vst [vmem:[%s237 + $0x728] sm:$0xff] %v2530
        %3555 = vst [vmem:[%s237 + $0x730] sm:$0xff] %v2531
        %3556 = vst [vmem:[%s237 + $0x738] sm:$0xff] %v2532
        %3557 = vst [vmem:[%s237 + $0x740] sm:$0xff] %v2533
        %3558 = vst [vmem:[%s237 + $0x748] sm:$0xff] %v2534
        %3559 = vst [vmem:[%s237 + $0x750] sm:$0xff] %v2535
        %3560 = vst [vmem:[%s237 + $0x758] sm:$0xff] %v2536
        %3561 = vst [vmem:[%s237 + $0x760] sm:$0xff] %v2537
        %3562 = vst [vmem:[%s237 + $0x768] sm:$0xff] %v2538
        %3563 = vst [vmem:[%s237 + $0x770] sm:$0xff] %v2539
        %3564 = vst [vmem:[%s237 + $0x778] sm:$0xff] %v2540
        %3565 = vst [vmem:[%s237 + $0x780] sm:$0xff] %v2541
        %3566 = vst [vmem:[%s237 + $0x788] sm:$0xff] %v2542
        %3567 = vst [vmem:[%s237 + $0x790] sm:$0xff] %v2543
        %3568 = vst [vmem:[%s237 + $0x798] sm:$0xff] %v2544
        %3569 = vst [vmem:[%s237 + $0x7a0] sm:$0xff] %v2545
        %3570 = vst [vmem:[%s237 + $0x7a8] sm:$0xff] %v2546
        %3571 = vst [vmem:[%s237 + $0x7b0] sm:$0xff] %v2547
        %3572 = vst [vmem:[%s237 + $0x7b8] sm:$0xff] %v2548
        %3573 = vst [vmem:[%s237 + $0x7c0] sm:$0xff] %v2549
        %3574 = vst [vmem:[%s237 + $0x7c8] sm:$0xff] %v2550
        %3575 = vst [vmem:[%s237 + $0x7d0] sm:$0xff] %v2551
        %3576 = vst [vmem:[%s237 + $0x7d8] sm:$0xff] %v2552
        %3577 = vst [vmem:[%s237 + $0x7e0] sm:$0xff] %v2553
        %3578 = vst [vmem:[%s237 + $0x7e8] sm:$0xff] %v2554
        %3579 = vst [vmem:[%s237 + $0x7f0] sm:$0xff] %v2555
        %3580 = vst [vmem:[%s237 + $0x7f8] sm:$0xff] %v2556
        %3581 = vst [vmem:[%s237 + $0x800] sm:$0xff] %v2557
        %3582 = vst [vmem:[%s237 + $0x808] sm:$0xff] %v2558
        %3583 = vst [vmem:[%s237 + $0x810] sm:$0xff] %v2559
        %3584 = vst [vmem:[%s237 + $0x818] sm:$0xff] %v2560
        %3585 = vst [vmem:[%s237 + $0x820] sm:$0xff] %v2561
        %3586 = vst [vmem:[%s237 + $0x828] sm:$0xff] %v2562
        %3587 = vst [vmem:[%s237 + $0x830] sm:$0xff] %v2563
        %3588 = vst [vmem:[%s237 + $0x838] sm:$0xff] %v2564
        %3589 = vst [vmem:[%s237 + $0x840] sm:$0xff] %v2565
        %3590 = vst [vmem:[%s237 + $0x848] sm:$0xff] %v2566
        %3591 = vst [vmem:[%s237 + $0x850] sm:$0xff] %v2567
        %3592 = vst [vmem:[%s237 + $0x858] sm:$0xff] %v2568
        %3593 = vst [vmem:[%s237 + $0x860] sm:$0xff] %v2569
        %3594 = vst [vmem:[%s237 + $0x868] sm:$0xff] %v2570
        %3595 = vst [vmem:[%s237 + $0x870] sm:$0xff] %v2571
        %3596 = vst [vmem:[%s237 + $0x878] sm:$0xff] %v2572
        %3597 = vst [vmem:[%s237 + $0x880] sm:$0xff] %v2573
        %3598 = vst [vmem:[%s237 + $0x888] sm:$0xff] %v2574
        %3599 = vst [vmem:[%s237 + $0x890] sm:$0xff] %v2575
        %3600 = vst [vmem:[%s237 + $0x898] sm:$0xff] %v2576
        %3601 = vst [vmem:[%s237 + $0x8a0] sm:$0xff] %v2577
        %3602 = vst [vmem:[%s237 + $0x8a8] sm:$0xff] %v2578
        %3603 = vst [vmem:[%s237 + $0x8b0] sm:$0xff] %v2579
        %3604 = vst [vmem:[%s237 + $0x8b8] sm:$0xff] %v2580
        %3605 = vst [vmem:[%s237 + $0x8c0] sm:$0xff] %v2581
        %3606 = vst [vmem:[%s237 + $0x8c8] sm:$0xff] %v2582
        %3607 = vst [vmem:[%s237 + $0x8d0] sm:$0xff] %v2583
        %3608 = vst [vmem:[%s237 + $0x8d8] sm:$0xff] %v2584
        %3609 = vst [vmem:[%s237 + $0x8e0] sm:$0xff] %v2585
        %3610 = vst [vmem:[%s237 + $0x8e8] sm:$0xff] %v2586
        %3611 = vst [vmem:[%s237 + $0x8f0] sm:$0xff] %v2587
        %3612 = vst [vmem:[%s237 + $0x8f8] sm:$0xff] %v2588
        %3613 = vst [vmem:[%s237 + $0x900] sm:$0xff] %v2589
        %3614 = vst [vmem:[%s237 + $0x908] sm:$0xff] %v2590
        %3615 = vst [vmem:[%s237 + $0x910] sm:$0xff] %v2591
        %3616 = vst [vmem:[%s237 + $0x918] sm:$0xff] %v2592
        %3617 = vst [vmem:[%s237 + $0x920] sm:$0xff] %v2593
        %3618 = vst [vmem:[%s237 + $0x928] sm:$0xff] %v2594
        %3619 = vst [vmem:[%s237 + $0x930] sm:$0xff] %v2595
        %3620 = vst [vmem:[%s237 + $0x938] sm:$0xff] %v2596
        %3621 = vst [vmem:[%s237 + $0x940] sm:$0xff] %v2597
        %3622 = vst [vmem:[%s237 + $0x948] sm:$0xff] %v2598
        %3623 = vst [vmem:[%s237 + $0x950] sm:$0xff] %v2599
        %3624 = vst [vmem:[%s237 + $0x958] sm:$0xff] %v2600
        %3625 = vst [vmem:[%s237 + $0x960] sm:$0xff] %v2601
        %3626 = vst [vmem:[%s237 + $0x968] sm:$0xff] %v2602
        %3627 = vst [vmem:[%s237 + $0x970] sm:$0xff] %v2603
        %3628 = vst [vmem:[%s237 + $0x978] sm:$0xff] %v2604
        %3629 = vst [vmem:[%s237 + $0x980] sm:$0xff] %v2605
        %3630 = vst [vmem:[%s237 + $0x988] sm:$0xff] %v2606
        %3631 = vst [vmem:[%s237 + $0x990] sm:$0xff] %v2607
        %3632 = vst [vmem:[%s237 + $0x998] sm:$0xff] %v2608
        %3633 = vst [vmem:[%s237 + $0x9a0] sm:$0xff] %v2609
        %3634 = vst [vmem:[%s237 + $0x9a8] sm:$0xff] %v2610
        %3635 = vst [vmem:[%s237 + $0x9b0] sm:$0xff] %v2611
        %3636 = vst [vmem:[%s237 + $0x9b8] sm:$0xff] %v2612
        %3637 = vst [vmem:[%s237 + $0x9c0] sm:$0xff] %v2613
        %3638 = vst [vmem:[%s237 + $0x9c8] sm:$0xff] %v2614
        %3639 = vst [vmem:[%s237 + $0x9d0] sm:$0xff] %v2615
        %3640 = vst [vmem:[%s237 + $0x9d8] sm:$0xff] %v2616
        %3641 = vst [vmem:[%s237 + $0x9e0] sm:$0xff] %v2617
        %3642 = vst [vmem:[%s237 + $0x9e8] sm:$0xff] %v2618
        %3643 = vst [vmem:[%s237 + $0x9f0] sm:$0xff] %v2619
        %3644 = vst [vmem:[%s237 + $0x9f8] sm:$0xff] %v2620
        %3645 = vst [vmem:[%s237 + $0xa00] sm:$0xff] %v2621
        %3646 = vst [vmem:[%s237 + $0xa08] sm:$0xff] %v2622
        %3647 = vst [vmem:[%s237 + $0xa10] sm:$0xff] %v2623
        %3648 = vst [vmem:[%s237 + $0xa18] sm:$0xff] %v2624
        %3649 = vst [vmem:[%s237 + $0xa20] sm:$0xff] %v2625
        %3650 = vst [vmem:[%s237 + $0xa28] sm:$0xff] %v2626
        %3651 = vst [vmem:[%s237 + $0xa30] sm:$0xff] %v2627
        %3652 = vst [vmem:[%s237 + $0xa38] sm:$0xff] %v2628
        %3653 = vst [vmem:[%s237 + $0xa40] sm:$0xff] %v2629
        %3654 = vst [vmem:[%s237 + $0xa48] sm:$0xff] %v2630
        %3655 = vst [vmem:[%s237 + $0xa50] sm:$0xff] %v2631
        %3656 = vst [vmem:[%s237 + $0xa58] sm:$0xff] %v2632
        %3657 = vst [vmem:[%s237 + $0xa60] sm:$0xff] %v2633
        %3658 = vst [vmem:[%s237 + $0xa68] sm:$0xff] %v2634
        %3659 = vst [vmem:[%s237 + $0xa70] sm:$0xff] %v2635
        %3660 = vst [vmem:[%s237 + $0xa78] sm:$0xff] %v2636
        %3661 = vst [vmem:[%s237 + $0xa80] sm:$0xff] %v2637
        %3662 = vst [vmem:[%s237 + $0xa88] sm:$0xff] %v2638
        %3663 = vst [vmem:[%s237 + $0xa90] sm:$0xff] %v2639
        %3664 = vst [vmem:[%s237 + $0xa98] sm:$0xff] %v2640
        %3665 = vst [vmem:[%s237 + $0xaa0] sm:$0xff] %v2641
        %3666 = vst [vmem:[%s237 + $0xaa8] sm:$0xff] %v2642
        %3667 = vst [vmem:[%s237 + $0xab0] sm:$0xff] %v2643
        %3668 = vst [vmem:[%s237 + $0xab8] sm:$0xff] %v2644
        %3669 = vst [vmem:[%s237 + $0xac0] sm:$0xff] %v2645
        %3670 = vst [vmem:[%s237 + $0xac8] sm:$0xff] %v2646
        %3671 = vst [vmem:[%s237 + $0xad0] sm:$0xff] %v2647
        %3672 = vst [vmem:[%s237 + $0xad8] sm:$0xff] %v2648
        %3673 = vst [vmem:[%s237 + $0xae0] sm:$0xff] %v2649
        %3674 = vst [vmem:[%s237 + $0xae8] sm:$0xff] %v2650
        %3675 = vst [vmem:[%s237 + $0xaf0] sm:$0xff] %v2651
        %3676 = vst [vmem:[%s237 + $0xaf8] sm:$0xff] %v2652
        %3677 = vst [vmem:[%s237 + $0xb00] sm:$0xff] %v2653
        %3678 = vst [vmem:[%s237 + $0xb08] sm:$0xff] %v2654
        %3679 = vst [vmem:[%s237 + $0xb10] sm:$0xff] %v2655
        %3680 = vst [vmem:[%s237 + $0xb18] sm:$0xff] %v2656
        %3681 = vst [vmem:[%s237 + $0xb20] sm:$0xff] %v2657
        %3682 = vst [vmem:[%s237 + $0xb28] sm:$0xff] %v2658
        %3683 = vst [vmem:[%s237 + $0xb30] sm:$0xff] %v2659
        %3684 = vst [vmem:[%s237 + $0xb38] sm:$0xff] %v2660
        %3685 = vst [vmem:[%s237 + $0xb40] sm:$0xff] %v2661
        %3686 = vst [vmem:[%s237 + $0xb48] sm:$0xff] %v2662
        %3687 = vst [vmem:[%s237 + $0xb50] sm:$0xff] %v2663
        %3688 = vst [vmem:[%s237 + $0xb58] sm:$0xff] %v2664
        %3689 = vst [vmem:[%s237 + $0xb60] sm:$0xff] %v2665
        %3690 = vst [vmem:[%s237 + $0xb68] sm:$0xff] %v2666
        %3691 = vst [vmem:[%s237 + $0xb70] sm:$0xff] %v2667
        %3692 = vst [vmem:[%s237 + $0xb78] sm:$0xff] %v2668
        %3693 = vst [vmem:[%s237 + $0xb80] sm:$0xff] %v2669
        %3694 = vst [vmem:[%s237 + $0xb88] sm:$0xff] %v2670
        %3695 = vst [vmem:[%s237 + $0xb90] sm:$0xff] %v2671
        %3696 = vst [vmem:[%s237 + $0xb98] sm:$0xff] %v2672
        %3697 = vst [vmem:[%s237 + $0xba0] sm:$0xff] %v2673
        %3698 = vst [vmem:[%s237 + $0xba8] sm:$0xff] %v2674
        %3699 = vst [vmem:[%s237 + $0xbb0] sm:$0xff] %v2675
        %3700 = vst [vmem:[%s237 + $0xbb8] sm:$0xff] %v2676
        %3701 = vst [vmem:[%s237 + $0xbc0] sm:$0xff] %v2677
        %3702 = vst [vmem:[%s237 + $0xbc8] sm:$0xff] %v2678
        %3703 = vst [vmem:[%s237 + $0xbd0] sm:$0xff] %v2679
        %3704 = vst [vmem:[%s237 + $0xbd8] sm:$0xff] %v2680
        %3705 = vst [vmem:[%s237 + $0xbe0] sm:$0xff] %v2681
        %3706 = vst [vmem:[%s237 + $0xbe8] sm:$0xff] %v2682
        %3707 = vst [vmem:[%s237 + $0xbf0] sm:$0xff] %v2683
        %3708 = vst [vmem:[%s237 + $0xbf8] sm:$0xff] %v2684
        %3709 = vst [vmem:[%s237 + $0xc00] sm:$0xff] %v2685
        %3710 = vst [vmem:[%s237 + $0xc08] sm:$0xff] %v2686
        %3711 = vst [vmem:[%s237 + $0xc10] sm:$0xff] %v2687
        %3712 = vst [vmem:[%s237 + $0xc18] sm:$0xff] %v2688
        %3713 = vst [vmem:[%s237 + $0xc20] sm:$0xff] %v2689
        %3714 = vst [vmem:[%s237 + $0xc28] sm:$0xff] %v2690
        %3715 = vst [vmem:[%s237 + $0xc30] sm:$0xff] %v2691
        %3716 = vst [vmem:[%s237 + $0xc38] sm:$0xff] %v2692
        %3717 = vst [vmem:[%s237 + $0xc40] sm:$0xff] %v2693
        %3718 = vst [vmem:[%s237 + $0xc48] sm:$0xff] %v2694
        %3719 = vst [vmem:[%s237 + $0xc50] sm:$0xff] %v2695
        %3720 = vst [vmem:[%s237 + $0xc58] sm:$0xff] %v2696
        %3721 = vst [vmem:[%s237 + $0xc60] sm:$0xff] %v2697
        %3722 = vst [vmem:[%s237 + $0xc68] sm:$0xff] %v2698
        %3723 = vst [vmem:[%s237 + $0xc70] sm:$0xff] %v2699
        %3724 = vst [vmem:[%s237 + $0xc78] sm:$0xff] %v2700
        %3725 = vst [vmem:[%s237 + $0xc80] sm:$0xff] %v2701
        %3726 = vst [vmem:[%s237 + $0xc88] sm:$0xff] %v2702
        %3727 = vst [vmem:[%s237 + $0xc90] sm:$0xff] %v2703
        %3728 = vst [vmem:[%s237 + $0xc98] sm:$0xff] %v2704
        %3729 = vst [vmem:[%s237 + $0xca0] sm:$0xff] %v2705
        %3730 = vst [vmem:[%s237 + $0xca8] sm:$0xff] %v2706
        %3731 = vst [vmem:[%s237 + $0xcb0] sm:$0xff] %v2707
        %3732 = vst [vmem:[%s237 + $0xcb8] sm:$0xff] %v2708
        %3733 = vst [vmem:[%s237 + $0xcc0] sm:$0xff] %v2709
        %3734 = vst [vmem:[%s237 + $0xcc8] sm:$0xff] %v2710
        %3735 = vst [vmem:[%s237 + $0xcd0] sm:$0xff] %v2711
        %3736 = vst [vmem:[%s237 + $0xcd8] sm:$0xff] %v2712
        %3737 = vst [vmem:[%s237 + $0xce0] sm:$0xff] %v2713
        %3738 = vst [vmem:[%s237 + $0xce8] sm:$0xff] %v2714
        %3739 = vst [vmem:[%s237 + $0xcf0] sm:$0xff] %v2715
        %3740 = vst [vmem:[%s237 + $0xcf8] sm:$0xff] %v2716
        %3741 = vst [vmem:[%s237 + $0xd00] sm:$0xff] %v2717
        %3742 = vst [vmem:[%s237 + $0xd08] sm:$0xff] %v2718
        %3743 = vst [vmem:[%s237 + $0xd10] sm:$0xff] %v2719
        %3744 = vst [vmem:[%s237 + $0xd18] sm:$0xff] %v2720
        %3745 = vst [vmem:[%s237 + $0xd20] sm:$0xff] %v2721
        %3746 = vst [vmem:[%s237 + $0xd28] sm:$0xff] %v2722
        %3747 = vst [vmem:[%s237 + $0xd30] sm:$0xff] %v2723
        %3748 = vst [vmem:[%s237 + $0xd38] sm:$0xff] %v2724
        %3749 = vst [vmem:[%s237 + $0xd40] sm:$0xff] %v2725
        %3750 = vst [vmem:[%s237 + $0xd48] sm:$0xff] %v2726
        %3751 = vst [vmem:[%s237 + $0xd50] sm:$0xff] %v2727
        %3752 = vst [vmem:[%s237 + $0xd58] sm:$0xff] %v2728
        %3753 = vst [vmem:[%s237 + $0xd60] sm:$0xff] %v2729
        %3754 = vst [vmem:[%s237 + $0xd68] sm:$0xff] %v2730
        %3755 = vst [vmem:[%s237 + $0xd70] sm:$0xff] %v2731
        %3756 = vst [vmem:[%s237 + $0xd78] sm:$0xff] %v2732
        %3757 = vst [vmem:[%s237 + $0xd80] sm:$0xff] %v2733
        %3758 = vst [vmem:[%s237 + $0xd88] sm:$0xff] %v2734
        %3759 = vst [vmem:[%s237 + $0xd90] sm:$0xff] %v2735
        %3760 = vst [vmem:[%s237 + $0xd98] sm:$0xff] %v2736
        %3761 = vst [vmem:[%s237 + $0xda0] sm:$0xff] %v2737
        %3762 = vst [vmem:[%s237 + $0xda8] sm:$0xff] %v2738
        %3763 = vst [vmem:[%s237 + $0xdb0] sm:$0xff] %v2739
        %3764 = vst [vmem:[%s237 + $0xdb8] sm:$0xff] %v2740
        %3765 = vst [vmem:[%s237 + $0xdc0] sm:$0xff] %v2741
        %3766 = vst [vmem:[%s237 + $0xdc8] sm:$0xff] %v2742
        %3767 = vst [vmem:[%s237 + $0xdd0] sm:$0xff] %v2743
        %3768 = vst [vmem:[%s237 + $0xdd8] sm:$0xff] %v2744
        %3769 = vst [vmem:[%s237 + $0xde0] sm:$0xff] %v2745
        %3770 = vst [vmem:[%s237 + $0xde8] sm:$0xff] %v2746
        %3771 = vst [vmem:[%s237 + $0xdf0] sm:$0xff] %v2747
        %3772 = vst [vmem:[%s237 + $0xdf8] sm:$0xff] %v2748
        %3773 = vst [vmem:[%s237 + $0xe00] sm:$0xff] %v2749
        %3774 = vst [vmem:[%s237 + $0xe08] sm:$0xff] %v2750
        %3775 = vst [vmem:[%s237 + $0xe10] sm:$0xff] %v2751
        %3776 = vst [vmem:[%s237 + $0xe18] sm:$0xff] %v2752
        %3777 = vst [vmem:[%s237 + $0xe20] sm:$0xff] %v2753
        %3778 = vst [vmem:[%s237 + $0xe28] sm:$0xff] %v2754
        %3779 = vst [vmem:[%s237 + $0xe30] sm:$0xff] %v2755
        %3780 = vst [vmem:[%s237 + $0xe38] sm:$0xff] %v2756
        %3781 = vst [vmem:[%s237 + $0xe40] sm:$0xff] %v2757
        %3782 = vst [vmem:[%s237 + $0xe48] sm:$0xff] %v2758
        %3783 = vst [vmem:[%s237 + $0xe50] sm:$0xff] %v2759
        %3784 = vst [vmem:[%s237 + $0xe58] sm:$0xff] %v2760
        %3785 = vst [vmem:[%s237 + $0xe60] sm:$0xff] %v2761
        %3786 = vst [vmem:[%s237 + $0xe68] sm:$0xff] %v2762
        %3787 = vst [vmem:[%s237 + $0xe70] sm:$0xff] %v2763
        %3788 = vst [vmem:[%s237 + $0xe78] sm:$0xff] %v2764
        %3789 = vst [vmem:[%s237 + $0xe80] sm:$0xff] %v2765
        %3790 = vst [vmem:[%s237 + $0xe88] sm:$0xff] %v2766
        %3791 = vst [vmem:[%s237 + $0xe90] sm:$0xff] %v2767
        %3792 = vst [vmem:[%s237 + $0xe98] sm:$0xff] %v2768
        %3793 = vst [vmem:[%s237 + $0xea0] sm:$0xff] %v2769
        %3794 = vst [vmem:[%s237 + $0xea8] sm:$0xff] %v2770
        %3795 = vst [vmem:[%s237 + $0xeb0] sm:$0xff] %v2771
        %3796 = vst [vmem:[%s237 + $0xeb8] sm:$0xff] %v2772
        %3797 = vst [vmem:[%s237 + $0xec0] sm:$0xff] %v2773
        %3798 = vst [vmem:[%s237 + $0xec8] sm:$0xff] %v2774
        %3799 = vst [vmem:[%s237 + $0xed0] sm:$0xff] %v2775
        %3800 = vst [vmem:[%s237 + $0xed8] sm:$0xff] %v2776
        %3801 = vst [vmem:[%s237 + $0xee0] sm:$0xff] %v2777
        %3802 = vst [vmem:[%s237 + $0xee8] sm:$0xff] %v2778
        %3803 = vst [vmem:[%s237 + $0xef0] sm:$0xff] %v2779
        %3804 = vst [vmem:[%s237 + $0xef8] sm:$0xff] %v2780
        %3805 = vst [vmem:[%s237 + $0xf00] sm:$0xff] %v2781
        %3806 = vst [vmem:[%s237 + $0xf08] sm:$0xff] %v2782
        %3807 = vst [vmem:[%s237 + $0xf10] sm:$0xff] %v2783
        %3808 = vst [vmem:[%s237 + $0xf18] sm:$0xff] %v2784
        %3809 = vst [vmem:[%s237 + $0xf20] sm:$0xff] %v2785
        %3810 = vst [vmem:[%s237 + $0xf28] sm:$0xff] %v2786
        %3811 = vst [vmem:[%s237 + $0xf30] sm:$0xff] %v2787
        %3812 = vst [vmem:[%s237 + $0xf38] sm:$0xff] %v2788
        %3813 = vst [vmem:[%s237 + $0xf40] sm:$0xff] %v2789
        %3814 = vst [vmem:[%s237 + $0xf48] sm:$0xff] %v2790
        %3815 = vst [vmem:[%s237 + $0xf50] sm:$0xff] %v2791
        %3816 = vst [vmem:[%s237 + $0xf58] sm:$0xff] %v2792
        %3817 = vst [vmem:[%s237 + $0xf60] sm:$0xff] %v2793
        %3818 = vst [vmem:[%s237 + $0xf68] sm:$0xff] %v2794
        %3819 = vst [vmem:[%s237 + $0xf70] sm:$0xff] %v2795
        %3820 = vst [vmem:[%s237 + $0xf78] sm:$0xff] %v2796
        %3821 = vst [vmem:[%s237 + $0xf80] sm:$0xff] %v2797
        %3822 = vst [vmem:[%s237 + $0xf88] sm:$0xff] %v2798
        %3823 = vst [vmem:[%s237 + $0xf90] sm:$0xff] %v2799
        %3824 = vst [vmem:[%s237 + $0xf98] sm:$0xff] %v2800
        %3825 = vst [vmem:[%s237 + $0xfa0] sm:$0xff] %v2801
        %3826 = vst [vmem:[%s237 + $0xfa8] sm:$0xff] %v2802
        %3827 = vst [vmem:[%s237 + $0xfb0] sm:$0xff] %v2803
        %3828 = vst [vmem:[%s237 + $0xfb8] sm:$0xff] %v2804
        %3829 = vst [vmem:[%s237 + $0xfc0] sm:$0xff] %v2805
        %3830 = vst [vmem:[%s237 + $0xfc8] sm:$0xff] %v2806
        %3831 = vst [vmem:[%s237 + $0xfd0] sm:$0xff] %v2807
        %3832 = vst [vmem:[%s237 + $0xfd8] sm:$0xff] %v2808
        %3833 = vst [vmem:[%s237 + $0xfe0] sm:$0xff] %v2809
        %3834 = vst [vmem:[%s237 + $0xfe8] sm:$0xff] %v2810
        %3835 = vst [vmem:[%s237 + $0xff0] sm:$0xff] %v2811
        %3836 = vst [vmem:[%s237 + $0xff8] sm:$0xff] %v2812
        %3837 = vst [vmem:[%s237 + $0x1000] sm:$0xff] %v2813
        %3838 = vst [vmem:[%s237 + $0x1008] sm:$0xff] %v2814
        %3839 = vst [vmem:[%s237 + $0x1010] sm:$0xff] %v2815
        %3840 = vst [vmem:[%s237 + $0x1018] sm:$0xff] %v2816
        %3841 = vst [vmem:[%s237 + $0x1020] sm:$0xff] %v2817
        %3842 = vst [vmem:[%s237 + $0x1028] sm:$0xff] %v2818
        %3843 = vst [vmem:[%s237 + $0x1030] sm:$0xff] %v2819
        %3844 = vst [vmem:[%s237 + $0x1038] sm:$0xff] %v2820
        %3845 = vst [vmem:[%s237 + $0x1040] sm:$0xff] %v2821
        %3846 = vst [vmem:[%s237 + $0x1048] sm:$0xff] %v2822
        %3847 = vst [vmem:[%s237 + $0x1050] sm:$0xff] %v2823
        %3848 = vst [vmem:[%s237 + $0x1058] sm:$0xff] %v2824
        %3849 = vst [vmem:[%s237 + $0x1060] sm:$0xff] %v2825
        %3850 = vst [vmem:[%s237 + $0x1068] sm:$0xff] %v2826
        %3851 = vst [vmem:[%s237 + $0x1070] sm:$0xff] %v2827
        %3852 = vst [vmem:[%s237 + $0x1078] sm:$0xff] %v2828
        %3853 = vst [vmem:[%s237 + $0x1080] sm:$0xff] %v2829
        %3854 = vst [vmem:[%s237 + $0x1088] sm:$0xff] %v2830
        %3855 = vst [vmem:[%s237 + $0x1090] sm:$0xff] %v2831
        %3856 = vst [vmem:[%s237 + $0x1098] sm:$0xff] %v2832
        %3857 = vst [vmem:[%s237 + $0x10a0] sm:$0xff] %v2833
        %3858 = vst [vmem:[%s237 + $0x10a8] sm:$0xff] %v2834
        %3859 = vst [vmem:[%s237 + $0x10b0] sm:$0xff] %v2835
        %3860 = vst [vmem:[%s237 + $0x10b8] sm:$0xff] %v2836
        %3861 = vst [vmem:[%s237 + $0x10c0] sm:$0xff] %v2837
        %3862 = vst [vmem:[%s237 + $0x10c8] sm:$0xff] %v2838
        %3863 = vst [vmem:[%s237 + $0x10d0] sm:$0xff] %v2839
        %3864 = vst [vmem:[%s237 + $0x10d8] sm:$0xff] %v2840
        %3865 = vst [vmem:[%s237 + $0x10e0] sm:$0xff] %v2841
        %3866 = vst [vmem:[%s237 + $0x10e8] sm:$0xff] %v2842
        %3867 = vst [vmem:[%s237 + $0x10f0] sm:$0xff] %v2843
        %3868 = vst [vmem:[%s237 + $0x10f8] sm:$0xff] %v2844
        %3869 = vst [vmem:[%s237 + $0x1100] sm:$0xff] %v2845
        %3870 = vst [vmem:[%s237 + $0x1108] sm:$0xff] %v2846
        %3871 = vst [vmem:[%s237 + $0x1110] sm:$0xff] %v2847
        %3872 = vst [vmem:[%s237 + $0x1118] sm:$0xff] %v2848
        %3873 = vst [vmem:[%s237 + $0x1120] sm:$0xff] %v2849
        %3874 = vst [vmem:[%s237 + $0x1128] sm:$0xff] %v2850
        %3875 = vst [vmem:[%s237 + $0x1130] sm:$0xff] %v2851
        %3876 = vst [vmem:[%s237 + $0x1138] sm:$0xff] %v2852
        %3877 = vst [vmem:[%s237 + $0x1140] sm:$0xff] %v2853
        %3878 = vst [vmem:[%s237 + $0x1148] sm:$0xff] %v2854
        %3879 = vst [vmem:[%s237 + $0x1150] sm:$0xff] %v2855
        %3880 = vst [vmem:[%s237 + $0x1158] sm:$0xff] %v2856
        %3881 = vst [vmem:[%s237 + $0x1160] sm:$0xff] %v2857
        %3882 = vst [vmem:[%s237 + $0x1168] sm:$0xff] %v2858
        %3883 = vst [vmem:[%s237 + $0x1170] sm:$0xff] %v2859
        %3884 = vst [vmem:[%s237 + $0x1178] sm:$0xff] %v2860
        %3885 = vst [vmem:[%s237 + $0x1180] sm:$0xff] %v2861
        %3886 = vst [vmem:[%s237 + $0x1188] sm:$0xff] %v2862
        %3887 = vst [vmem:[%s237 + $0x1190] sm:$0xff] %v2863
        %3888 = vst [vmem:[%s237 + $0x1198] sm:$0xff] %v2864
        %3889 = vst [vmem:[%s237 + $0x11a0] sm:$0xff] %v2865
        %3890 = vst [vmem:[%s237 + $0x11a8] sm:$0xff] %v2866
        %3891 = vst [vmem:[%s237 + $0x11b0] sm:$0xff] %v2867
        %3892 = vst [vmem:[%s237 + $0x11b8] sm:$0xff] %v2868
        %3893 = vst [vmem:[%s237 + $0x11c0] sm:$0xff] %v2869
        %3894 = vst [vmem:[%s237 + $0x11c8] sm:$0xff] %v2870
        %3895 = vst [vmem:[%s237 + $0x11d0] sm:$0xff] %v2871
        %3896 = vst [vmem:[%s237 + $0x11d8] sm:$0xff] %v2872
        %3897 = vst [vmem:[%s237 + $0x11e0] sm:$0xff] %v2873
        %3898 = vst [vmem:[%s237 + $0x11e8] sm:$0xff] %v2874
        %3899 = vst [vmem:[%s237 + $0x11f0] sm:$0xff] %v2875
        %3900 = vst [vmem:[%s237 + $0x11f8] sm:$0xff] %v2876
        %3901 = vst [vmem:[%s237 + $0x1200] sm:$0xff] %v2877
        %3902 = vst [vmem:[%s237 + $0x1208] sm:$0xff] %v2878
        %3903 = vst [vmem:[%s237 + $0x1210] sm:$0xff] %v2879
        %3904 = vst [vmem:[%s237 + $0x1218] sm:$0xff] %v2880
        %3905 = vst [vmem:[%s237 + $0x1220] sm:$0xff] %v2881
        %3906 = vst [vmem:[%s237 + $0x1228] sm:$0xff] %v2882
        %3907 = vst [vmem:[%s237 + $0x1230] sm:$0xff] %v2883
        %3908 = vst [vmem:[%s237 + $0x1238] sm:$0xff] %v2884
        %3909 = vst [vmem:[%s237 + $0x1240] sm:$0xff] %v2885
        %3910 = vst [vmem:[%s237 + $0x1248] sm:$0xff] %v2886
        %3911 = vst [vmem:[%s237 + $0x1250] sm:$0xff] %v2887
        %3912 = vst [vmem:[%s237 + $0x1258] sm:$0xff] %v2888
        %3913 = vst [vmem:[%s237 + $0x1260] sm:$0xff] %v2889
        %3914 = vst [vmem:[%s237 + $0x1268] sm:$0xff] %v2890
        %3915 = vst [vmem:[%s237 + $0x1270] sm:$0xff] %v2891
        %3916 = vst [vmem:[%s237 + $0x1278] sm:$0xff] %v2892
        %3917 = vst [vmem:[%s237 + $0x1280] sm:$0xff] %v2893
        %3918 = vst [vmem:[%s237 + $0x1288] sm:$0xff] %v2894
        %3919 = vst [vmem:[%s237 + $0x1290] sm:$0xff] %v2895
        %3920 = vst [vmem:[%s237 + $0x1298] sm:$0xff] %v2896
        %3921 = vst [vmem:[%s237 + $0x12a0] sm:$0xff] %v2897
        %3922 = vst [vmem:[%s237 + $0x12a8] sm:$0xff] %v2898
        %3923 = vst [vmem:[%s237 + $0x12b0] sm:$0xff] %v2899
        %3924 = vst [vmem:[%s237 + $0x12b8] sm:$0xff] %v2900
        %3925 = vst [vmem:[%s237 + $0x12c0] sm:$0xff] %v2901
        %3926 = vst [vmem:[%s237 + $0x12c8] sm:$0xff] %v2902
        %3927 = vst [vmem:[%s237 + $0x12d0] sm:$0xff] %v2903
        %3928 = vst [vmem:[%s237 + $0x12d8] sm:$0xff] %v2904
        %3929 = vst [vmem:[%s237 + $0x12e0] sm:$0xff] %v2905
        %3930 = vst [vmem:[%s237 + $0x12e8] sm:$0xff] %v2906
        %3931 = vst [vmem:[%s237 + $0x12f0] sm:$0xff] %v2907
        %3932 = vst [vmem:[%s237 + $0x12f8] sm:$0xff] %v2908
        %3933 = vst [vmem:[%s237 + $0x1300] sm:$0xff] %v2909
        %3934 = vst [vmem:[%s237 + $0x1308] sm:$0xff] %v2910
        %3935 = vst [vmem:[%s237 + $0x1310] sm:$0xff] %v2911
        %3936 = vst [vmem:[%s237 + $0x1318] sm:$0xff] %v2912
        %3937 = vst [vmem:[%s237 + $0x1320] sm:$0xff] %v2913
        %3938 = vst [vmem:[%s237 + $0x1328] sm:$0xff] %v2914
        %3939 = vst [vmem:[%s237 + $0x1330] sm:$0xff] %v2915
        %3940 = vst [vmem:[%s237 + $0x1338] sm:$0xff] %v2916
        %3941 = vst [vmem:[%s237 + $0x1340] sm:$0xff] %v2917
        %3942 = vst [vmem:[%s237 + $0x1348] sm:$0xff] %v2918
        %3943 = vst [vmem:[%s237 + $0x1350] sm:$0xff] %v2919
        %3944 = vst [vmem:[%s237 + $0x1358] sm:$0xff] %v2920
        %3945 = vst [vmem:[%s237 + $0x1360] sm:$0xff] %v2921
        %3946 = vst [vmem:[%s237 + $0x1368] sm:$0xff] %v2922
        %3947 = vst [vmem:[%s237 + $0x1370] sm:$0xff] %v2923
        %3948 = vst [vmem:[%s237 + $0x1378] sm:$0xff] %v2924
        %3949 = vst [vmem:[%s237 + $0x1380] sm:$0xff] %v2925
        %3950 = vst [vmem:[%s237 + $0x1388] sm:$0xff] %v2926
        %3951 = vst [vmem:[%s237 + $0x1390] sm:$0xff] %v2927
        %3952 = vst [vmem:[%s237 + $0x1398] sm:$0xff] %v2928
        %3953 = vst [vmem:[%s237 + $0x13a0] sm:$0xff] %v2929
        %3954 = vst [vmem:[%s237 + $0x13a8] sm:$0xff] %v2930
        %3955 = vst [vmem:[%s237 + $0x13b0] sm:$0xff] %v2931
        %3956 = vst [vmem:[%s237 + $0x13b8] sm:$0xff] %v2932
        %3957 = vst [vmem:[%s237 + $0x13c0] sm:$0xff] %v2933
        %3958 = vst [vmem:[%s237 + $0x13c8] sm:$0xff] %v2934
        %3959 = vst [vmem:[%s237 + $0x13d0] sm:$0xff] %v2935
        %3960 = vst [vmem:[%s237 + $0x13d8] sm:$0xff] %v2936
        %3961 = vst [vmem:[%s237 + $0x13e0] sm:$0xff] %v2937
        %3962 = vst [vmem:[%s237 + $0x13e8] sm:$0xff] %v2938
        %3963 = vst [vmem:[%s237 + $0x13f0] sm:$0xff] %v2939
        %3964 = vst [vmem:[%s237 + $0x13f8] sm:$0xff] %v2940
        %3965 = vst [vmem:[%s237 + $0x1400] sm:$0xff] %v2941
        %3966 = vst [vmem:[%s237 + $0x1408] sm:$0xff] %v2942
        %3967 = vst [vmem:[%s237 + $0x1410] sm:$0xff] %v2943
        %3968 = vst [vmem:[%s237 + $0x1418] sm:$0xff] %v2944
        %3969 = vst [vmem:[%s237 + $0x1420] sm:$0xff] %v2945
        %3970 = vst [vmem:[%s237 + $0x1428] sm:$0xff] %v2946
        %3971 = vst [vmem:[%s237 + $0x1430] sm:$0xff] %v2947
        %3972 = vst [vmem:[%s237 + $0x1438] sm:$0xff] %v2948
        %3973 = vst [vmem:[%s237 + $0x1440] sm:$0xff] %v2949
        %3974 = vst [vmem:[%s237 + $0x1448] sm:$0xff] %v2950
        %3975 = vst [vmem:[%s237 + $0x1450] sm:$0xff] %v2951
        %3976 = vst [vmem:[%s237 + $0x1458] sm:$0xff] %v2952
        %3977 = vst [vmem:[%s237 + $0x1460] sm:$0xff] %v2953
        %3978 = vst [vmem:[%s237 + $0x1468] sm:$0xff] %v2954
        %3979 = vst [vmem:[%s237 + $0x1470] sm:$0xff] %v2955
        %3980 = vst [vmem:[%s237 + $0x1478] sm:$0xff] %v2956
        %3981 = vst [vmem:[%s237 + $0x1480] sm:$0xff] %v2957
        %3982 = vst [vmem:[%s237 + $0x1488] sm:$0xff] %v2958
        %3983 = vst [vmem:[%s237 + $0x1490] sm:$0xff] %v2959
        %3984 = vst [vmem:[%s237 + $0x1498] sm:$0xff] %v2960
        %3985 = vst [vmem:[%s237 + $0x14a0] sm:$0xff] %v2961
        %3986 = vst [vmem:[%s237 + $0x14a8] sm:$0xff] %v2962
        %3987 = vst [vmem:[%s237 + $0x14b0] sm:$0xff] %v2963
        %3988 = vst [vmem:[%s237 + $0x14b8] sm:$0xff] %v2964
        %3989 = vst [vmem:[%s237 + $0x14c0] sm:$0xff] %v2965
        %3990 = vst [vmem:[%s237 + $0x14c8] sm:$0xff] %v2966
        %3991 = vst [vmem:[%s237 + $0x14d0] sm:$0xff] %v2967
        %3992 = vst [vmem:[%s237 + $0x14d8] sm:$0xff] %v2968
        %3993 = vst [vmem:[%s237 + $0x14e0] sm:$0xff] %v2969
        %3994 = vst [vmem:[%s237 + $0x14e8] sm:$0xff] %v2970
        %3995 = vst [vmem:[%s237 + $0x14f0] sm:$0xff] %v2971
        %3996 = vst [vmem:[%s237 + $0x14f8] sm:$0xff] %v2972
        %3997 = vst [vmem:[%s237 + $0x1500] sm:$0xff] %v2973
        %3998 = vst [vmem:[%s237 + $0x1508] sm:$0xff] %v2974
        %3999 = vst [vmem:[%s237 + $0x1510] sm:$0xff] %v2975
        %4000 = vst [vmem:[%s237 + $0x1518] sm:$0xff] %v2976
        %4001 = vst [vmem:[%s237 + $0x1520] sm:$0xff] %v2977
        %4002 = vst [vmem:[%s237 + $0x1528] sm:$0xff] %v2978
        %4003 = vst [vmem:[%s237 + $0x1530] sm:$0xff] %v2979
        %4004 = vst [vmem:[%s237 + $0x1538] sm:$0xff] %v2980
        %4005 = vst [vmem:[%s237 + $0x1540] sm:$0xff] %v2981
        %4006 = vst [vmem:[%s237 + $0x1548] sm:$0xff] %v2982
        %4007 = vst [vmem:[%s237 + $0x1550] sm:$0xff] %v2983
        %4008 = vst [vmem:[%s237 + $0x1558] sm:$0xff] %v2984
        %4009 = vst [vmem:[%s237 + $0x1560] sm:$0xff] %v2985
        %4010 = vst [vmem:[%s237 + $0x1568] sm:$0xff] %v2986
        %4011 = vst [vmem:[%s237 + $0x1570] sm:$0xff] %v2987
        %4012 = vst [vmem:[%s237 + $0x1578] sm:$0xff] %v2988
        %4013 = vst [vmem:[%s237 + $0x1580] sm:$0xff] %v2989
        %4014 = vst [vmem:[%s237 + $0x1588] sm:$0xff] %v2990
        %4015 = vst [vmem:[%s237 + $0x1590] sm:$0xff] %v2991
        %4016 = vst [vmem:[%s237 + $0x1598] sm:$0xff] %v2992
        %4017 = vst [vmem:[%s237 + $0x15a0] sm:$0xff] %v2993
        %4018 = vst [vmem:[%s237 + $0x15a8] sm:$0xff] %v2994
        %4019 = vst [vmem:[%s237 + $0x15b0] sm:$0xff] %v2995
        %4020 = vst [vmem:[%s237 + $0x15b8] sm:$0xff] %v2996
        %4021 = vst [vmem:[%s237 + $0x15c0] sm:$0xff] %v2997
        %4022 = vst [vmem:[%s237 + $0x15c8] sm:$0xff] %v2998
        %4023 = vst [vmem:[%s237 + $0x15d0] sm:$0xff] %v2999
        %4024 = vst [vmem:[%s237 + $0x15d8] sm:$0xff] %v3000
        %4025 = vst [vmem:[%s237 + $0x15e0] sm:$0xff] %v3001
        %4026 = vst [vmem:[%s237 + $0x15e8] sm:$0xff] %v3002
        %4027 = vst [vmem:[%s237 + $0x15f0] sm:$0xff] %v3003
        %4028 = vst [vmem:[%s237 + $0x15f8] sm:$0xff] %v3004
        %4029 = vst [vmem:[%s237 + $0x1600] sm:$0xff] %v3005
        %4030 = vst [vmem:[%s237 + $0x1608] sm:$0xff] %v3006
        %4031 = vst [vmem:[%s237 + $0x1610] sm:$0xff] %v3007
        %4032 = vst [vmem:[%s237 + $0x1618] sm:$0xff] %v3008
        %4033 = vst [vmem:[%s237 + $0x1620] sm:$0xff] %v3009
        %4034 = vst [vmem:[%s237 + $0x1628] sm:$0xff] %v3010
        %4035 = vst [vmem:[%s237 + $0x1630] sm:$0xff] %v3011
        %4036 = vst [vmem:[%s237 + $0x1638] sm:$0xff] %v3012
        %4037 = vst [vmem:[%s237 + $0x1640] sm:$0xff] %v3013
        %4038 = vst [vmem:[%s237 + $0x1648] sm:$0xff] %v3014
        %4039 = vst [vmem:[%s237 + $0x1650] sm:$0xff] %v3015
        %4040 = vst [vmem:[%s237 + $0x1658] sm:$0xff] %v3016
        %4041 = vst [vmem:[%s237 + $0x1660] sm:$0xff] %v3017
        %4042 = vst [vmem:[%s237 + $0x1668] sm:$0xff] %v3018
        %4043 = vst [vmem:[%s237 + $0x1670] sm:$0xff] %v3019
        %4044 = vst [vmem:[%s237 + $0x1678] sm:$0xff] %v3020
        %4045 = vst [vmem:[%s237 + $0x1680] sm:$0xff] %v3021
        %4046 = vst [vmem:[%s237 + $0x1688] sm:$0xff] %v3022
        %4047 = vst [vmem:[%s237 + $0x1690] sm:$0xff] %v3023
        %4048 = vst [vmem:[%s237 + $0x1698] sm:$0xff] %v3024
        %4049 = vst [vmem:[%s237 + $0x16a0] sm:$0xff] %v3025
        %4050 = vst [vmem:[%s237 + $0x16a8] sm:$0xff] %v3026
        %4051 = vst [vmem:[%s237 + $0x16b0] sm:$0xff] %v3027
        %4052 = vst [vmem:[%s237 + $0x16b8] sm:$0xff] %v3028
        %4053 = vst [vmem:[%s237 + $0x16c0] sm:$0xff] %v3029
        %4054 = vst [vmem:[%s237 + $0x16c8] sm:$0xff] %v3030
        %4055 = vst [vmem:[%s237 + $0x16d0] sm:$0xff] %v3031
        %4056 = vst [vmem:[%s237 + $0x16d8] sm:$0xff] %v3032
        %4057 = vst [vmem:[%s237 + $0x16e0] sm:$0xff] %v3033
        %4058 = vst [vmem:[%s237 + $0x16e8] sm:$0xff] %v3034
        %4059 = vst [vmem:[%s237 + $0x16f0] sm:$0xff] %v3035
        %4060 = vst [vmem:[%s237 + $0x16f8] sm:$0xff] %v3036
        %4061 = vst [vmem:[%s237 + $0x1700] sm:$0xff] %v3037
        %4062 = vst [vmem:[%s237 + $0x1708] sm:$0xff] %v3038
        %4063 = vst [vmem:[%s237 + $0x1710] sm:$0xff] %v3039
        %4064 = vst [vmem:[%s237 + $0x1718] sm:$0xff] %v3040
        %4065 = vst [vmem:[%s237 + $0x1720] sm:$0xff] %v3041
        %4066 = vst [vmem:[%s237 + $0x1728] sm:$0xff] %v3042
        %4067 = vst [vmem:[%s237 + $0x1730] sm:$0xff] %v3043
        %4068 = vst [vmem:[%s237 + $0x1738] sm:$0xff] %v3044
        %4069 = vst [vmem:[%s237 + $0x1740] sm:$0xff] %v3045
        %4070 = vst [vmem:[%s237 + $0x1748] sm:$0xff] %v3046
        %4071 = vst [vmem:[%s237 + $0x1750] sm:$0xff] %v3047
        %4072 = vst [vmem:[%s237 + $0x1758] sm:$0xff] %v3048
        %4073 = vst [vmem:[%s237 + $0x1760] sm:$0xff] %v3049
        %4074 = vst [vmem:[%s237 + $0x1768] sm:$0xff] %v3050
        %4075 = vst [vmem:[%s237 + $0x1770] sm:$0xff] %v3051
        %4076 = vst [vmem:[%s237 + $0x1778] sm:$0xff] %v3052
        %4077 = vst [vmem:[%s237 + $0x1780] sm:$0xff] %v3053
        %4078 = vst [vmem:[%s237 + $0x1788] sm:$0xff] %v3054
        %4079 = vst [vmem:[%s237 + $0x1790] sm:$0xff] %v3055
        %4080 = vst [vmem:[%s237 + $0x1798] sm:$0xff] %v3056
        %4081 = vst [vmem:[%s237 + $0x17a0] sm:$0xff] %v3057
        %4082 = vst [vmem:[%s237 + $0x17a8] sm:$0xff] %v3058
        %4083 = vst [vmem:[%s237 + $0x17b0] sm:$0xff] %v3059
        %4084 = vst [vmem:[%s237 + $0x17b8] sm:$0xff] %v3060
        %4085 = vst [vmem:[%s237 + $0x17c0] sm:$0xff] %v3061
        %4086 = vst [vmem:[%s237 + $0x17c8] sm:$0xff] %v3062
        %4087 = vst [vmem:[%s237 + $0x17d0] sm:$0xff] %v3063
        %4088 = vst [vmem:[%s237 + $0x17d8] sm:$0xff] %v3064
        %4089 = vst [vmem:[%s237 + $0x17e0] sm:$0xff] %v3065
        %4090 = vst [vmem:[%s237 + $0x17e8] sm:$0xff] %v3066
        %4091 = vst [vmem:[%s237 + $0x17f0] sm:$0xff] %v3067
        %4092 = vst [vmem:[%s237 + $0x17f8] sm:$0xff] %v3068
        %4093 = vst [vmem:[%s237 + $0x1800] sm:$0xff] %v3069
        %4094 = vst [vmem:[%s237 + $0x1808] sm:$0xff] %v3070
        %4095 = vst [vmem:[%s237 + $0x1810] sm:$0xff] %v3071
        %4096 = vst [vmem:[%s237 + $0x1818] sm:$0xff] %v3072
        %4097 = vst [vmem:[%s237 + $0x1820] sm:$0xff] %v3073
        %4098 = vst [vmem:[%s237 + $0x1828] sm:$0xff] %v3074
        %4099 = vst [vmem:[%s237 + $0x1830] sm:$0xff] %v3075
        %4100 = vst [vmem:[%s237 + $0x1838] sm:$0xff] %v3076
        %4101 = vst [vmem:[%s237 + $0x1840] sm:$0xff] %v3077
        %4102 = vst [vmem:[%s237 + $0x1848] sm:$0xff] %v3078
        %4103 = vst [vmem:[%s237 + $0x1850] sm:$0xff] %v3079
        %4104 = vst [vmem:[%s237 + $0x1858] sm:$0xff] %v3080
        %4105 = vst [vmem:[%s237 + $0x1860] sm:$0xff] %v3081
        %4106 = vst [vmem:[%s237 + $0x1868] sm:$0xff] %v3082
        %4107 = vst [vmem:[%s237 + $0x1870] sm:$0xff] %v3083
        %4108 = vst [vmem:[%s237 + $0x1878] sm:$0xff] %v3084
        %4109 = vst [vmem:[%s237 + $0x1880] sm:$0xff] %v3085
        %4110 = vst [vmem:[%s237 + $0x1888] sm:$0xff] %v3086
        %4111 = vst [vmem:[%s237 + $0x1890] sm:$0xff] %v3087
        %4112 = vst [vmem:[%s237 + $0x1898] sm:$0xff] %v3088
        %4113 = vst [vmem:[%s237 + $0x18a0] sm:$0xff] %v3089
        %4114 = vst [vmem:[%s237 + $0x18a8] sm:$0xff] %v3090
        %4115 = vst [vmem:[%s237 + $0x18b0] sm:$0xff] %v3091
        %4116 = vst [vmem:[%s237 + $0x18b8] sm:$0xff] %v3092
        %4117 = vst [vmem:[%s237 + $0x18c0] sm:$0xff] %v3093
        %4118 = vst [vmem:[%s237 + $0x18c8] sm:$0xff] %v3094
        %4119 = vst [vmem:[%s237 + $0x18d0] sm:$0xff] %v3095
        %4120 = vst [vmem:[%s237 + $0x18d8] sm:$0xff] %v3096
        %4121 = vst [vmem:[%s237 + $0x18e0] sm:$0xff] %v3097
        %4122 = vst [vmem:[%s237 + $0x18e8] sm:$0xff] %v3098
        %4123 = vst [vmem:[%s237 + $0x18f0] sm:$0xff] %v3099
        %4124 = vst [vmem:[%s237 + $0x18f8] sm:$0xff] %v3100
        %4125 = vst [vmem:[%s237 + $0x1900] sm:$0xff] %v3101
        %4126 = vst [vmem:[%s237 + $0x1908] sm:$0xff] %v3102
        %4127 = vst [vmem:[%s237 + $0x1910] sm:$0xff] %v3103
        %4128 = vst [vmem:[%s237 + $0x1918] sm:$0xff] %v3104
        %4129 = vst [vmem:[%s237 + $0x1920] sm:$0xff] %v3105
        %4130 = vst [vmem:[%s237 + $0x1928] sm:$0xff] %v3106
        %4131 = vst [vmem:[%s237 + $0x1930] sm:$0xff] %v3107
        %4132 = vst [vmem:[%s237 + $0x1938] sm:$0xff] %v3108
        %4133 = vst [vmem:[%s237 + $0x1940] sm:$0xff] %v3109
        %4134 = vst [vmem:[%s237 + $0x1948] sm:$0xff] %v3110
        %4135 = vst [vmem:[%s237 + $0x1950] sm:$0xff] %v3111
        %4136 = vst [vmem:[%s237 + $0x1958] sm:$0xff] %v3112
        %4137 = vst [vmem:[%s237 + $0x1960] sm:$0xff] %v3113
        %4138 = vst [vmem:[%s237 + $0x1968] sm:$0xff] %v3114
        %4139 = vst [vmem:[%s237 + $0x1970] sm:$0xff] %v3115
        %4140 = vst [vmem:[%s237 + $0x1978] sm:$0xff] %v3116
        %4141 = vst [vmem:[%s237 + $0x1980] sm:$0xff] %v3117
        %4142 = vst [vmem:[%s237 + $0x1988] sm:$0xff] %v3118
        %4143 = vst [vmem:[%s237 + $0x1990] sm:$0xff] %v3119
        %4144 = vst [vmem:[%s237 + $0x1998] sm:$0xff] %v3120
        %4145 = vst [vmem:[%s237 + $0x19a0] sm:$0xff] %v3121
        %4146 = vst [vmem:[%s237 + $0x19a8] sm:$0xff] %v3122
        %4147 = vst [vmem:[%s237 + $0x19b0] sm:$0xff] %v3123
        %4148 = vst [vmem:[%s237 + $0x19b8] sm:$0xff] %v3124
        %4149 = vst [vmem:[%s237 + $0x19c0] sm:$0xff] %v3125
        %4150 = vst [vmem:[%s237 + $0x19c8] sm:$0xff] %v3126
        %4151 = vst [vmem:[%s237 + $0x19d0] sm:$0xff] %v3127
        %4152 = vst [vmem:[%s237 + $0x19d8] sm:$0xff] %v3128
        %4153 = vst [vmem:[%s237 + $0x19e0] sm:$0xff] %v3129
        %4154 = vst [vmem:[%s237 + $0x19e8] sm:$0xff] %v3130
        %4155 = vst [vmem:[%s237 + $0x19f0] sm:$0xff] %v3131
        %4156 = vst [vmem:[%s237 + $0x19f8] sm:$0xff] %v3132
        %4157 = vst [vmem:[%s237 + $0x1a00] sm:$0xff] %v3133
        %4158 = vst [vmem:[%s237 + $0x1a08] sm:$0xff] %v3134
        %4159 = vst [vmem:[%s237 + $0x1a10] sm:$0xff] %v3135
        %4160 = vst [vmem:[%s237 + $0x1a18] sm:$0xff] %v3136
        %4161 = vst [vmem:[%s237 + $0x1a20] sm:$0xff] %v3137
        %4162 = vst [vmem:[%s237 + $0x1a28] sm:$0xff] %v3138
        %4163 = vst [vmem:[%s237 + $0x1a30] sm:$0xff] %v3139
        %4164 = vst [vmem:[%s237 + $0x1a38] sm:$0xff] %v3140
        %4165 = vst [vmem:[%s237 + $0x1a40] sm:$0xff] %v3141
        %4166 = vst [vmem:[%s237 + $0x1a48] sm:$0xff] %v3142
        %4167 = vst [vmem:[%s237 + $0x1a50] sm:$0xff] %v3143
        %4168 = vst [vmem:[%s237 + $0x1a58] sm:$0xff] %v3144
        %4169 = vst [vmem:[%s237 + $0x1a60] sm:$0xff] %v3145
        %4170 = vst [vmem:[%s237 + $0x1a68] sm:$0xff] %v3146
        %4171 = vst [vmem:[%s237 + $0x1a70] sm:$0xff] %v3147
        %4172 = vst [vmem:[%s237 + $0x1a78] sm:$0xff] %v3148
        %4173 = vst [vmem:[%s237 + $0x1a80] sm:$0xff] %v3149
        %4174 = vst [vmem:[%s237 + $0x1a88] sm:$0xff] %v3150
        %4175 = vst [vmem:[%s237 + $0x1a90] sm:$0xff] %v3151
        %4176 = vst [vmem:[%s237 + $0x1a98] sm:$0xff] %v3152
        %4177 = vst [vmem:[%s237 + $0x1aa0] sm:$0xff] %v3153
        %4178 = vst [vmem:[%s237 + $0x1aa8] sm:$0xff] %v3154
        %4179 = vst [vmem:[%s237 + $0x1ab0] sm:$0xff] %v3155
        %4180 = vst [vmem:[%s237 + $0x1ab8] sm:$0xff] %v3156
        %4181 = vst [vmem:[%s237 + $0x1ac0] sm:$0xff] %v3157
        %4182 = vst [vmem:[%s237 + $0x1ac8] sm:$0xff] %v3158
        %4183 = vst [vmem:[%s237 + $0x1ad0] sm:$0xff] %v3159
        %4184 = vst [vmem:[%s237 + $0x1ad8] sm:$0xff] %v3160
        %4185 = vst [vmem:[%s237 + $0x1ae0] sm:$0xff] %v3161
        %4186 = vst [vmem:[%s237 + $0x1ae8] sm:$0xff] %v3162
        %4187 = vst [vmem:[%s237 + $0x1af0] sm:$0xff] %v3163
        %4188 = vst [vmem:[%s237 + $0x1af8] sm:$0xff] %v3164
        %4189 = vst [vmem:[%s237 + $0x1b00] sm:$0xff] %v3165
        %4190 = vst [vmem:[%s237 + $0x1b08] sm:$0xff] %v3166
        %4191 = vst [vmem:[%s237 + $0x1b10] sm:$0xff] %v3167
        %4192 = vst [vmem:[%s237 + $0x1b18] sm:$0xff] %v3168
        %4193 = vst [vmem:[%s237 + $0x1b20] sm:$0xff] %v3169
        %4194 = vst [vmem:[%s237 + $0x1b28] sm:$0xff] %v3170
        %4195 = vst [vmem:[%s237 + $0x1b30] sm:$0xff] %v3171
        %4196 = vst [vmem:[%s237 + $0x1b38] sm:$0xff] %v3172
        %4197 = vst [vmem:[%s237 + $0x1b40] sm:$0xff] %v3173
        %4198 = vst [vmem:[%s237 + $0x1b48] sm:$0xff] %v3174
        %4199 = vst [vmem:[%s237 + $0x1b50] sm:$0xff] %v3175
        %4200 = vst [vmem:[%s237 + $0x1b58] sm:$0xff] %v3176
        %4201 = vst [vmem:[%s237 + $0x1b60] sm:$0xff] %v3177
        %4202 = vst [vmem:[%s237 + $0x1b68] sm:$0xff] %v3178
        %4203 = vst [vmem:[%s237 + $0x1b70] sm:$0xff] %v3179
        %4204 = vst [vmem:[%s237 + $0x1b78] sm:$0xff] %v3180
        %4205 = vst [vmem:[%s237 + $0x1b80] sm:$0xff] %v3181
        %4206 = vst [vmem:[%s237 + $0x1b88] sm:$0xff] %v3182
        %4207 = vst [vmem:[%s237 + $0x1b90] sm:$0xff] %v3183
        %4208 = vst [vmem:[%s237 + $0x1b98] sm:$0xff] %v3184
        %4209 = vst [vmem:[%s237 + $0x1ba0] sm:$0xff] %v3185
        %4210 = vst [vmem:[%s237 + $0x1ba8] sm:$0xff] %v3186
        %4211 = vst [vmem:[%s237 + $0x1bb0] sm:$0xff] %v3187
        %4212 = vst [vmem:[%s237 + $0x1bb8] sm:$0xff] %v3188
        %4213 = vst [vmem:[%s237 + $0x1bc0] sm:$0xff] %v3189
        %4214 = vst [vmem:[%s237 + $0x1bc8] sm:$0xff] %v3190
        %4215 = vst [vmem:[%s237 + $0x1bd0] sm:$0xff] %v3191
        %4216 = vst [vmem:[%s237 + $0x1bd8] sm:$0xff] %v3192
        %4217 = vst [vmem:[%s237 + $0x1be0] sm:$0xff] %v3193
        %4218 = vst [vmem:[%s237 + $0x1be8] sm:$0xff] %v3194
        %4219 = vst [vmem:[%s237 + $0x1bf0] sm:$0xff] %v3195
        %4220 = vst [vmem:[%s237 + $0x1bf8] sm:$0xff] %v3196
        %4221 = vst [vmem:[%s237 + $0x1c00] sm:$0xff] %v3197
        %4222 = vst [vmem:[%s237 + $0x1c08] sm:$0xff] %v3198
        %4223 = vst [vmem:[%s237 + $0x1c10] sm:$0xff] %v3199
        %4224 = vst [vmem:[%s237 + $0x1c18] sm:$0xff] %v3200
        %4225 = vst [vmem:[%s237 + $0x1c20] sm:$0xff] %v3201
        %4226 = vst [vmem:[%s237 + $0x1c28] sm:$0xff] %v3202
        %4227 = vst [vmem:[%s237 + $0x1c30] sm:$0xff] %v3203
        %4228 = vst [vmem:[%s237 + $0x1c38] sm:$0xff] %v3204
        %4229 = vst [vmem:[%s237 + $0x1c40] sm:$0xff] %v3205
        %4230 = vst [vmem:[%s237 + $0x1c48] sm:$0xff] %v3206
        %4231 = vst [vmem:[%s237 + $0x1c50] sm:$0xff] %v3207
        %4232 = vst [vmem:[%s237 + $0x1c58] sm:$0xff] %v3208
        %4233 = vst [vmem:[%s237 + $0x1c60] sm:$0xff] %v3209
        %4234 = vst [vmem:[%s237 + $0x1c68] sm:$0xff] %v3210
        %4235 = vst [vmem:[%s237 + $0x1c70] sm:$0xff] %v3211
        %4236 = vst [vmem:[%s237 + $0x1c78] sm:$0xff] %v3212
        %4237 = vst [vmem:[%s237 + $0x1c80] sm:$0xff] %v3213
        %4238 = vst [vmem:[%s237 + $0x1c88] sm:$0xff] %v3214
        %4239 = vst [vmem:[%s237 + $0x1c90] sm:$0xff] %v3215
        %4240 = vst [vmem:[%s237 + $0x1c98] sm:$0xff] %v3216
        %4241 = vst [vmem:[%s237 + $0x1ca0] sm:$0xff] %v3217
        %4242 = vst [vmem:[%s237 + $0x1ca8] sm:$0xff] %v3218
        %4243 = vst [vmem:[%s237 + $0x1cb0] sm:$0xff] %v3219
        %4244 = vst [vmem:[%s237 + $0x1cb8] sm:$0xff] %v3220
        %4245 = vst [vmem:[%s237 + $0x1cc0] sm:$0xff] %v3221
        %4246 = vst [vmem:[%s237 + $0x1cc8] sm:$0xff] %v3222
        %4247 = vst [vmem:[%s237 + $0x1cd0] sm:$0xff] %v3223
        %4248 = vst [vmem:[%s237 + $0x1cd8] sm:$0xff] %v3224
        %4249 = vst [vmem:[%s237 + $0x1ce0] sm:$0xff] %v3225
        %4250 = vst [vmem:[%s237 + $0x1ce8] sm:$0xff] %v3226
        %4251 = vst [vmem:[%s237 + $0x1cf0] sm:$0xff] %v3227
        %4252 = vst [vmem:[%s237 + $0x1cf8] sm:$0xff] %v3228
        %4253 = vst [vmem:[%s237 + $0x1d00] sm:$0xff] %v3229
        %4254 = vst [vmem:[%s237 + $0x1d08] sm:$0xff] %v3230
        %4255 = vst [vmem:[%s237 + $0x1d10] sm:$0xff] %v3231
        %4256 = vst [vmem:[%s237 + $0x1d18] sm:$0xff] %v3232
        %4257 = vst [vmem:[%s237 + $0x1d20] sm:$0xff] %v3233
        %4258 = vst [vmem:[%s237 + $0x1d28] sm:$0xff] %v3234
        %4259 = vst [vmem:[%s237 + $0x1d30] sm:$0xff] %v3235
        %4260 = vst [vmem:[%s237 + $0x1d38] sm:$0xff] %v3236
        %4261 = vst [vmem:[%s237 + $0x1d40] sm:$0xff] %v3237
        %4262 = vst [vmem:[%s237 + $0x1d48] sm:$0xff] %v3238
        %4263 = vst [vmem:[%s237 + $0x1d50] sm:$0xff] %v3239
        %4264 = vst [vmem:[%s237 + $0x1d58] sm:$0xff] %v3240
        %4265 = vst [vmem:[%s237 + $0x1d60] sm:$0xff] %v3241
        %4266 = vst [vmem:[%s237 + $0x1d68] sm:$0xff] %v3242
        %4267 = vst [vmem:[%s237 + $0x1d70] sm:$0xff] %v3243
        %4268 = vst [vmem:[%s237 + $0x1d78] sm:$0xff] %v3244
        %4269 = vst [vmem:[%s237 + $0x1d80] sm:$0xff] %v3245
        %4270 = vst [vmem:[%s237 + $0x1d88] sm:$0xff] %v3246
        %4271 = vst [vmem:[%s237 + $0x1d90] sm:$0xff] %v3247
        %4272 = vst [vmem:[%s237 + $0x1d98] sm:$0xff] %v3248
        %4273 = vst [vmem:[%s237 + $0x1da0] sm:$0xff] %v3249
        %4274 = vst [vmem:[%s237 + $0x1da8] sm:$0xff] %v3250
        %4275 = vst [vmem:[%s237 + $0x1db0] sm:$0xff] %v3251
        %4276 = vst [vmem:[%s237 + $0x1db8] sm:$0xff] %v3252
        %4277 = vst [vmem:[%s237 + $0x1dc0] sm:$0xff] %v3253
        %4278 = vst [vmem:[%s237 + $0x1dc8] sm:$0xff] %v3254
        %4279 = vst [vmem:[%s237 + $0x1dd0] sm:$0xff] %v3255
        %4280 = vst [vmem:[%s237 + $0x1dd8] sm:$0xff] %v3256
        %4281 = vst [vmem:[%s237 + $0x1de0] sm:$0xff] %v3257
        %4282 = vst [vmem:[%s237 + $0x1de8] sm:$0xff] %v3258
        %4283 = vst [vmem:[%s237 + $0x1df0] sm:$0xff] %v3259
        %4284 = vst [vmem:[%s237 + $0x1df8] sm:$0xff] %v3260
        %4285 = vst [vmem:[%s237 + $0x1e00] sm:$0xff] %v3261
        %4286 = vst [vmem:[%s237 + $0x1e08] sm:$0xff] %v3262
        %4287 = vst [vmem:[%s237 + $0x1e10] sm:$0xff] %v3263
        %4288 = vst [vmem:[%s237 + $0x1e18] sm:$0xff] %v3264
        %4289 = vst [vmem:[%s237 + $0x1e20] sm:$0xff] %v3265
        %4290 = vst [vmem:[%s237 + $0x1e28] sm:$0xff] %v3266
        %4291 = vst [vmem:[%s237 + $0x1e30] sm:$0xff] %v3267
        %4292 = vst [vmem:[%s237 + $0x1e38] sm:$0xff] %v3268
        %4293 = vst [vmem:[%s237 + $0x1e40] sm:$0xff] %v3269
        %4294 = vst [vmem:[%s237 + $0x1e48] sm:$0xff] %v3270
        %4295 = vst [vmem:[%s237 + $0x1e50] sm:$0xff] %v3271
        %4296 = vst [vmem:[%s237 + $0x1e58] sm:$0xff] %v3272
        %4297 = vst [vmem:[%s237 + $0x1e60] sm:$0xff] %v3273
        %4298 = vst [vmem:[%s237 + $0x1e68] sm:$0xff] %v3274
        %4299 = vst [vmem:[%s237 + $0x1e70] sm:$0xff] %v3275
        %4300 = vst [vmem:[%s237 + $0x1e78] sm:$0xff] %v3276
        %4301 = vst [vmem:[%s237 + $0x1e80] sm:$0xff] %v3277
        %4302 = vst [vmem:[%s237 + $0x1e88] sm:$0xff] %v3278
        %4303 = vst [vmem:[%s237 + $0x1e90] sm:$0xff] %v3279
        %4304 = vst [vmem:[%s237 + $0x1e98] sm:$0xff] %v3280
        %4305 = vst [vmem:[%s237 + $0x1ea0] sm:$0xff] %v3281
        %4306 = vst [vmem:[%s237 + $0x1ea8] sm:$0xff] %v3282
        %4307 = vst [vmem:[%s237 + $0x1eb0] sm:$0xff] %v3283
        %4308 = vst [vmem:[%s237 + $0x1eb8] sm:$0xff] %v3284
        %4309 = vst [vmem:[%s237 + $0x1ec0] sm:$0xff] %v3285
        %4310 = vst [vmem:[%s237 + $0x1ec8] sm:$0xff] %v3286
        %4311 = vst [vmem:[%s237 + $0x1ed0] sm:$0xff] %v3287
        %4312 = vst [vmem:[%s237 + $0x1ed8] sm:$0xff] %v3288
        %4313 = vst [vmem:[%s237 + $0x1ee0] sm:$0xff] %v3289
        %4314 = vst [vmem:[%s237 + $0x1ee8] sm:$0xff] %v3290
        %4315 = vst [vmem:[%s237 + $0x1ef0] sm:$0xff] %v3291
        %4316 = vst [vmem:[%s237 + $0x1ef8] sm:$0xff] %v3292
        %4317 = vst [vmem:[%s237 + $0x1f00] sm:$0xff] %v3293
        %4318 = vst [vmem:[%s237 + $0x1f08] sm:$0xff] %v3294
        %4319 = vst [vmem:[%s237 + $0x1f10] sm:$0xff] %v3295
        %4320 = vst [vmem:[%s237 + $0x1f18] sm:$0xff] %v3296
        %4321 = vst [vmem:[%s237 + $0x1f20] sm:$0xff] %v3297
        %4322 = vst [vmem:[%s237 + $0x1f28] sm:$0xff] %v3298
        %4323 = vst [vmem:[%s237 + $0x1f30] sm:$0xff] %v3299
        %4324 = vst [vmem:[%s237 + $0x1f38] sm:$0xff] %v3300
        %4325 = vst [vmem:[%s237 + $0x1f40] sm:$0xff] %v3301
        %4326 = vst [vmem:[%s237 + $0x1f48] sm:$0xff] %v3302
        %4327 = vst [vmem:[%s237 + $0x1f50] sm:$0xff] %v3303
        %4328 = vst [vmem:[%s237 + $0x1f58] sm:$0xff] %v3304
        %4329 = vst [vmem:[%s237 + $0x1f60] sm:$0xff] %v3305
        %4330 = vst [vmem:[%s237 + $0x1f68] sm:$0xff] %v3306
        %4331 = vst [vmem:[%s237 + $0x1f70] sm:$0xff] %v3307
        %4332 = vst [vmem:[%s237 + $0x1f78] sm:$0xff] %v3308
        %4333 = vst [vmem:[%s237 + $0x1f80] sm:$0xff] %v3309
        %4334 = vst [vmem:[%s237 + $0x1f88] sm:$0xff] %v3310
        %4335 = vst [vmem:[%s237 + $0x1f90] sm:$0xff] %v3311
        %4336 = vst [vmem:[%s237 + $0x1f98] sm:$0xff] %v3312
        %4337 = vst [vmem:[%s237 + $0x1fa0] sm:$0xff] %v3313
        %4338 = vst [vmem:[%s237 + $0x1fa8] sm:$0xff] %v3314
        %4339 = vst [vmem:[%s237 + $0x1fb0] sm:$0xff] %v3315
        %4340 = vst [vmem:[%s237 + $0x1fb8] sm:$0xff] %v3316
        %4341 = vst [vmem:[%s237 + $0x1fc0] sm:$0xff] %v3317
        %4342 = vst [vmem:[%s237 + $0x1fc8] sm:$0xff] %v3318
        %4343 = vst [vmem:[%s237 + $0x1fd0] sm:$0xff] %v3319
        %4344 = vst [vmem:[%s237 + $0x1fd8] sm:$0xff] %v3320
        %4345 = vst [vmem:[%s237 + $0x1fe0] sm:$0xff] %v3321
        %4346 = vst [vmem:[%s237 + $0x1fe8] sm:$0xff] %v3322
        %4347 = vst [vmem:[%s237 + $0x1ff0] sm:$0xff] %v3323
        %4348 = vst [vmem:[%s237 + $0x1ff8] sm:$0xff] %v3324
        %s4349 = sand.u32 %s98, 1
        %s4350 = scalar_lea.sflag [#allocation4], %s4349
        %s4351 = sand.u32 %s98, 1
        %s4352 = smul.addr %s4351, 8192
        %s4353 = scalar_lea.vmem [#allocation7], %s4352
        // Predicated region
        $region37: #{tpu_custom_call.1} parent=27 // pred_check
          %p4354 = pneg %p108
        $region38: #{tpu_custom_call.1} parent=27 // pred_check_branch
          %4356 = sbr.rel (%p4354) target = $region40
        $region39: #{tpu_custom_call.1} parent=27 // pred_region
          %s4357 = smul.u32 1024, %s26
          %s4358 = ssub.s32 2200, %s4357
          %p4359 = scmp.lt.s32.totalorder %s4358, 1024
          %s4360 = scalar_select %p4359, %s4358, 1024
          %s4361 = smul.u32 8, %s4360
          %s4362 = ssub.s32 8192, %s4361
          %s4363 = sshll.u32 %s4362, 4
          %4364 = vsyncadd %s4350, %s4363
          %p4365 = scmp.ne.s32.totalorder 0, %s4361
          %s4366 = smul.addr %s27, 2200
          %s4367 = sadd.s32 %s4357, %s4366
          %s4368 = smul.addr %s4367, 8
          %s4369 = scalar_lea.hbm %s2, %s4368
          %s4370 = smul.u32 8, %s4360
          %s4371 = sshll.u32 %s4353, 4
          %s4372 = int_to_ptr.vmem [resolvable:$true] %s4371
          %s4373 = sshll.u32 %s4369, 4
          %s4374 = int_to_ptr.hbm [resolvable:$true] %s4373
          %s4375 = sshll.u32 %s4370, 4
          %4379 = dma.vmem_to_hbm [thread:$0]  (%p4365), %s4372, %s4375, %s4374, %s4350, 128, 128, 8
        $region40: #{tpu_custom_call.1} parent=27 // pred_fallthru
          _
      $region28: #{tpu_custom_call.1} parent=5 // pred_fallthru
        _
      %p4380 = scmp.le.s32.totalorder 2, %s17
      // Predicated region
      $region41: #{tpu_custom_call.1} parent=5 // pred_check
        %p4381 = pneg %p4380
      $region42: #{tpu_custom_call.1} parent=5 // pred_check_branch
        %4383 = sbr.rel (%p4381) target = $region44
      $region43: #{tpu_custom_call.1} parent=5 // pred_region
        %s4384 = ssub.s32 %s17, 2
        // Predicated region
        $region45: #{tpu_custom_call.1} parent=43 // pred_check
          %p4385 = pneg %p114
        $region46: #{tpu_custom_call.1} parent=43 // pred_check_branch
          %4387 = sbr.rel (%p4385) target = $region48
        $region47: #{tpu_custom_call.1} parent=43 // pred_region
          %s4388 = sand.u32 %s99, 1
          %s4389 = scalar_lea.sflag [#allocation4], %s4388
          %s4390 = sand.u32 %s99, 1
          %s4391 = smul.addr %s4390, 8192
          %s4392 = scalar_lea.vmem [#allocation7], %s4391
          %4394 = dma.done %s4389, 131072
        $region48: #{tpu_custom_call.1} parent=43 // pred_fallthru
          _
      $region44: #{tpu_custom_call.1} parent=5 // pred_fallthru
        _
    $region6: #{tpu_custom_call.1} parent=1 // loop_footer
      %s21 = sadd.s32 1, %s17
    $region7: #{tpu_custom_call.1} parent=1 // loop_footer_branch
      %16 = sbr.rel target = $region3
    $region8: #{tpu_custom_call.1} parent=1 // loop_exit
      _
    %4395 = vsyncpa [#allocation3], 1
    %s4396 = scalar_lea.sflag [#allocation3], 1
    %4397 = vsyncpa %s4396, 1
    %4398 = vsyncpa [#allocation6], 1
    %s4399 = scalar_lea.sflag [#allocation6], 1
    %4400 = vsyncpa %s4399, 1
    %4401 = vsyncpa [#allocation4], 1
    %s4402 = scalar_lea.sflag [#allocation4], 1
    %4403 = vsyncpa %s4402, 1

</llo_original>
